<compile_context>
chip_gen: v7x
topology: tpu7x:2x2x1
jax: 0.10.0
libtpu: 0.0.40
codegen_flags: <defaults>
</compile_context>

<pallas_src>
import functools

import jax
import jax.numpy as jnp
from jax.experimental import pallas as pl
from jax.experimental.pallas import tpu as pltpu


# ---------------------------------------------------------------------------
# Kernel
# ---------------------------------------------------------------------------

def _layernorm(v, g, b, eps=1e-8):
    # Single-pass statistics: mean and mean-of-squares (independent lane
    # reductions); clamp guards against tiny negative variance from rounding.
    mu = jnp.mean(v, axis=-1, keepdims=True)
    ms = jnp.mean(v * v, axis=-1, keepdims=True)
    var = jnp.maximum(ms - mu * mu, 0.0)
    return (v - mu) * jax.lax.rsqrt(var + eps) * g + b


def sasrec_fused_kernel(emb_ref, pos_ref, keep_ref,
                        ln1_g_ref, ln1_b_ref,
                        wq_ref, bq_ref, wk_ref, bk_ref, wv_ref, bv_ref,
                        wo_ref, bo_ref,
                        ln2_g_ref, ln2_b_ref,
                        w1_ref, b1_ref, w2_ref, b2_ref,
                        last_g_ref, last_b_ref,
                        out_ref, *, num_heads, emb_scale, mxu_dtype):
    Bb, T, D = emb_ref.shape
    L = wq_ref.shape[0]
    dh = D // num_heads
    N = Bb * T

    keep3 = keep_ref[...]                                    # (Bb, T, 1)
    # Hoisted once (re-used by every layer's residual mask).
    keep_nd = jnp.broadcast_to(keep3.reshape(N, 1), (N, D))  # (N, D)

    # --- embedding combine: scale + positional add + padding mask ---
    x3 = (emb_ref[...] * emb_scale + pos_ref[...][None, :, :]) * keep3
    x2 = x3.reshape(N, D)                                    # batch folded into MXU M dim

    # --- causal additive mask, built once, f32, reused across layers/heads ---
    row = jax.lax.broadcasted_iota(jnp.int32, (T, T), 0)
    col = jax.lax.broadcasted_iota(jnp.int32, (T, T), 1)
    neg_mask = jnp.where(col <= row, 0.0, -1e30).astype(jnp.float32)

    def fdot(a_c, w):
        # a_c already cast to mxu_dtype; w stored in mxu_dtype by the wrapper.
        return jnp.dot(a_c, w, preferred_element_type=jnp.float32)

    for l in range(L):                      # static unroll over layers (demo L=2)
        wq, wk, wv, wo = wq_ref[l], wk_ref[l], wv_ref[l], wo_ref[l]
        bq, bk, bv, bo = bq_ref[l], bk_ref[l], bv_ref[l], bo_ref[l]

        # attention layernorm is applied to the query path only (as in reference)
        q_in = _layernorm(x2, ln1_g_ref[l], ln1_b_ref[l])
        q_in_c = q_in.astype(mxu_dtype)     # hoisted casts (once per layer)
        x2_c = x2.astype(mxu_dtype)

        # projections over the whole (Bb*T, D) block; 1/sqrt(dh) folded into wq/bq
        q3 = (fdot(q_in_c, wq) + bq).reshape(Bb, T, D).astype(mxu_dtype)
        k3 = (fdot(x2_c, wk) + bk).reshape(Bb, T, D).astype(mxu_dtype)
        v3 = (fdot(x2_c, wv) + bv).reshape(Bb, T, D).astype(mxu_dtype)

        # multi-head attention; softmax stats in f32, per-head outputs are
        # concatenated so the output projection is ONE K=D matmul.
        heads = []
        for h in range(num_heads):          # static unroll over heads
            sl = slice(h * dh, (h + 1) * dh)
            s = jnp.einsum('btd,bsd->bts', q3[:, :, sl], k3[:, :, sl],
                           preferred_element_type=jnp.float32)
            s = s + neg_mask
            s = s - jnp.max(s, axis=-1, keepdims=True)
            p = jnp.exp(s)
            p = p * pl.reciprocal(jnp.sum(p, axis=-1, keepdims=True), approx=True)
            heads.append(jnp.einsum('bts,bsd->btd', p.astype(mxu_dtype),
                                    v3[:, :, sl],
                                    preferred_element_type=jnp.float32))
        cat = jnp.concatenate(heads, axis=-1)                   # (Bb, T, D) f32
        mha = fdot(cat.reshape(N, D).astype(mxu_dtype), wo) + bo

        # residual: Q + MHA(Q, x, x)
        h1 = q_in + mha

        # forward layernorm + point-wise feed-forward (1x1 convs == linears)
        y = _layernorm(h1, ln2_g_ref[l], ln2_b_ref[l])
        ffn = jnp.maximum(fdot(y.astype(mxu_dtype), w1_ref[l]) + b1_ref[l], 0.0)
        ffn = fdot(ffn.astype(mxu_dtype), w2_ref[l]) + b2_ref[l]
        x2 = (ffn + y) * keep_nd             # FFN residual + timeline mask

    out = _layernorm(x2, last_g_ref[...], last_b_ref[...])
    out_ref[...] = out.reshape(Bb, T, D)


# ---------------------------------------------------------------------------
# Pallas wrapper
# ---------------------------------------------------------------------------

_LAYER_NAMES = ["ln1_g", "ln1_b", "wq", "bq", "wk", "bk", "wv", "bv",
                "wo", "bo", "ln2_g", "ln2_b", "w1", "b1", "w2", "b2"]


def sasrec_forward(log_seqs, params, *, num_heads, all_outputs=True,
                   mxu_dtype=jnp.bfloat16, block_b=None):
    """log_seqs: (B, T) int32 item ids; padding id == item_num."""
    B, T = log_seqs.shape
    item_emb = params["item_emb"]
    D = item_emb.shape[1]
    item_num = item_emb.shape[0] - 1
    dh = D // num_heads

    # --- glue: embedding gather + mask (plain JAX; XLA fuses these) ---
    emb = jnp.take(item_emb, log_seqs, axis=0)                      # (B, T, D)
    pos = params["pos_emb"][:T]                                     # (T, D)
    keep = (log_seqs != item_num).astype(jnp.float32)[..., None]    # (B, T, 1)

    # --- stack per-layer weights to (L, ...); fold attention scale into Wq/bq ---
    stacked = {n: jnp.stack([lp[i] for lp in params["layers"]])
               for i, n in enumerate(_LAYER_NAMES)}
    att_scale = 1.0 / (dh ** 0.5)
    stacked["wq"] = stacked["wq"] * att_scale
    stacked["bq"] = stacked["bq"] * att_scale
    for n in ("wq", "wk", "wv", "wo", "w1", "w2"):
        stacked[n] = stacked[n].astype(mxu_dtype)   # bf16 MXU operands, half the bytes

    # --- sequences per grid step: keep >= 2 grid steps when B >= 2 so the
    #     "parallel" axis shards across v7x's two TensorCores; target up to
    #     ~1024 activation rows per step (amortizes grid-step overhead). ---
    if block_b is None:
        max_bb = max(1, B // 2)
        divs = [d for d in range(1, max_bb + 1) if B % d == 0 and d * T <= 1024]
        block_b = max(divs) if divs else 1

    seq_spec = pl.BlockSpec((block_b, T, D), lambda b: (b, 0, 0))
    keep_spec = pl.BlockSpec((block_b, T, 1), lambda b: (b, 0, 0))

    def const_spec(a):
        # TODO(synk): pipeline_mode=pl.Buffered(1) on resident weights for
        #             large configs (avoid double-buffering constants on v7x).
        return pl.BlockSpec(a.shape, lambda b, _nd=a.ndim: (0,) * _nd)

    weight_args = [stacked[n] for n in _LAYER_NAMES]
    in_specs = ([seq_spec, const_spec(pos), keep_spec]
                + [const_spec(a) for a in weight_args]
                + [const_spec(params["last_ln_g"]), const_spec(params["last_ln_b"])])

    # VMEM budget: cap at 56 MiB so the plan fits v7x's 64-MiB VMEM; leaves
    # plenty of headroom on v5e/v6e (128 MiB).
    try:
        vmem_cap = pltpu.get_tpu_info().vmem_capacity_bytes
    except Exception:
        vmem_cap = 64 * 1024 * 1024
    vmem_limit = min(56 * 1024 * 1024, int(vmem_cap) * 7 // 8)

    log_feats = pl.pallas_call(
        functools.partial(sasrec_fused_kernel,
                          num_heads=num_heads,
                          emb_scale=float(D) ** 0.5,
                          mxu_dtype=mxu_dtype),
        out_shape=jax.ShapeDtypeStruct((B, T, D), jnp.float32),
        grid=(B // block_b,),
        in_specs=in_specs,
        out_specs=seq_spec,
        compiler_params=pltpu.CompilerParams(
            dimension_semantics=("parallel",),
            vmem_limit_bytes=vmem_limit),
    )(emb, pos, keep, *weight_args, params["last_ln_g"], params["last_ln_b"])

    if all_outputs:
        return log_feats
    return log_feats[:, -1, :]


# ---------------------------------------------------------------------------
# Deterministic parameter construction
# ---------------------------------------------------------------------------

def init_params(key, *, input_size, state_size, max_len, num_layers):
    D = state_size
    keys = jax.random.split(key, 4 + num_layers)

    item_emb = jax.random.normal(keys[0], (input_size + 1, D), jnp.float32) * 0.02
    item_emb = item_emb.at[input_size].set(0.0)          # padding_idx row = 0
    pos_emb = jax.random.normal(keys[1], (max_len, D), jnp.float32) * 0.02

    layers = []
    for li in range(num_layers):
        lk = jax.random.split(keys[4 + li], 16)
        s = 1.0 / (D ** 0.5)
        # weights stored (in, out) == torch weight.T ; biases stored (1, D)
        lp = (
            jnp.ones((1, D), jnp.float32),                                   # ln1 gamma
            jnp.zeros((1, D), jnp.float32),                                  # ln1 beta
            jax.random.uniform(lk[0], (D, D), jnp.float32, -s, s),           # Wq^T
            jnp.zeros((1, D), jnp.float32),                                  # bq
            jax.random.uniform(lk[1], (D, D), jnp.float32, -s, s),           # Wk^T
            jnp.zeros((1, D), jnp.float32),                                  # bk
            jax.random.uniform(lk[2], (D, D), jnp.float32, -s, s),           # Wv^T
            jnp.zeros((1, D), jnp.float32),                                  # bv
            jax.random.uniform(lk[3], (D, D), jnp.float32, -s, s),           # Wo^T
            jnp.zeros((1, D), jnp.float32),                                  # bo
            jnp.ones((1, D), jnp.float32),                                   # ln2 gamma
            jnp.zeros((1, D), jnp.float32),                                  # ln2 beta
            jax.random.uniform(lk[4], (D, D), jnp.float32, -s, s),           # conv1 W^T
            jax.random.uniform(lk[5], (1, D), jnp.float32, -s, s),           # conv1 b
            jax.random.uniform(lk[6], (D, D), jnp.float32, -s, s),           # conv2 W^T
            jax.random.uniform(lk[7], (1, D), jnp.float32, -s, s),           # conv2 b
        )
        layers.append(lp)

    return {
        "item_emb": item_emb,
        "pos_emb": pos_emb,
        "layers": layers,
        "last_ln_g": jnp.ones((1, D), jnp.float32),
        "last_ln_b": jnp.zeros((1, D), jnp.float32),
    }


# ---------------------------------------------------------------------------
# Main
# ---------------------------------------------------------------------------

if __name__ == "__main__":
    input_size = 50     # number of items; padding id == 50
    state_size = 32     # hidden units
    max_len = 8         # sequence length
    num_layers = 2
    num_heads = 2

    key = jax.random.PRNGKey(0)
    pkey, dkey = jax.random.split(key)
    params = init_params(pkey, input_size=input_size, state_size=state_size,
                         max_len=max_len, num_layers=num_layers)

    B, T = 2, max_len
    log_seqs = jax.random.randint(dkey, (B, T), 0, input_size, dtype=jnp.int32)
    # introduce some padding tokens at the front of sequence 1
    log_seqs = log_seqs.at[1, :3].set(input_size)

    out = sasrec_forward(log_seqs, params, num_heads=num_heads, all_outputs=True)
    out = jax.block_until_ready(out)

    assert out.shape == (B, T, state_size)
    assert bool(jnp.all(jnp.isfinite(out)))
    print("KERNEL_OK")
</pallas_src>

<mosaic_0001>
module attributes {stable_mosaic.version = 11 : i64} {
  func.func @sasrec_fused_kernel(%arg0: i32, %arg1: memref<1x8x32xf32, #tpu.memory_space<vmem>>, %arg2: memref<8x32xf32, #tpu.memory_space<vmem>>, %arg3: memref<1x8x1xf32, #tpu.memory_space<vmem>>, %arg4: memref<2x1x32xf32, #tpu.memory_space<vmem>>, %arg5: memref<2x1x32xf32, #tpu.memory_space<vmem>>, %arg6: memref<2x32x32xbf16, #tpu.memory_space<vmem>>, %arg7: memref<2x1x32xf32, #tpu.memory_space<vmem>>, %arg8: memref<2x32x32xbf16, #tpu.memory_space<vmem>>, %arg9: memref<2x1x32xf32, #tpu.memory_space<vmem>>, %arg10: memref<2x32x32xbf16, #tpu.memory_space<vmem>>, %arg11: memref<2x1x32xf32, #tpu.memory_space<vmem>>, %arg12: memref<2x32x32xbf16, #tpu.memory_space<vmem>>, %arg13: memref<2x1x32xf32, #tpu.memory_space<vmem>>, %arg14: memref<2x1x32xf32, #tpu.memory_space<vmem>>, %arg15: memref<2x1x32xf32, #tpu.memory_space<vmem>>, %arg16: memref<2x32x32xbf16, #tpu.memory_space<vmem>>, %arg17: memref<2x1x32xf32, #tpu.memory_space<vmem>>, %arg18: memref<2x32x32xbf16, #tpu.memory_space<vmem>>, %arg19: memref<2x1x32xf32, #tpu.memory_space<vmem>>, %arg20: memref<1x32xf32, #tpu.memory_space<vmem>>, %arg21: memref<1x32xf32, #tpu.memory_space<vmem>>, %arg22: memref<1x8x32xf32, #tpu.memory_space<vmem>>) attributes {dimension_semantics = [#tpu.dimension_semantics<parallel>], iteration_bounds = array<i64: 2>, scalar_prefetch = 0 : i64, scratch_operands = 0 : i64, tpu.core_type = #tpu.core_type<tc>, window_params = [{transform_indices = @transform_0, window_bounds = array<i64: 1, 8, 32>}, {pipeline_mode = #tpu.pipeline_mode<synchronous>, transform_indices = @transform_1, window_bounds = array<i64: 8, 32>}, {transform_indices = @transform_2, window_bounds = array<i64: 1, 8, 1>}, {pipeline_mode = #tpu.pipeline_mode<synchronous>, transform_indices = @transform_3, window_bounds = array<i64: 2, 1, 32>}, {pipeline_mode = #tpu.pipeline_mode<synchronous>, transform_indices = @transform_4, window_bounds = array<i64: 2, 1, 32>}, {pipeline_mode = #tpu.pipeline_mode<synchronous>, transform_indices = @transform_5, window_bounds = array<i64: 2, 32, 32>}, {pipeline_mode = #tpu.pipeline_mode<synchronous>, transform_indices = @transform_6, window_bounds = array<i64: 2, 1, 32>}, {pipeline_mode = #tpu.pipeline_mode<synchronous>, transform_indices = @transform_7, window_bounds = array<i64: 2, 32, 32>}, {pipeline_mode = #tpu.pipeline_mode<synchronous>, transform_indices = @transform_8, window_bounds = array<i64: 2, 1, 32>}, {pipeline_mode = #tpu.pipeline_mode<synchronous>, transform_indices = @transform_9, window_bounds = array<i64: 2, 32, 32>}, {pipeline_mode = #tpu.pipeline_mode<synchronous>, transform_indices = @transform_10, window_bounds = array<i64: 2, 1, 32>}, {pipeline_mode = #tpu.pipeline_mode<synchronous>, transform_indices = @transform_11, window_bounds = array<i64: 2, 32, 32>}, {pipeline_mode = #tpu.pipeline_mode<synchronous>, transform_indices = @transform_12, window_bounds = array<i64: 2, 1, 32>}, {pipeline_mode = #tpu.pipeline_mode<synchronous>, transform_indices = @transform_13, window_bounds = array<i64: 2, 1, 32>}, {pipeline_mode = #tpu.pipeline_mode<synchronous>, transform_indices = @transform_14, window_bounds = array<i64: 2, 1, 32>}, {pipeline_mode = #tpu.pipeline_mode<synchronous>, transform_indices = @transform_15, window_bounds = array<i64: 2, 32, 32>}, {pipeline_mode = #tpu.pipeline_mode<synchronous>, transform_indices = @transform_16, window_bounds = array<i64: 2, 1, 32>}, {pipeline_mode = #tpu.pipeline_mode<synchronous>, transform_indices = @transform_17, window_bounds = array<i64: 2, 32, 32>}, {pipeline_mode = #tpu.pipeline_mode<synchronous>, transform_indices = @transform_18, window_bounds = array<i64: 2, 1, 32>}, {pipeline_mode = #tpu.pipeline_mode<synchronous>, transform_indices = @transform_19, window_bounds = array<i64: 1, 32>}, {pipeline_mode = #tpu.pipeline_mode<synchronous>, transform_indices = @transform_20, window_bounds = array<i64: 1, 32>}, {transform_indices = @transform_21, window_bounds = array<i64: 1, 8, 32>}]} {
    %c0 = arith.constant 0 : index
    %c0_0 = arith.constant 0 : index
    %c0_1 = arith.constant 0 : index
    %0 = vector.load %arg3[%c0, %c0_0, %c0_1] : memref<1x8x1xf32, #tpu.memory_space<vmem>>, vector<1x8x1xf32>
    %1 = vector.shape_cast %0 : vector<1x8x1xf32> to vector<8x1xf32>
    %2 = vector.shape_cast %1 : vector<8x1xf32> to vector<8x1xf32>
    %3 = vector.broadcast %2 : vector<8x1xf32> to vector<8x32xf32>
    %c0_2 = arith.constant 0 : index
    %c0_3 = arith.constant 0 : index
    %c0_4 = arith.constant 0 : index
    %4 = vector.load %arg1[%c0_2, %c0_3, %c0_4] : memref<1x8x32xf32, #tpu.memory_space<vmem>>, vector<1x8x32xf32>
    %cst = arith.constant 5.65685415 : f32
    %5 = vector.broadcast %cst : f32 to vector<1x8x32xf32>
    %6 = arith.mulf %4, %5 : vector<1x8x32xf32>
    %c0_5 = arith.constant 0 : index
    %c0_6 = arith.constant 0 : index
    %7 = vector.load %arg2[%c0_5, %c0_6] : memref<8x32xf32, #tpu.memory_space<vmem>>, vector<8x32xf32>
    %8 = vector.shape_cast %7 : vector<8x32xf32> to vector<1x8x32xf32>
    %9 = arith.addf %6, %8 : vector<1x8x32xf32>
    %10 = vector.broadcast %0 : vector<1x8x1xf32> to vector<1x8x32xf32>
    %11 = arith.mulf %9, %10 : vector<1x8x32xf32>
    %12 = vector.shape_cast %11 : vector<1x8x32xf32> to vector<8x32xf32>
    %13 = tpu.iota {dimensions = array<i32: 0>} : vector<8x8xi32>
    %14 = tpu.iota {dimensions = array<i32: 1>} : vector<8x8xi32>
    %15 = arith.cmpi sle, %14, %13 : vector<8x8xi32>
    %cst_7 = arith.constant 0.000000e+00 : f32
    %cst_8 = arith.constant -1.000000e+30 : f32
    %16 = vector.broadcast %cst_7 : f32 to vector<8x8xf32>
    %17 = vector.broadcast %cst_8 : f32 to vector<8x8xf32>
    %18 = arith.select %15, %16, %17 : vector<8x8xi1>, vector<8x8xf32>
    %c0_9 = arith.constant 0 : index
    %c0_10 = arith.constant 0 : index
    %c0_11 = arith.constant 0 : index
    %19 = vector.load %arg6[%c0_9, %c0_10, %c0_11] : memref<2x32x32xbf16, #tpu.memory_space<vmem>>, vector<1x32x32xbf16>
    %20 = vector.shape_cast %19 : vector<1x32x32xbf16> to vector<32x32xbf16>
    %c0_12 = arith.constant 0 : index
    %c0_13 = arith.constant 0 : index
    %c0_14 = arith.constant 0 : index
    %21 = vector.load %arg8[%c0_12, %c0_13, %c0_14] : memref<2x32x32xbf16, #tpu.memory_space<vmem>>, vector<1x32x32xbf16>
    %22 = vector.shape_cast %21 : vector<1x32x32xbf16> to vector<32x32xbf16>
    %c0_15 = arith.constant 0 : index
    %c0_16 = arith.constant 0 : index
    %c0_17 = arith.constant 0 : index
    %23 = vector.load %arg10[%c0_15, %c0_16, %c0_17] : memref<2x32x32xbf16, #tpu.memory_space<vmem>>, vector<1x32x32xbf16>
    %24 = vector.shape_cast %23 : vector<1x32x32xbf16> to vector<32x32xbf16>
    %c0_18 = arith.constant 0 : index
    %c0_19 = arith.constant 0 : index
    %c0_20 = arith.constant 0 : index
    %25 = vector.load %arg12[%c0_18, %c0_19, %c0_20] : memref<2x32x32xbf16, #tpu.memory_space<vmem>>, vector<1x32x32xbf16>
    %26 = vector.shape_cast %25 : vector<1x32x32xbf16> to vector<32x32xbf16>
    %c0_21 = arith.constant 0 : index
    %c0_22 = arith.constant 0 : index
    %c0_23 = arith.constant 0 : index
    %27 = vector.load %arg7[%c0_21, %c0_22, %c0_23] : memref<2x1x32xf32, #tpu.memory_space<vmem>>, vector<1x1x32xf32>
    %28 = vector.shape_cast %27 : vector<1x1x32xf32> to vector<1x32xf32>
    %c0_24 = arith.constant 0 : index
    %c0_25 = arith.constant 0 : index
    %c0_26 = arith.constant 0 : index
    %29 = vector.load %arg9[%c0_24, %c0_25, %c0_26] : memref<2x1x32xf32, #tpu.memory_space<vmem>>, vector<1x1x32xf32>
    %30 = vector.shape_cast %29 : vector<1x1x32xf32> to vector<1x32xf32>
    %c0_27 = arith.constant 0 : index
    %c0_28 = arith.constant 0 : index
    %c0_29 = arith.constant 0 : index
    %31 = vector.load %arg11[%c0_27, %c0_28, %c0_29] : memref<2x1x32xf32, #tpu.memory_space<vmem>>, vector<1x1x32xf32>
    %32 = vector.shape_cast %31 : vector<1x1x32xf32> to vector<1x32xf32>
    %c0_30 = arith.constant 0 : index
    %c0_31 = arith.constant 0 : index
    %c0_32 = arith.constant 0 : index
    %33 = vector.load %arg13[%c0_30, %c0_31, %c0_32] : memref<2x1x32xf32, #tpu.memory_space<vmem>>, vector<1x1x32xf32>
    %34 = vector.shape_cast %33 : vector<1x1x32xf32> to vector<1x32xf32>
    %c0_33 = arith.constant 0 : index
    %c0_34 = arith.constant 0 : index
    %c0_35 = arith.constant 0 : index
    %35 = vector.load %arg4[%c0_33, %c0_34, %c0_35] : memref<2x1x32xf32, #tpu.memory_space<vmem>>, vector<1x1x32xf32>
    %36 = vector.shape_cast %35 : vector<1x1x32xf32> to vector<1x32xf32>
    %c0_36 = arith.constant 0 : index
    %c0_37 = arith.constant 0 : index
    %c0_38 = arith.constant 0 : index
    %37 = vector.load %arg5[%c0_36, %c0_37, %c0_38] : memref<2x1x32xf32, #tpu.memory_space<vmem>>, vector<1x1x32xf32>
    %38 = vector.shape_cast %37 : vector<1x1x32xf32> to vector<1x32xf32>
    %cst_39 = arith.constant dense<0.000000e+00> : vector<8xf32>
    %39 = vector.multi_reduction <add>, %12, %cst_39 [1] : vector<8x32xf32> to vector<8xf32>
    %40 = vector.shape_cast %39 : vector<8xf32> to vector<8x1xf32>
    %cst_40 = arith.constant 3.200000e+01 : f32
    %41 = vector.broadcast %cst_40 : f32 to vector<8x1xf32>
    %42 = arith.divf %40, %41 : vector<8x1xf32>
    %43 = arith.mulf %12, %12 : vector<8x32xf32>
    %cst_41 = arith.constant dense<0.000000e+00> : vector<8xf32>
    %44 = vector.multi_reduction <add>, %43, %cst_41 [1] : vector<8x32xf32> to vector<8xf32>
    %45 = vector.shape_cast %44 : vector<8xf32> to vector<8x1xf32>
    %cst_42 = arith.constant 3.200000e+01 : f32
    %46 = vector.broadcast %cst_42 : f32 to vector<8x1xf32>
    %47 = arith.divf %45, %46 : vector<8x1xf32>
    %48 = arith.mulf %42, %42 : vector<8x1xf32>
    %49 = arith.subf %47, %48 : vector<8x1xf32>
    %cst_43 = arith.constant 0.000000e+00 : f32
    %50 = vector.broadcast %cst_43 : f32 to vector<8x1xf32>
    %51 = arith.maximumf %49, %50 : vector<8x1xf32>
    %52 = vector.broadcast %42 : vector<8x1xf32> to vector<8x32xf32>
    %53 = arith.subf %12, %52 : vector<8x32xf32>
    %cst_44 = arith.constant 9.99999993E-9 : f32
    %54 = vector.broadcast %cst_44 : f32 to vector<8x1xf32>
    %55 = arith.addf %51, %54 : vector<8x1xf32>
    %56 = math.rsqrt %55 : vector<8x1xf32>
    %57 = vector.broadcast %56 : vector<8x1xf32> to vector<8x32xf32>
    %58 = arith.mulf %53, %57 : vector<8x32xf32>
    %59 = vector.broadcast %36 : vector<1x32xf32> to vector<8x32xf32>
    %60 = arith.mulf %58, %59 : vector<8x32xf32>
    %61 = vector.broadcast %38 : vector<1x32xf32> to vector<8x32xf32>
    %62 = arith.addf %60, %61 : vector<8x32xf32>
    %63 = arith.truncf %62 : vector<8x32xf32> to vector<8x32xbf16>
    %64 = arith.truncf %12 : vector<8x32xf32> to vector<8x32xbf16>
    %cst_45 = arith.constant dense<0.000000e+00> : vector<8x32xf32>
    %65 = tpu.matmul %63, %20, %cst_45 {dimension_numbers = #tpu.dot_dimension_numbers<[1], [0], [0], [1], [0, 0, 1, 1], [], []>} : vector<8x32xbf16>, vector<32x32xbf16>, vector<8x32xf32> -> vector<8x32xf32>
    %66 = vector.broadcast %28 : vector<1x32xf32> to vector<8x32xf32>
    %67 = arith.addf %65, %66 : vector<8x32xf32>
    %68 = vector.shape_cast %67 : vector<8x32xf32> to vector<1x8x32xf32>
    %69 = arith.truncf %68 : vector<1x8x32xf32> to vector<1x8x32xbf16>
    %cst_46 = arith.constant dense<0.000000e+00> : vector<8x32xf32>
    %70 = tpu.matmul %64, %22, %cst_46 {dimension_numbers = #tpu.dot_dimension_numbers<[1], [0], [0], [1], [0, 0, 1, 1], [], []>} : vector<8x32xbf16>, vector<32x32xbf16>, vector<8x32xf32> -> vector<8x32xf32>
    %71 = vector.broadcast %30 : vector<1x32xf32> to vector<8x32xf32>
    %72 = arith.addf %70, %71 : vector<8x32xf32>
    %73 = vector.shape_cast %72 : vector<8x32xf32> to vector<1x8x32xf32>
    %74 = arith.truncf %73 : vector<1x8x32xf32> to vector<1x8x32xbf16>
    %cst_47 = arith.constant dense<0.000000e+00> : vector<8x32xf32>
    %75 = tpu.matmul %64, %24, %cst_47 {dimension_numbers = #tpu.dot_dimension_numbers<[1], [0], [0], [1], [0, 0, 1, 1], [], []>} : vector<8x32xbf16>, vector<32x32xbf16>, vector<8x32xf32> -> vector<8x32xf32>
    %76 = vector.broadcast %32 : vector<1x32xf32> to vector<8x32xf32>
    %77 = arith.addf %75, %76 : vector<8x32xf32>
    %78 = vector.shape_cast %77 : vector<8x32xf32> to vector<1x8x32xf32>
    %79 = arith.truncf %78 : vector<1x8x32xf32> to vector<1x8x32xbf16>
    %80 = vector.extract_strided_slice %69 {offsets = [0, 0, 0], sizes = [1, 8, 16], strides = [1, 1, 1]} : vector<1x8x32xbf16> to vector<1x8x16xbf16>
    %81 = vector.extract_strided_slice %74 {offsets = [0, 0, 0], sizes = [1, 8, 16], strides = [1, 1, 1]} : vector<1x8x32xbf16> to vector<1x8x16xbf16>
    "tpu.trace_start"() <{level = 10 : i32, message = "btd,bsd->bts"}> : () -> ()
    %cst_48 = arith.constant dense<0.000000e+00> : vector<1x8x8xf32>
    %82 = tpu.matmul %80, %81, %cst_48 {dimension_numbers = #tpu.dot_dimension_numbers<[2], [2], [1], [1], [0, 0, 0, 1, 1, 1], [0], [0]>} : vector<1x8x16xbf16>, vector<1x8x16xbf16>, vector<1x8x8xf32> -> vector<1x8x8xf32>
    "tpu.trace_stop"() : () -> ()
    %83 = vector.shape_cast %18 : vector<8x8xf32> to vector<1x8x8xf32>
    %84 = arith.addf %82, %83 : vector<1x8x8xf32>
    %cst_49 = arith.constant dense<0xFF800000> : vector<1x8xf32>
    %85 = vector.multi_reduction <maximumf>, %84, %cst_49 [2] : vector<1x8x8xf32> to vector<1x8xf32>
    %86 = vector.shape_cast %85 : vector<1x8xf32> to vector<1x8x1xf32>
    %87 = vector.broadcast %86 : vector<1x8x1xf32> to vector<1x8x8xf32>
    %88 = arith.subf %84, %87 : vector<1x8x8xf32>
    %89 = math.exp %88 : vector<1x8x8xf32>
    %cst_50 = arith.constant dense<0.000000e+00> : vector<1x8xf32>
    %90 = vector.multi_reduction <add>, %89, %cst_50 [2] : vector<1x8x8xf32> to vector<1x8xf32>
    %91 = vector.shape_cast %90 : vector<1x8xf32> to vector<1x8x1xf32>
    %92 = tpu.reciprocal %91 {approx = true} : vector<1x8x1xf32> -> vector<1x8x1xf32>
    %93 = vector.broadcast %92 : vector<1x8x1xf32> to vector<1x8x8xf32>
    %94 = arith.mulf %89, %93 : vector<1x8x8xf32>
    %95 = arith.truncf %94 : vector<1x8x8xf32> to vector<1x8x8xbf16>
    %96 = vector.extract_strided_slice %79 {offsets = [0, 0, 0], sizes = [1, 8, 16], strides = [1, 1, 1]} : vector<1x8x32xbf16> to vector<1x8x16xbf16>
    "tpu.trace_start"() <{level = 10 : i32, message = "bts,bsd->btd"}> : () -> ()
    %cst_51 = arith.constant dense<0.000000e+00> : vector<1x8x16xf32>
    %97 = tpu.matmul %95, %96, %cst_51 {dimension_numbers = #tpu.dot_dimension_numbers<[2], [1], [1], [2], [0, 0, 0, 1, 1, 2], [0], [0]>} : vector<1x8x8xbf16>, vector<1x8x16xbf16>, vector<1x8x16xf32> -> vector<1x8x16xf32>
    "tpu.trace_stop"() : () -> ()
    %98 = vector.extract_strided_slice %69 {offsets = [0, 0, 16], sizes = [1, 8, 16], strides = [1, 1, 1]} : vector<1x8x32xbf16> to vector<1x8x16xbf16>
    %99 = vector.extract_strided_slice %74 {offsets = [0, 0, 16], sizes = [1, 8, 16], strides = [1, 1, 1]} : vector<1x8x32xbf16> to vector<1x8x16xbf16>
    "tpu.trace_start"() <{level = 10 : i32, message = "btd,bsd->bts"}> : () -> ()
    %cst_52 = arith.constant dense<0.000000e+00> : vector<1x8x8xf32>
    %100 = tpu.matmul %98, %99, %cst_52 {dimension_numbers = #tpu.dot_dimension_numbers<[2], [2], [1], [1], [0, 0, 0, 1, 1, 1], [0], [0]>} : vector<1x8x16xbf16>, vector<1x8x16xbf16>, vector<1x8x8xf32> -> vector<1x8x8xf32>
    "tpu.trace_stop"() : () -> ()
    %101 = vector.shape_cast %18 : vector<8x8xf32> to vector<1x8x8xf32>
    %102 = arith.addf %100, %101 : vector<1x8x8xf32>
    %cst_53 = arith.constant dense<0xFF800000> : vector<1x8xf32>
    %103 = vector.multi_reduction <maximumf>, %102, %cst_53 [2] : vector<1x8x8xf32> to vector<1x8xf32>
    %104 = vector.shape_cast %103 : vector<1x8xf32> to vector<1x8x1xf32>
    %105 = vector.broadcast %104 : vector<1x8x1xf32> to vector<1x8x8xf32>
    %106 = arith.subf %102, %105 : vector<1x8x8xf32>
    %107 = math.exp %106 : vector<1x8x8xf32>
    %cst_54 = arith.constant dense<0.000000e+00> : vector<1x8xf32>
    %108 = vector.multi_reduction <add>, %107, %cst_54 [2] : vector<1x8x8xf32> to vector<1x8xf32>
    %109 = vector.shape_cast %108 : vector<1x8xf32> to vector<1x8x1xf32>
    %110 = tpu.reciprocal %109 {approx = true} : vector<1x8x1xf32> -> vector<1x8x1xf32>
    %111 = vector.broadcast %110 : vector<1x8x1xf32> to vector<1x8x8xf32>
    %112 = arith.mulf %107, %111 : vector<1x8x8xf32>
    %113 = arith.truncf %112 : vector<1x8x8xf32> to vector<1x8x8xbf16>
    %114 = vector.extract_strided_slice %79 {offsets = [0, 0, 16], sizes = [1, 8, 16], strides = [1, 1, 1]} : vector<1x8x32xbf16> to vector<1x8x16xbf16>
    "tpu.trace_start"() <{level = 10 : i32, message = "bts,bsd->btd"}> : () -> ()
    %cst_55 = arith.constant dense<0.000000e+00> : vector<1x8x16xf32>
    %115 = tpu.matmul %113, %114, %cst_55 {dimension_numbers = #tpu.dot_dimension_numbers<[2], [1], [1], [2], [0, 0, 0, 1, 1, 2], [0], [0]>} : vector<1x8x8xbf16>, vector<1x8x16xbf16>, vector<1x8x16xf32> -> vector<1x8x16xf32>
    "tpu.trace_stop"() : () -> ()
    %116 = tpu.concatenate %97, %115 in 2 : vector<1x8x16xf32>, vector<1x8x16xf32> -> vector<1x8x32xf32>
    %117 = vector.shape_cast %116 : vector<1x8x32xf32> to vector<8x32xf32>
    %118 = arith.truncf %117 : vector<8x32xf32> to vector<8x32xbf16>
    %cst_56 = arith.constant dense<0.000000e+00> : vector<8x32xf32>
    %119 = tpu.matmul %118, %26, %cst_56 {dimension_numbers = #tpu.dot_dimension_numbers<[1], [0], [0], [1], [0, 0, 1, 1], [], []>} : vector<8x32xbf16>, vector<32x32xbf16>, vector<8x32xf32> -> vector<8x32xf32>
    %120 = vector.broadcast %34 : vector<1x32xf32> to vector<8x32xf32>
    %121 = arith.addf %119, %120 : vector<8x32xf32>
    %122 = arith.addf %62, %121 : vector<8x32xf32>
    %c0_57 = arith.constant 0 : index
    %c0_58 = arith.constant 0 : index
    %c0_59 = arith.constant 0 : index
    %123 = vector.load %arg14[%c0_57, %c0_58, %c0_59] : memref<2x1x32xf32, #tpu.memory_space<vmem>>, vector<1x1x32xf32>
    %124 = vector.shape_cast %123 : vector<1x1x32xf32> to vector<1x32xf32>
    %c0_60 = arith.constant 0 : index
    %c0_61 = arith.constant 0 : index
    %c0_62 = arith.constant 0 : index
    %125 = vector.load %arg15[%c0_60, %c0_61, %c0_62] : memref<2x1x32xf32, #tpu.memory_space<vmem>>, vector<1x1x32xf32>
    %126 = vector.shape_cast %125 : vector<1x1x32xf32> to vector<1x32xf32>
    %cst_63 = arith.constant dense<0.000000e+00> : vector<8xf32>
    %127 = vector.multi_reduction <add>, %122, %cst_63 [1] : vector<8x32xf32> to vector<8xf32>
    %128 = vector.shape_cast %127 : vector<8xf32> to vector<8x1xf32>
    %cst_64 = arith.constant 3.200000e+01 : f32
    %129 = vector.broadcast %cst_64 : f32 to vector<8x1xf32>
    %130 = arith.divf %128, %129 : vector<8x1xf32>
    %131 = arith.mulf %122, %122 : vector<8x32xf32>
    %cst_65 = arith.constant dense<0.000000e+00> : vector<8xf32>
    %132 = vector.multi_reduction <add>, %131, %cst_65 [1] : vector<8x32xf32> to vector<8xf32>
    %133 = vector.shape_cast %132 : vector<8xf32> to vector<8x1xf32>
    %cst_66 = arith.constant 3.200000e+01 : f32
    %134 = vector.broadcast %cst_66 : f32 to vector<8x1xf32>
    %135 = arith.divf %133, %134 : vector<8x1xf32>
    %136 = arith.mulf %130, %130 : vector<8x1xf32>
    %137 = arith.subf %135, %136 : vector<8x1xf32>
    %cst_67 = arith.constant 0.000000e+00 : f32
    %138 = vector.broadcast %cst_67 : f32 to vector<8x1xf32>
    %139 = arith.maximumf %137, %138 : vector<8x1xf32>
    %140 = vector.broadcast %130 : vector<8x1xf32> to vector<8x32xf32>
    %141 = arith.subf %122, %140 : vector<8x32xf32>
    %cst_68 = arith.constant 9.99999993E-9 : f32
    %142 = vector.broadcast %cst_68 : f32 to vector<8x1xf32>
    %143 = arith.addf %139, %142 : vector<8x1xf32>
    %144 = math.rsqrt %143 : vector<8x1xf32>
    %145 = vector.broadcast %144 : vector<8x1xf32> to vector<8x32xf32>
    %146 = arith.mulf %141, %145 : vector<8x32xf32>
    %147 = vector.broadcast %124 : vector<1x32xf32> to vector<8x32xf32>
    %148 = arith.mulf %146, %147 : vector<8x32xf32>
    %149 = vector.broadcast %126 : vector<1x32xf32> to vector<8x32xf32>
    %150 = arith.addf %148, %149 : vector<8x32xf32>
    %151 = arith.truncf %150 : vector<8x32xf32> to vector<8x32xbf16>
    %c0_69 = arith.constant 0 : index
    %c0_70 = arith.constant 0 : index
    %c0_71 = arith.constant 0 : index
    %152 = vector.load %arg16[%c0_69, %c0_70, %c0_71] : memref<2x32x32xbf16, #tpu.memory_space<vmem>>, vector<1x32x32xbf16>
    %153 = vector.shape_cast %152 : vector<1x32x32xbf16> to vector<32x32xbf16>
    %cst_72 = arith.constant dense<0.000000e+00> : vector<8x32xf32>
    %154 = tpu.matmul %151, %153, %cst_72 {dimension_numbers = #tpu.dot_dimension_numbers<[1], [0], [0], [1], [0, 0, 1, 1], [], []>} : vector<8x32xbf16>, vector<32x32xbf16>, vector<8x32xf32> -> vector<8x32xf32>
    %c0_73 = arith.constant 0 : index
    %c0_74 = arith.constant 0 : index
    %c0_75 = arith.constant 0 : index
    %155 = vector.load %arg17[%c0_73, %c0_74, %c0_75] : memref<2x1x32xf32, #tpu.memory_space<vmem>>, vector<1x1x32xf32>
    %156 = vector.shape_cast %155 : vector<1x1x32xf32> to vector<1x32xf32>
    %157 = vector.broadcast %156 : vector<1x32xf32> to vector<8x32xf32>
    %158 = arith.addf %154, %157 : vector<8x32xf32>
    %cst_76 = arith.constant 0.000000e+00 : f32
    %159 = vector.broadcast %cst_76 : f32 to vector<8x32xf32>
    %160 = arith.maximumf %158, %159 : vector<8x32xf32>
    %161 = arith.truncf %160 : vector<8x32xf32> to vector<8x32xbf16>
    %c0_77 = arith.constant 0 : index
    %c0_78 = arith.constant 0 : index
    %c0_79 = arith.constant 0 : index
    %162 = vector.load %arg18[%c0_77, %c0_78, %c0_79] : memref<2x32x32xbf16, #tpu.memory_space<vmem>>, vector<1x32x32xbf16>
    %163 = vector.shape_cast %162 : vector<1x32x32xbf16> to vector<32x32xbf16>
    %cst_80 = arith.constant dense<0.000000e+00> : vector<8x32xf32>
    %164 = tpu.matmul %161, %163, %cst_80 {dimension_numbers = #tpu.dot_dimension_numbers<[1], [0], [0], [1], [0, 0, 1, 1], [], []>} : vector<8x32xbf16>, vector<32x32xbf16>, vector<8x32xf32> -> vector<8x32xf32>
    %c0_81 = arith.constant 0 : index
    %c0_82 = arith.constant 0 : index
    %c0_83 = arith.constant 0 : index
    %165 = vector.load %arg19[%c0_81, %c0_82, %c0_83] : memref<2x1x32xf32, #tpu.memory_space<vmem>>, vector<1x1x32xf32>
    %166 = vector.shape_cast %165 : vector<1x1x32xf32> to vector<1x32xf32>
    %167 = vector.broadcast %166 : vector<1x32xf32> to vector<8x32xf32>
    %168 = arith.addf %164, %167 : vector<8x32xf32>
    %169 = arith.addf %168, %150 : vector<8x32xf32>
    %170 = arith.mulf %169, %3 : vector<8x32xf32>
    %c1 = arith.constant 1 : index
    %c0_84 = arith.constant 0 : index
    %c0_85 = arith.constant 0 : index
    %171 = vector.load %arg6[%c1, %c0_84, %c0_85] : memref<2x32x32xbf16, #tpu.memory_space<vmem>>, vector<1x32x32xbf16>
    %172 = vector.shape_cast %171 : vector<1x32x32xbf16> to vector<32x32xbf16>
    %c1_86 = arith.constant 1 : index
    %c0_87 = arith.constant 0 : index
    %c0_88 = arith.constant 0 : index
    %173 = vector.load %arg8[%c1_86, %c0_87, %c0_88] : memref<2x32x32xbf16, #tpu.memory_space<vmem>>, vector<1x32x32xbf16>
    %174 = vector.shape_cast %173 : vector<1x32x32xbf16> to vector<32x32xbf16>
    %c1_89 = arith.constant 1 : index
    %c0_90 = arith.constant 0 : index
    %c0_91 = arith.constant 0 : index
    %175 = vector.load %arg10[%c1_89, %c0_90, %c0_91] : memref<2x32x32xbf16, #tpu.memory_space<vmem>>, vector<1x32x32xbf16>
    %176 = vector.shape_cast %175 : vector<1x32x32xbf16> to vector<32x32xbf16>
    %c1_92 = arith.constant 1 : index
    %c0_93 = arith.constant 0 : index
    %c0_94 = arith.constant 0 : index
    %177 = vector.load %arg12[%c1_92, %c0_93, %c0_94] : memref<2x32x32xbf16, #tpu.memory_space<vmem>>, vector<1x32x32xbf16>
    %178 = vector.shape_cast %177 : vector<1x32x32xbf16> to vector<32x32xbf16>
    %c1_95 = arith.constant 1 : index
    %c0_96 = arith.constant 0 : index
    %c0_97 = arith.constant 0 : index
    %179 = vector.load %arg7[%c1_95, %c0_96, %c0_97] : memref<2x1x32xf32, #tpu.memory_space<vmem>>, vector<1x1x32xf32>
    %180 = vector.shape_cast %179 : vector<1x1x32xf32> to vector<1x32xf32>
    %c1_98 = arith.constant 1 : index
    %c0_99 = arith.constant 0 : index
    %c0_100 = arith.constant 0 : index
    %181 = vector.load %arg9[%c1_98, %c0_99, %c0_100] : memref<2x1x32xf32, #tpu.memory_space<vmem>>, vector<1x1x32xf32>
    %182 = vector.shape_cast %181 : vector<1x1x32xf32> to vector<1x32xf32>
    %c1_101 = arith.constant 1 : index
    %c0_102 = arith.constant 0 : index
    %c0_103 = arith.constant 0 : index
    %183 = vector.load %arg11[%c1_101, %c0_102, %c0_103] : memref<2x1x32xf32, #tpu.memory_space<vmem>>, vector<1x1x32xf32>
    %184 = vector.shape_cast %183 : vector<1x1x32xf32> to vector<1x32xf32>
    %c1_104 = arith.constant 1 : index
    %c0_105 = arith.constant 0 : index
    %c0_106 = arith.constant 0 : index
    %185 = vector.load %arg13[%c1_104, %c0_105, %c0_106] : memref<2x1x32xf32, #tpu.memory_space<vmem>>, vector<1x1x32xf32>
    %186 = vector.shape_cast %185 : vector<1x1x32xf32> to vector<1x32xf32>
    %c1_107 = arith.constant 1 : index
    %c0_108 = arith.constant 0 : index
    %c0_109 = arith.constant 0 : index
    %187 = vector.load %arg4[%c1_107, %c0_108, %c0_109] : memref<2x1x32xf32, #tpu.memory_space<vmem>>, vector<1x1x32xf32>
    %188 = vector.shape_cast %187 : vector<1x1x32xf32> to vector<1x32xf32>
    %c1_110 = arith.constant 1 : index
    %c0_111 = arith.constant 0 : index
    %c0_112 = arith.constant 0 : index
    %189 = vector.load %arg5[%c1_110, %c0_111, %c0_112] : memref<2x1x32xf32, #tpu.memory_space<vmem>>, vector<1x1x32xf32>
    %190 = vector.shape_cast %189 : vector<1x1x32xf32> to vector<1x32xf32>
    %cst_113 = arith.constant dense<0.000000e+00> : vector<8xf32>
    %191 = vector.multi_reduction <add>, %170, %cst_113 [1] : vector<8x32xf32> to vector<8xf32>
    %192 = vector.shape_cast %191 : vector<8xf32> to vector<8x1xf32>
    %cst_114 = arith.constant 3.200000e+01 : f32
    %193 = vector.broadcast %cst_114 : f32 to vector<8x1xf32>
    %194 = arith.divf %192, %193 : vector<8x1xf32>
    %195 = arith.mulf %170, %170 : vector<8x32xf32>
    %cst_115 = arith.constant dense<0.000000e+00> : vector<8xf32>
    %196 = vector.multi_reduction <add>, %195, %cst_115 [1] : vector<8x32xf32> to vector<8xf32>
    %197 = vector.shape_cast %196 : vector<8xf32> to vector<8x1xf32>
    %cst_116 = arith.constant 3.200000e+01 : f32
    %198 = vector.broadcast %cst_116 : f32 to vector<8x1xf32>
    %199 = arith.divf %197, %198 : vector<8x1xf32>
    %200 = arith.mulf %194, %194 : vector<8x1xf32>
    %201 = arith.subf %199, %200 : vector<8x1xf32>
    %cst_117 = arith.constant 0.000000e+00 : f32
    %202 = vector.broadcast %cst_117 : f32 to vector<8x1xf32>
    %203 = arith.maximumf %201, %202 : vector<8x1xf32>
    %204 = vector.broadcast %194 : vector<8x1xf32> to vector<8x32xf32>
    %205 = arith.subf %170, %204 : vector<8x32xf32>
    %cst_118 = arith.constant 9.99999993E-9 : f32
    %206 = vector.broadcast %cst_118 : f32 to vector<8x1xf32>
    %207 = arith.addf %203, %206 : vector<8x1xf32>
    %208 = math.rsqrt %207 : vector<8x1xf32>
    %209 = vector.broadcast %208 : vector<8x1xf32> to vector<8x32xf32>
    %210 = arith.mulf %205, %209 : vector<8x32xf32>
    %211 = vector.broadcast %188 : vector<1x32xf32> to vector<8x32xf32>
    %212 = arith.mulf %210, %211 : vector<8x32xf32>
    %213 = vector.broadcast %190 : vector<1x32xf32> to vector<8x32xf32>
    %214 = arith.addf %212, %213 : vector<8x32xf32>
    %215 = arith.truncf %214 : vector<8x32xf32> to vector<8x32xbf16>
    %216 = arith.truncf %170 : vector<8x32xf32> to vector<8x32xbf16>
    %cst_119 = arith.constant dense<0.000000e+00> : vector<8x32xf32>
    %217 = tpu.matmul %215, %172, %cst_119 {dimension_numbers = #tpu.dot_dimension_numbers<[1], [0], [0], [1], [0, 0, 1, 1], [], []>} : vector<8x32xbf16>, vector<32x32xbf16>, vector<8x32xf32> -> vector<8x32xf32>
    %218 = vector.broadcast %180 : vector<1x32xf32> to vector<8x32xf32>
    %219 = arith.addf %217, %218 : vector<8x32xf32>
    %220 = vector.shape_cast %219 : vector<8x32xf32> to vector<1x8x32xf32>
    %221 = arith.truncf %220 : vector<1x8x32xf32> to vector<1x8x32xbf16>
    %cst_120 = arith.constant dense<0.000000e+00> : vector<8x32xf32>
    %222 = tpu.matmul %216, %174, %cst_120 {dimension_numbers = #tpu.dot_dimension_numbers<[1], [0], [0], [1], [0, 0, 1, 1], [], []>} : vector<8x32xbf16>, vector<32x32xbf16>, vector<8x32xf32> -> vector<8x32xf32>
    %223 = vector.broadcast %182 : vector<1x32xf32> to vector<8x32xf32>
    %224 = arith.addf %222, %223 : vector<8x32xf32>
    %225 = vector.shape_cast %224 : vector<8x32xf32> to vector<1x8x32xf32>
    %226 = arith.truncf %225 : vector<1x8x32xf32> to vector<1x8x32xbf16>
    %cst_121 = arith.constant dense<0.000000e+00> : vector<8x32xf32>
    %227 = tpu.matmul %216, %176, %cst_121 {dimension_numbers = #tpu.dot_dimension_numbers<[1], [0], [0], [1], [0, 0, 1, 1], [], []>} : vector<8x32xbf16>, vector<32x32xbf16>, vector<8x32xf32> -> vector<8x32xf32>
    %228 = vector.broadcast %184 : vector<1x32xf32> to vector<8x32xf32>
    %229 = arith.addf %227, %228 : vector<8x32xf32>
    %230 = vector.shape_cast %229 : vector<8x32xf32> to vector<1x8x32xf32>
    %231 = arith.truncf %230 : vector<1x8x32xf32> to vector<1x8x32xbf16>
    %232 = vector.extract_strided_slice %221 {offsets = [0, 0, 0], sizes = [1, 8, 16], strides = [1, 1, 1]} : vector<1x8x32xbf16> to vector<1x8x16xbf16>
    %233 = vector.extract_strided_slice %226 {offsets = [0, 0, 0], sizes = [1, 8, 16], strides = [1, 1, 1]} : vector<1x8x32xbf16> to vector<1x8x16xbf16>
    "tpu.trace_start"() <{level = 10 : i32, message = "btd,bsd->bts"}> : () -> ()
    %cst_122 = arith.constant dense<0.000000e+00> : vector<1x8x8xf32>
    %234 = tpu.matmul %232, %233, %cst_122 {dimension_numbers = #tpu.dot_dimension_numbers<[2], [2], [1], [1], [0, 0, 0, 1, 1, 1], [0], [0]>} : vector<1x8x16xbf16>, vector<1x8x16xbf16>, vector<1x8x8xf32> -> vector<1x8x8xf32>
    "tpu.trace_stop"() : () -> ()
    %235 = vector.shape_cast %18 : vector<8x8xf32> to vector<1x8x8xf32>
    %236 = arith.addf %234, %235 : vector<1x8x8xf32>
    %cst_123 = arith.constant dense<0xFF800000> : vector<1x8xf32>
    %237 = vector.multi_reduction <maximumf>, %236, %cst_123 [2] : vector<1x8x8xf32> to vector<1x8xf32>
    %238 = vector.shape_cast %237 : vector<1x8xf32> to vector<1x8x1xf32>
    %239 = vector.broadcast %238 : vector<1x8x1xf32> to vector<1x8x8xf32>
    %240 = arith.subf %236, %239 : vector<1x8x8xf32>
    %241 = math.exp %240 : vector<1x8x8xf32>
    %cst_124 = arith.constant dense<0.000000e+00> : vector<1x8xf32>
    %242 = vector.multi_reduction <add>, %241, %cst_124 [2] : vector<1x8x8xf32> to vector<1x8xf32>
    %243 = vector.shape_cast %242 : vector<1x8xf32> to vector<1x8x1xf32>
    %244 = tpu.reciprocal %243 {approx = true} : vector<1x8x1xf32> -> vector<1x8x1xf32>
    %245 = vector.broadcast %244 : vector<1x8x1xf32> to vector<1x8x8xf32>
    %246 = arith.mulf %241, %245 : vector<1x8x8xf32>
    %247 = arith.truncf %246 : vector<1x8x8xf32> to vector<1x8x8xbf16>
    %248 = vector.extract_strided_slice %231 {offsets = [0, 0, 0], sizes = [1, 8, 16], strides = [1, 1, 1]} : vector<1x8x32xbf16> to vector<1x8x16xbf16>
    "tpu.trace_start"() <{level = 10 : i32, message = "bts,bsd->btd"}> : () -> ()
    %cst_125 = arith.constant dense<0.000000e+00> : vector<1x8x16xf32>
    %249 = tpu.matmul %247, %248, %cst_125 {dimension_numbers = #tpu.dot_dimension_numbers<[2], [1], [1], [2], [0, 0, 0, 1, 1, 2], [0], [0]>} : vector<1x8x8xbf16>, vector<1x8x16xbf16>, vector<1x8x16xf32> -> vector<1x8x16xf32>
    "tpu.trace_stop"() : () -> ()
    %250 = vector.extract_strided_slice %221 {offsets = [0, 0, 16], sizes = [1, 8, 16], strides = [1, 1, 1]} : vector<1x8x32xbf16> to vector<1x8x16xbf16>
    %251 = vector.extract_strided_slice %226 {offsets = [0, 0, 16], sizes = [1, 8, 16], strides = [1, 1, 1]} : vector<1x8x32xbf16> to vector<1x8x16xbf16>
    "tpu.trace_start"() <{level = 10 : i32, message = "btd,bsd->bts"}> : () -> ()
    %cst_126 = arith.constant dense<0.000000e+00> : vector<1x8x8xf32>
    %252 = tpu.matmul %250, %251, %cst_126 {dimension_numbers = #tpu.dot_dimension_numbers<[2], [2], [1], [1], [0, 0, 0, 1, 1, 1], [0], [0]>} : vector<1x8x16xbf16>, vector<1x8x16xbf16>, vector<1x8x8xf32> -> vector<1x8x8xf32>
    "tpu.trace_stop"() : () -> ()
    %253 = vector.shape_cast %18 : vector<8x8xf32> to vector<1x8x8xf32>
    %254 = arith.addf %252, %253 : vector<1x8x8xf32>
    %cst_127 = arith.constant dense<0xFF800000> : vector<1x8xf32>
    %255 = vector.multi_reduction <maximumf>, %254, %cst_127 [2] : vector<1x8x8xf32> to vector<1x8xf32>
    %256 = vector.shape_cast %255 : vector<1x8xf32> to vector<1x8x1xf32>
    %257 = vector.broadcast %256 : vector<1x8x1xf32> to vector<1x8x8xf32>
    %258 = arith.subf %254, %257 : vector<1x8x8xf32>
    %259 = math.exp %258 : vector<1x8x8xf32>
    %cst_128 = arith.constant dense<0.000000e+00> : vector<1x8xf32>
    %260 = vector.multi_reduction <add>, %259, %cst_128 [2] : vector<1x8x8xf32> to vector<1x8xf32>
    %261 = vector.shape_cast %260 : vector<1x8xf32> to vector<1x8x1xf32>
    %262 = tpu.reciprocal %261 {approx = true} : vector<1x8x1xf32> -> vector<1x8x1xf32>
    %263 = vector.broadcast %262 : vector<1x8x1xf32> to vector<1x8x8xf32>
    %264 = arith.mulf %259, %263 : vector<1x8x8xf32>
    %265 = arith.truncf %264 : vector<1x8x8xf32> to vector<1x8x8xbf16>
    %266 = vector.extract_strided_slice %231 {offsets = [0, 0, 16], sizes = [1, 8, 16], strides = [1, 1, 1]} : vector<1x8x32xbf16> to vector<1x8x16xbf16>
    "tpu.trace_start"() <{level = 10 : i32, message = "bts,bsd->btd"}> : () -> ()
    %cst_129 = arith.constant dense<0.000000e+00> : vector<1x8x16xf32>
    %267 = tpu.matmul %265, %266, %cst_129 {dimension_numbers = #tpu.dot_dimension_numbers<[2], [1], [1], [2], [0, 0, 0, 1, 1, 2], [0], [0]>} : vector<1x8x8xbf16>, vector<1x8x16xbf16>, vector<1x8x16xf32> -> vector<1x8x16xf32>
    "tpu.trace_stop"() : () -> ()
    %268 = tpu.concatenate %249, %267 in 2 : vector<1x8x16xf32>, vector<1x8x16xf32> -> vector<1x8x32xf32>
    %269 = vector.shape_cast %268 : vector<1x8x32xf32> to vector<8x32xf32>
    %270 = arith.truncf %269 : vector<8x32xf32> to vector<8x32xbf16>
    %cst_130 = arith.constant dense<0.000000e+00> : vector<8x32xf32>
    %271 = tpu.matmul %270, %178, %cst_130 {dimension_numbers = #tpu.dot_dimension_numbers<[1], [0], [0], [1], [0, 0, 1, 1], [], []>} : vector<8x32xbf16>, vector<32x32xbf16>, vector<8x32xf32> -> vector<8x32xf32>
    %272 = vector.broadcast %186 : vector<1x32xf32> to vector<8x32xf32>
    %273 = arith.addf %271, %272 : vector<8x32xf32>
    %274 = arith.addf %214, %273 : vector<8x32xf32>
    %c1_131 = arith.constant 1 : index
    %c0_132 = arith.constant 0 : index
    %c0_133 = arith.constant 0 : index
    %275 = vector.load %arg14[%c1_131, %c0_132, %c0_133] : memref<2x1x32xf32, #tpu.memory_space<vmem>>, vector<1x1x32xf32>
    %276 = vector.shape_cast %275 : vector<1x1x32xf32> to vector<1x32xf32>
    %c1_134 = arith.constant 1 : index
    %c0_135 = arith.constant 0 : index
    %c0_136 = arith.constant 0 : index
    %277 = vector.load %arg15[%c1_134, %c0_135, %c0_136] : memref<2x1x32xf32, #tpu.memory_space<vmem>>, vector<1x1x32xf32>
    %278 = vector.shape_cast %277 : vector<1x1x32xf32> to vector<1x32xf32>
    %cst_137 = arith.constant dense<0.000000e+00> : vector<8xf32>
    %279 = vector.multi_reduction <add>, %274, %cst_137 [1] : vector<8x32xf32> to vector<8xf32>
    %280 = vector.shape_cast %279 : vector<8xf32> to vector<8x1xf32>
    %cst_138 = arith.constant 3.200000e+01 : f32
    %281 = vector.broadcast %cst_138 : f32 to vector<8x1xf32>
    %282 = arith.divf %280, %281 : vector<8x1xf32>
    %283 = arith.mulf %274, %274 : vector<8x32xf32>
    %cst_139 = arith.constant dense<0.000000e+00> : vector<8xf32>
    %284 = vector.multi_reduction <add>, %283, %cst_139 [1] : vector<8x32xf32> to vector<8xf32>
    %285 = vector.shape_cast %284 : vector<8xf32> to vector<8x1xf32>
    %cst_140 = arith.constant 3.200000e+01 : f32
    %286 = vector.broadcast %cst_140 : f32 to vector<8x1xf32>
    %287 = arith.divf %285, %286 : vector<8x1xf32>
    %288 = arith.mulf %282, %282 : vector<8x1xf32>
    %289 = arith.subf %287, %288 : vector<8x1xf32>
    %cst_141 = arith.constant 0.000000e+00 : f32
    %290 = vector.broadcast %cst_141 : f32 to vector<8x1xf32>
    %291 = arith.maximumf %289, %290 : vector<8x1xf32>
    %292 = vector.broadcast %282 : vector<8x1xf32> to vector<8x32xf32>
    %293 = arith.subf %274, %292 : vector<8x32xf32>
    %cst_142 = arith.constant 9.99999993E-9 : f32
    %294 = vector.broadcast %cst_142 : f32 to vector<8x1xf32>
    %295 = arith.addf %291, %294 : vector<8x1xf32>
    %296 = math.rsqrt %295 : vector<8x1xf32>
    %297 = vector.broadcast %296 : vector<8x1xf32> to vector<8x32xf32>
    %298 = arith.mulf %293, %297 : vector<8x32xf32>
    %299 = vector.broadcast %276 : vector<1x32xf32> to vector<8x32xf32>
    %300 = arith.mulf %298, %299 : vector<8x32xf32>
    %301 = vector.broadcast %278 : vector<1x32xf32> to vector<8x32xf32>
    %302 = arith.addf %300, %301 : vector<8x32xf32>
    %303 = arith.truncf %302 : vector<8x32xf32> to vector<8x32xbf16>
    %c1_143 = arith.constant 1 : index
    %c0_144 = arith.constant 0 : index
    %c0_145 = arith.constant 0 : index
    %304 = vector.load %arg16[%c1_143, %c0_144, %c0_145] : memref<2x32x32xbf16, #tpu.memory_space<vmem>>, vector<1x32x32xbf16>
    %305 = vector.shape_cast %304 : vector<1x32x32xbf16> to vector<32x32xbf16>
    %cst_146 = arith.constant dense<0.000000e+00> : vector<8x32xf32>
    %306 = tpu.matmul %303, %305, %cst_146 {dimension_numbers = #tpu.dot_dimension_numbers<[1], [0], [0], [1], [0, 0, 1, 1], [], []>} : vector<8x32xbf16>, vector<32x32xbf16>, vector<8x32xf32> -> vector<8x32xf32>
    %c1_147 = arith.constant 1 : index
    %c0_148 = arith.constant 0 : index
    %c0_149 = arith.constant 0 : index
    %307 = vector.load %arg17[%c1_147, %c0_148, %c0_149] : memref<2x1x32xf32, #tpu.memory_space<vmem>>, vector<1x1x32xf32>
    %308 = vector.shape_cast %307 : vector<1x1x32xf32> to vector<1x32xf32>
    %309 = vector.broadcast %308 : vector<1x32xf32> to vector<8x32xf32>
    %310 = arith.addf %306, %309 : vector<8x32xf32>
    %cst_150 = arith.constant 0.000000e+00 : f32
    %311 = vector.broadcast %cst_150 : f32 to vector<8x32xf32>
    %312 = arith.maximumf %310, %311 : vector<8x32xf32>
    %313 = arith.truncf %312 : vector<8x32xf32> to vector<8x32xbf16>
    %c1_151 = arith.constant 1 : index
    %c0_152 = arith.constant 0 : index
    %c0_153 = arith.constant 0 : index
    %314 = vector.load %arg18[%c1_151, %c0_152, %c0_153] : memref<2x32x32xbf16, #tpu.memory_space<vmem>>, vector<1x32x32xbf16>
    %315 = vector.shape_cast %314 : vector<1x32x32xbf16> to vector<32x32xbf16>
    %cst_154 = arith.constant dense<0.000000e+00> : vector<8x32xf32>
    %316 = tpu.matmul %313, %315, %cst_154 {dimension_numbers = #tpu.dot_dimension_numbers<[1], [0], [0], [1], [0, 0, 1, 1], [], []>} : vector<8x32xbf16>, vector<32x32xbf16>, vector<8x32xf32> -> vector<8x32xf32>
    %c1_155 = arith.constant 1 : index
    %c0_156 = arith.constant 0 : index
    %c0_157 = arith.constant 0 : index
    %317 = vector.load %arg19[%c1_155, %c0_156, %c0_157] : memref<2x1x32xf32, #tpu.memory_space<vmem>>, vector<1x1x32xf32>
    %318 = vector.shape_cast %317 : vector<1x1x32xf32> to vector<1x32xf32>
    %319 = vector.broadcast %318 : vector<1x32xf32> to vector<8x32xf32>
    %320 = arith.addf %316, %319 : vector<8x32xf32>
    %321 = arith.addf %320, %302 : vector<8x32xf32>
    %322 = arith.mulf %321, %3 : vector<8x32xf32>
    %c0_158 = arith.constant 0 : index
    %c0_159 = arith.constant 0 : index
    %323 = vector.load %arg20[%c0_158, %c0_159] : memref<1x32xf32, #tpu.memory_space<vmem>>, vector<1x32xf32>
    %c0_160 = arith.constant 0 : index
    %c0_161 = arith.constant 0 : index
    %324 = vector.load %arg21[%c0_160, %c0_161] : memref<1x32xf32, #tpu.memory_space<vmem>>, vector<1x32xf32>
    %cst_162 = arith.constant dense<0.000000e+00> : vector<8xf32>
    %325 = vector.multi_reduction <add>, %322, %cst_162 [1] : vector<8x32xf32> to vector<8xf32>
    %326 = vector.shape_cast %325 : vector<8xf32> to vector<8x1xf32>
    %cst_163 = arith.constant 3.200000e+01 : f32
    %327 = vector.broadcast %cst_163 : f32 to vector<8x1xf32>
    %328 = arith.divf %326, %327 : vector<8x1xf32>
    %329 = arith.mulf %322, %322 : vector<8x32xf32>
    %cst_164 = arith.constant dense<0.000000e+00> : vector<8xf32>
    %330 = vector.multi_reduction <add>, %329, %cst_164 [1] : vector<8x32xf32> to vector<8xf32>
    %331 = vector.shape_cast %330 : vector<8xf32> to vector<8x1xf32>
    %cst_165 = arith.constant 3.200000e+01 : f32
    %332 = vector.broadcast %cst_165 : f32 to vector<8x1xf32>
    %333 = arith.divf %331, %332 : vector<8x1xf32>
    %334 = arith.mulf %328, %328 : vector<8x1xf32>
    %335 = arith.subf %333, %334 : vector<8x1xf32>
    %cst_166 = arith.constant 0.000000e+00 : f32
    %336 = vector.broadcast %cst_166 : f32 to vector<8x1xf32>
    %337 = arith.maximumf %335, %336 : vector<8x1xf32>
    %338 = vector.broadcast %328 : vector<8x1xf32> to vector<8x32xf32>
    %339 = arith.subf %322, %338 : vector<8x32xf32>
    %cst_167 = arith.constant 9.99999993E-9 : f32
    %340 = vector.broadcast %cst_167 : f32 to vector<8x1xf32>
    %341 = arith.addf %337, %340 : vector<8x1xf32>
    %342 = math.rsqrt %341 : vector<8x1xf32>
    %343 = vector.broadcast %342 : vector<8x1xf32> to vector<8x32xf32>
    %344 = arith.mulf %339, %343 : vector<8x32xf32>
    %345 = vector.broadcast %323 : vector<1x32xf32> to vector<8x32xf32>
    %346 = arith.mulf %344, %345 : vector<8x32xf32>
    %347 = vector.broadcast %324 : vector<1x32xf32> to vector<8x32xf32>
    %348 = arith.addf %346, %347 : vector<8x32xf32>
    %349 = vector.shape_cast %348 : vector<8x32xf32> to vector<1x8x32xf32>
    %c0_168 = arith.constant 0 : index
    %c0_169 = arith.constant 0 : index
    %c0_170 = arith.constant 0 : index
    %350 = vector.load %arg22[%c0_168, %c0_169, %c0_170] : memref<1x8x32xf32, #tpu.memory_space<vmem>>, vector<1x8x32xf32>
    tpu.vector_store %arg22[%c0_168, %c0_169, %c0_170], %349 {strides = array<i32>} : memref<1x8x32xf32, #tpu.memory_space<vmem>>, vector<1x8x32xf32>,
    return
  }
  func.func @transform_0(%arg0: i32) -> (i32, i32, i32) {
    %c0_i32 = arith.constant 0 : i32
    %c0_i32_0 = arith.constant 0 : i32
    %c0_i32_1 = arith.constant 0 : i32
    return %arg0, %c0_i32, %c0_i32_0 : i32, i32, i32
  }
  func.func @transform_1(%arg0: i32) -> (i32, i32) {
    %c0_i32 = arith.constant 0 : i32
    %c0_i32_0 = arith.constant 0 : i32
    %c0_i32_1 = arith.constant 0 : i32
    return %c0_i32, %c0_i32_0 : i32, i32
  }
  func.func @transform_2(%arg0: i32) -> (i32, i32, i32) {
    %c0_i32 = arith.constant 0 : i32
    %c0_i32_0 = arith.constant 0 : i32
    %c0_i32_1 = arith.constant 0 : i32
    return %arg0, %c0_i32, %c0_i32_0 : i32, i32, i32
  }
  func.func @transform_3(%arg0: i32) -> (i32, i32, i32) {
    %c0_i32 = arith.constant 0 : i32
    %c0_i32_0 = arith.constant 0 : i32
    %c0_i32_1 = arith.constant 0 : i32
    %c0_i32_2 = arith.constant 0 : i32
    return %c0_i32, %c0_i32_0, %c0_i32_1 : i32, i32, i32
  }
  func.func @transform_4(%arg0: i32) -> (i32, i32, i32) {
    %c0_i32 = arith.constant 0 : i32
    %c0_i32_0 = arith.constant 0 : i32
    %c0_i32_1 = arith.constant 0 : i32
    %c0_i32_2 = arith.constant 0 : i32
    return %c0_i32, %c0_i32_0, %c0_i32_1 : i32, i32, i32
  }
  func.func @transform_5(%arg0: i32) -> (i32, i32, i32) {
    %c0_i32 = arith.constant 0 : i32
    %c0_i32_0 = arith.constant 0 : i32
    %c0_i32_1 = arith.constant 0 : i32
    %c0_i32_2 = arith.constant 0 : i32
    return %c0_i32, %c0_i32_0, %c0_i32_1 : i32, i32, i32
  }
  func.func @transform_6(%arg0: i32) -> (i32, i32, i32) {
    %c0_i32 = arith.constant 0 : i32
    %c0_i32_0 = arith.constant 0 : i32
    %c0_i32_1 = arith.constant 0 : i32
    %c0_i32_2 = arith.constant 0 : i32
    return %c0_i32, %c0_i32_0, %c0_i32_1 : i32, i32, i32
  }
  func.func @transform_7(%arg0: i32) -> (i32, i32, i32) {
    %c0_i32 = arith.constant 0 : i32
    %c0_i32_0 = arith.constant 0 : i32
    %c0_i32_1 = arith.constant 0 : i32
    %c0_i32_2 = arith.constant 0 : i32
    return %c0_i32, %c0_i32_0, %c0_i32_1 : i32, i32, i32
  }
  func.func @transform_8(%arg0: i32) -> (i32, i32, i32) {
    %c0_i32 = arith.constant 0 : i32
    %c0_i32_0 = arith.constant 0 : i32
    %c0_i32_1 = arith.constant 0 : i32
    %c0_i32_2 = arith.constant 0 : i32
    return %c0_i32, %c0_i32_0, %c0_i32_1 : i32, i32, i32
  }
  func.func @transform_9(%arg0: i32) -> (i32, i32, i32) {
    %c0_i32 = arith.constant 0 : i32
    %c0_i32_0 = arith.constant 0 : i32
    %c0_i32_1 = arith.constant 0 : i32
    %c0_i32_2 = arith.constant 0 : i32
    return %c0_i32, %c0_i32_0, %c0_i32_1 : i32, i32, i32
  }
  func.func @transform_10(%arg0: i32) -> (i32, i32, i32) {
    %c0_i32 = arith.constant 0 : i32
    %c0_i32_0 = arith.constant 0 : i32
    %c0_i32_1 = arith.constant 0 : i32
    %c0_i32_2 = arith.constant 0 : i32
    return %c0_i32, %c0_i32_0, %c0_i32_1 : i32, i32, i32
  }
  func.func @transform_11(%arg0: i32) -> (i32, i32, i32) {
    %c0_i32 = arith.constant 0 : i32
    %c0_i32_0 = arith.constant 0 : i32
    %c0_i32_1 = arith.constant 0 : i32
    %c0_i32_2 = arith.constant 0 : i32
    return %c0_i32, %c0_i32_0, %c0_i32_1 : i32, i32, i32
  }
  func.func @transform_12(%arg0: i32) -> (i32, i32, i32) {
    %c0_i32 = arith.constant 0 : i32
    %c0_i32_0 = arith.constant 0 : i32
    %c0_i32_1 = arith.constant 0 : i32
    %c0_i32_2 = arith.constant 0 : i32
    return %c0_i32, %c0_i32_0, %c0_i32_1 : i32, i32, i32
  }
  func.func @transform_13(%arg0: i32) -> (i32, i32, i32) {
    %c0_i32 = arith.constant 0 : i32
    %c0_i32_0 = arith.constant 0 : i32
    %c0_i32_1 = arith.constant 0 : i32
    %c0_i32_2 = arith.constant 0 : i32
    return %c0_i32, %c0_i32_0, %c0_i32_1 : i32, i32, i32
  }
  func.func @transform_14(%arg0: i32) -> (i32, i32, i32) {
    %c0_i32 = arith.constant 0 : i32
    %c0_i32_0 = arith.constant 0 : i32
    %c0_i32_1 = arith.constant 0 : i32
    %c0_i32_2 = arith.constant 0 : i32
    return %c0_i32, %c0_i32_0, %c0_i32_1 : i32, i32, i32
  }
  func.func @transform_15(%arg0: i32) -> (i32, i32, i32) {
    %c0_i32 = arith.constant 0 : i32
    %c0_i32_0 = arith.constant 0 : i32
    %c0_i32_1 = arith.constant 0 : i32
    %c0_i32_2 = arith.constant 0 : i32
    return %c0_i32, %c0_i32_0, %c0_i32_1 : i32, i32, i32
  }
  func.func @transform_16(%arg0: i32) -> (i32, i32, i32) {
    %c0_i32 = arith.constant 0 : i32
    %c0_i32_0 = arith.constant 0 : i32
    %c0_i32_1 = arith.constant 0 : i32
    %c0_i32_2 = arith.constant 0 : i32
    return %c0_i32, %c0_i32_0, %c0_i32_1 : i32, i32, i32
  }
  func.func @transform_17(%arg0: i32) -> (i32, i32, i32) {
    %c0_i32 = arith.constant 0 : i32
    %c0_i32_0 = arith.constant 0 : i32
    %c0_i32_1 = arith.constant 0 : i32
    %c0_i32_2 = arith.constant 0 : i32
    return %c0_i32, %c0_i32_0, %c0_i32_1 : i32, i32, i32
  }
  func.func @transform_18(%arg0: i32) -> (i32, i32, i32) {
    %c0_i32 = arith.constant 0 : i32
    %c0_i32_0 = arith.constant 0 : i32
    %c0_i32_1 = arith.constant 0 : i32
    %c0_i32_2 = arith.constant 0 : i32
    return %c0_i32, %c0_i32_0, %c0_i32_1 : i32, i32, i32
  }
  func.func @transform_19(%arg0: i32) -> (i32, i32) {
    %c0_i32 = arith.constant 0 : i32
    %c0_i32_0 = arith.constant 0 : i32
    %c0_i32_1 = arith.constant 0 : i32
    return %c0_i32, %c0_i32_0 : i32, i32
  }
  func.func @transform_20(%arg0: i32) -> (i32, i32) {
    %c0_i32 = arith.constant 0 : i32
    %c0_i32_0 = arith.constant 0 : i32
    %c0_i32_1 = arith.constant 0 : i32
    return %c0_i32, %c0_i32_0 : i32, i32
  }
  func.func @transform_21(%arg0: i32) -> (i32, i32, i32) {
    %c0_i32 = arith.constant 0 : i32
    %c0_i32_0 = arith.constant 0 : i32
    %c0_i32_1 = arith.constant 0 : i32
    return %arg0, %c0_i32, %c0_i32_0 : i32, i32, i32
  }
}

</mosaic_0001>

<llo_original>
// kernel: tpu_custom_call.1
$region0: #{tpu_custom_call.1}
  #allocation0 [shape = 'u32[]', space=smem, size = 0x4, offset = 0x4, fixed_abs, tag = 'smem constant byte address 0x4 - core index']
  #allocation1 [shape = 'u32[144,128]{1,0:T(1,128)}', space=vmem, size = 0x12000, scoped, tag = 'internal scratch']
  %s0 = inlined_call_operand.hbm [shape: f32[2,8,32], index: 0, kind: input, shape index: {}]
  %s1 = inlined_call_operand.hbm [shape: f32[8,32], index: 1, kind: input, shape index: {}]
  %s2 = inlined_call_operand.vmem [shape: f32[2,8,1], index: 2, kind: input, shape index: {}]
  %s3 = inlined_call_operand.vmem [shape: f32[2,1,32], index: 3, kind: input, shape index: {}]
  %s4 = inlined_call_operand.hbm [shape: f32[2,1,32], index: 4, kind: input, shape index: {}]
  %s5 = inlined_call_operand.vmem [shape: bf16[2,32,32], index: 5, kind: input, shape index: {}]
  %s6 = inlined_call_operand.hbm [shape: f32[2,1,32], index: 6, kind: input, shape index: {}]
  %s7 = inlined_call_operand.hbm [shape: bf16[2,32,32], index: 7, kind: input, shape index: {}]
  %s8 = inlined_call_operand.hbm [shape: f32[2,1,32], index: 8, kind: input, shape index: {}]
  %s9 = inlined_call_operand.hbm [shape: bf16[2,32,32], index: 9, kind: input, shape index: {}]
  %s10 = inlined_call_operand.hbm [shape: f32[2,1,32], index: 10, kind: input, shape index: {}]
  %s11 = inlined_call_operand.hbm [shape: bf16[2,32,32], index: 11, kind: input, shape index: {}]
  %s12 = inlined_call_operand.hbm [shape: f32[2,1,32], index: 12, kind: input, shape index: {}]
  %s13 = inlined_call_operand.hbm [shape: f32[2,1,32], index: 13, kind: input, shape index: {}]
  %s14 = inlined_call_operand.vmem [shape: f32[2,1,32], index: 14, kind: input, shape index: {}]
  %s15 = inlined_call_operand.vmem [shape: bf16[2,32,32], index: 15, kind: input, shape index: {}]
  %s16 = inlined_call_operand.vmem [shape: f32[2,1,32], index: 16, kind: input, shape index: {}]
  %s17 = inlined_call_operand.hbm [shape: bf16[2,32,32], index: 17, kind: input, shape index: {}]
  %s18 = inlined_call_operand.vmem [shape: f32[2,1,32], index: 18, kind: input, shape index: {}]
  %s19 = inlined_call_operand.vmem [shape: f32[1,32], index: 19, kind: input, shape index: {}]
  %s20 = inlined_call_operand.vmem [shape: f32[1,32], index: 20, kind: input, shape index: {}]
  %s21 = inlined_call_operand.hbm [shape: f32[2,8,32], index: 21, kind: output, shape index: {}]
  %s22 = sld [smem:[#allocation0]]
  $region165: #{tpu_custom_call.1} parent=0
    _
  %s24 = ssub.s32 1, %s22
  %s25 = scalar_select 0, %s24, %s22
  $region1: #{tpu_custom_call.1} parent=0
    #allocation2 [shape = 'u8[8192]{0}', space=vmem, size = 0x2000, scoped, tag = 'input window, operand 0']
    #allocation3 [shape = 's32[2]{0}', space=sflag, size = 0x8, scoped, tag = 'scoped memory for tpu_custom_call.1']
    #allocation4 [shape = 's32[2]{0}', space=sflag, size = 0x8, scoped, tag = 'scoped memory for tpu_custom_call.1']
    #allocation5 [shape = 'u8[4096]{0}', space=vmem, size = 0x1000, scoped, tag = 'input window, operand 1, single buffered']
    #allocation6 [shape = 's32[1]{0}', space=sflag, size = 0x4, scoped, tag = 'scoped memory for tpu_custom_call.1']
    #allocation7 [shape = 'u8[1024]{0}', space=vmem, size = 0x400, scoped, tag = 'input window, operand 4, single buffered']
    #allocation8 [shape = 'u8[1024]{0}', space=vmem, size = 0x400, scoped, tag = 'input window, operand 6, single buffered']
    #allocation9 [shape = 's32[1]{0}', space=sflag, size = 0x4, scoped, tag = 'scoped memory for tpu_custom_call.1']
    #allocation10 [shape = 'u8[16384]{0}', space=vmem, size = 0x4000, scoped, tag = 'input window, operand 7, single buffered']
    #allocation11 [shape = 'u8[1024]{0}', space=vmem, size = 0x400, scoped, tag = 'input window, operand 8, single buffered']
    #allocation12 [shape = 's32[1]{0}', space=sflag, size = 0x4, scoped, tag = 'scoped memory for tpu_custom_call.1']
    #allocation13 [shape = 'u8[16384]{0}', space=vmem, size = 0x4000, scoped, tag = 'input window, operand 9, single buffered']
    #allocation14 [shape = 'u8[1024]{0}', space=vmem, size = 0x400, scoped, tag = 'input window, operand 10, single buffered']
    #allocation15 [shape = 's32[1]{0}', space=sflag, size = 0x4, scoped, tag = 'scoped memory for tpu_custom_call.1']
    #allocation16 [shape = 'u8[16384]{0}', space=vmem, size = 0x4000, scoped, tag = 'input window, operand 11, single buffered']
    #allocation17 [shape = 'u8[1024]{0}', space=vmem, size = 0x400, scoped, tag = 'input window, operand 12, single buffered']
    #allocation18 [shape = 's32[1]{0}', space=sflag, size = 0x4, scoped, tag = 'scoped memory for tpu_custom_call.1']
    #allocation19 [shape = 'u8[1024]{0}', space=vmem, size = 0x400, scoped, tag = 'input window, operand 13, single buffered']
    #allocation20 [shape = 'u8[16384]{0}', space=vmem, size = 0x4000, scoped, tag = 'input window, operand 17, single buffered']
    #allocation21 [shape = 's32[1]{0}', space=sflag, size = 0x4, scoped, tag = 'scoped memory for tpu_custom_call.1']
    #allocation22 [shape = 'u8[8192]{0}', space=vmem, size = 0x2000, scoped, tag = 'output window, operand 0']
    %26 = vsyncpa [#allocation3], 0
    %s27 = scalar_lea.sflag [#allocation3], 1
    %28 = vsyncpa %s27, 0
    %29 = vsyncpa [#allocation6], 0
    %30 = vsyncpa [#allocation9], 0
    %31 = vsyncpa [#allocation12], 0
    %32 = vsyncpa [#allocation15], 0
    %33 = vsyncpa [#allocation18], 0
    %34 = vsyncpa [#allocation21], 0
    %35 = vsyncpa [#allocation4], 0
    %s36 = scalar_lea.sflag [#allocation4], 1
    %37 = vsyncpa %s36, 0
    loop: start=0, step=1, limit=4
    $region2: #{tpu_custom_call.1} parent=1 // loop_pre_header
      _
    $region3: #{tpu_custom_call.1} parent=1 // loop_header
      %s39 = sphi 0, %s43
      %p40 = scmp.ge.s32.totalorder %s39, 4
      %s49 = sphi 0, %s51
      %s52 = sphi 0, %s49
      %s53 = sphi 0, %s52
      %s69 = sphi 0, %s53
      %s73 = sphi 0, %s73
      %s75 = sphi 0, %s73
      %s76 = sphi 0, %s75
      %s90 = sphi 0, %s76
      %s96 = sphi 0, %s98
      %s99 = sphi 0, %s96
      %s100 = sphi 0, %s99
      %s116 = sphi 0, %s100
      %s120 = sphi 0, %s120
      %s122 = sphi 0, %s120
      %s123 = sphi 0, %s122
      %s137 = sphi 0, %s123
      %s141 = sphi 0, %s141
      %s143 = sphi 0, %s141
      %s144 = sphi 0, %s143
      %s158 = sphi 0, %s144
      %s162 = sphi 0, %s162
      %s164 = sphi 0, %s162
      %s165 = sphi 0, %s164
      %s179 = sphi 0, %s165
      %s183 = sphi 0, %s183
      %s185 = sphi 0, %s183
      %s186 = sphi 0, %s185
      %s200 = sphi 0, %s186
      %s204 = sphi 0, %s204
      %s206 = sphi 0, %s204
      %s207 = sphi 0, %s206
      %s221 = sphi 0, %s207
      %s225 = sphi 0, %s225
      %s227 = sphi 0, %s225
      %s228 = sphi 0, %s227
      %s242 = sphi 0, %s228
      %s246 = sphi 0, %s246
      %s248 = sphi 0, %s246
      %s249 = sphi 0, %s248
      %s263 = sphi 0, %s249
      %s267 = sphi 0, %s267
      %s269 = sphi 0, %s267
      %s270 = sphi 0, %s269
      %s284 = sphi 0, %s270
      %s288 = sphi 0, %s288
      %s290 = sphi 0, %s288
      %s291 = sphi 0, %s290
      %s305 = sphi 0, %s291
      %s309 = sphi 0, %s309
      %s311 = sphi 0, %s309
      %s312 = sphi 0, %s311
      %s326 = sphi 0, %s312
      %s330 = sphi 0, %s330
      %s332 = sphi 0, %s330
      %s333 = sphi 0, %s332
      %s347 = sphi 0, %s333
      %s351 = sphi 0, %s351
      %s353 = sphi 0, %s351
      %s354 = sphi 0, %s353
      %s368 = sphi 0, %s354
      %s372 = sphi 0, %s372
      %s374 = sphi 0, %s372
      %s375 = sphi 0, %s374
      %s389 = sphi 0, %s375
      %s393 = sphi 0, %s393
      %s395 = sphi 0, %s393
      %s396 = sphi 0, %s395
      %s410 = sphi 0, %s396
      %s414 = sphi 0, %s414
      %s416 = sphi 0, %s414
      %s417 = sphi 0, %s416
      %s431 = sphi 0, %s417
      %s435 = sphi 0, %s435
      %s437 = sphi 0, %s435
      %s438 = sphi 0, %s437
      %s452 = sphi 0, %s438
      %s456 = sphi 0, %s456
      %s458 = sphi 0, %s456
      %s459 = sphi 0, %s458
      %s473 = sphi 0, %s459
      %s477 = sphi 0, %s477
      %s479 = sphi 0, %s477
      %s480 = sphi 0, %s479
      %s494 = sphi 0, %s480
      %s500 = sphi 0, %s502
      %s503 = sphi 0, %s500
      %s504 = sphi 0, %s503
      %s520 = sphi 0, %s504
    $region4: #{tpu_custom_call.1} parent=1 // loop_header_branch
      %42 = sbr.rel (%p40) target = $region8
    $region5: #{tpu_custom_call.1} parent=1 // loop_body
      %s44 = ssub.s32 %s39, 1
      %s45 = ssub.s32 %s39, 2
      %s46 = sadd.s32 %s39, 1
      %s47 = ssub.s32 %s39, %s46
      %p48 = scmp.eq.s32.totalorder %s47, 0
      %s50 = sadd.s32 %s49, 1
      %s51 = scalar_select %p48, %s49, %s50
      %p54 = pneg %p48
      %p55 = scmp.eq.s32.totalorder %s39, 1
      %p56 = por %p54, %p55
      %p57 = scmp.ne.s32.totalorder %s49, %s52
      %p58 = scmp.eq.s32.totalorder %s39, 0
      %p59 = por %p57, %p58
      %p60 = scmp.ne.s32.totalorder %s49, %s52
      %p61 = scmp.eq.s32.totalorder %s44, 1
      %p62 = por %p60, %p61
      %p63 = scmp.ne.s32.totalorder %s52, %s53
      %p64 = scmp.eq.s32.totalorder %s44, 0
      %p65 = por %p63, %p64
      %p66 = scmp.ne.s32.totalorder %s52, %s53
      %p67 = scmp.eq.s32.totalorder %s45, 1
      %p68 = por %p66, %p67
      %p70 = scmp.ne.s32.totalorder %s53, %s69
      %p71 = scmp.eq.s32.totalorder %s45, 0
      %p72 = por %p70, %p71
      %s74 = sadd.s32 %s73, 1
      %p77 = scmp.eq.s32.totalorder %s39, 1
      %p78 = scmp.ne.s32.totalorder %s73, %s75
      %p79 = scmp.eq.s32.totalorder %s39, 0
      %p80 = por %p78, %p79
      %p81 = scmp.ne.s32.totalorder %s73, %s75
      %p82 = scmp.eq.s32.totalorder %s44, 1
      %p83 = por %p81, %p82
      %p84 = scmp.ne.s32.totalorder %s75, %s76
      %p85 = scmp.eq.s32.totalorder %s44, 0
      %p86 = por %p84, %p85
      %p87 = scmp.ne.s32.totalorder %s75, %s76
      %p88 = scmp.eq.s32.totalorder %s45, 1
      %p89 = por %p87, %p88
      %p91 = scmp.ne.s32.totalorder %s76, %s90
      %p92 = scmp.eq.s32.totalorder %s45, 0
      %p93 = por %p91, %p92
      %s94 = ssub.s32 %s39, %s46
      %p95 = scmp.eq.s32.totalorder %s94, 0
      %s97 = sadd.s32 %s96, 1
      %s98 = scalar_select %p95, %s96, %s97
      %p101 = pneg %p95
      %p102 = scmp.eq.s32.totalorder %s39, 1
      %p103 = por %p101, %p102
      %p104 = scmp.ne.s32.totalorder %s96, %s99
      %p105 = scmp.eq.s32.totalorder %s39, 0
      %p106 = por %p104, %p105
      %p107 = scmp.ne.s32.totalorder %s96, %s99
      %p108 = scmp.eq.s32.totalorder %s44, 1
      %p109 = por %p107, %p108
      %p110 = scmp.ne.s32.totalorder %s99, %s100
      %p111 = scmp.eq.s32.totalorder %s44, 0
      %p112 = por %p110, %p111
      %p113 = scmp.ne.s32.totalorder %s99, %s100
      %p114 = scmp.eq.s32.totalorder %s45, 1
      %p115 = por %p113, %p114
      %p117 = scmp.ne.s32.totalorder %s100, %s116
      %p118 = scmp.eq.s32.totalorder %s45, 0
      %p119 = por %p117, %p118
      %s121 = sadd.s32 %s120, 1
      %p124 = scmp.eq.s32.totalorder %s39, 1
      %p125 = scmp.ne.s32.totalorder %s120, %s122
      %p126 = scmp.eq.s32.totalorder %s39, 0
      %p127 = por %p125, %p126
      %p128 = scmp.ne.s32.totalorder %s120, %s122
      %p129 = scmp.eq.s32.totalorder %s44, 1
      %p130 = por %p128, %p129
      %p131 = scmp.ne.s32.totalorder %s122, %s123
      %p132 = scmp.eq.s32.totalorder %s44, 0
      %p133 = por %p131, %p132
      %p134 = scmp.ne.s32.totalorder %s122, %s123
      %p135 = scmp.eq.s32.totalorder %s45, 1
      %p136 = por %p134, %p135
      %p138 = scmp.ne.s32.totalorder %s123, %s137
      %p139 = scmp.eq.s32.totalorder %s45, 0
      %p140 = por %p138, %p139
      %s142 = sadd.s32 %s141, 1
      %p145 = scmp.eq.s32.totalorder %s39, 1
      %p146 = scmp.ne.s32.totalorder %s141, %s143
      %p147 = scmp.eq.s32.totalorder %s39, 0
      %p148 = por %p146, %p147
      %p149 = scmp.ne.s32.totalorder %s141, %s143
      %p150 = scmp.eq.s32.totalorder %s44, 1
      %p151 = por %p149, %p150
      %p152 = scmp.ne.s32.totalorder %s143, %s144
      %p153 = scmp.eq.s32.totalorder %s44, 0
      %p154 = por %p152, %p153
      %p155 = scmp.ne.s32.totalorder %s143, %s144
      %p156 = scmp.eq.s32.totalorder %s45, 1
      %p157 = por %p155, %p156
      %p159 = scmp.ne.s32.totalorder %s144, %s158
      %p160 = scmp.eq.s32.totalorder %s45, 0
      %p161 = por %p159, %p160
      %s163 = sadd.s32 %s162, 1
      %p166 = scmp.eq.s32.totalorder %s39, 1
      %p167 = scmp.ne.s32.totalorder %s162, %s164
      %p168 = scmp.eq.s32.totalorder %s39, 0
      %p169 = por %p167, %p168
      %p170 = scmp.ne.s32.totalorder %s162, %s164
      %p171 = scmp.eq.s32.totalorder %s44, 1
      %p172 = por %p170, %p171
      %p173 = scmp.ne.s32.totalorder %s164, %s165
      %p174 = scmp.eq.s32.totalorder %s44, 0
      %p175 = por %p173, %p174
      %p176 = scmp.ne.s32.totalorder %s164, %s165
      %p177 = scmp.eq.s32.totalorder %s45, 1
      %p178 = por %p176, %p177
      %p180 = scmp.ne.s32.totalorder %s165, %s179
      %p181 = scmp.eq.s32.totalorder %s45, 0
      %p182 = por %p180, %p181
      %s184 = sadd.s32 %s183, 1
      %p187 = scmp.eq.s32.totalorder %s39, 1
      %p188 = scmp.ne.s32.totalorder %s183, %s185
      %p189 = scmp.eq.s32.totalorder %s39, 0
      %p190 = por %p188, %p189
      %p191 = scmp.ne.s32.totalorder %s183, %s185
      %p192 = scmp.eq.s32.totalorder %s44, 1
      %p193 = por %p191, %p192
      %p194 = scmp.ne.s32.totalorder %s185, %s186
      %p195 = scmp.eq.s32.totalorder %s44, 0
      %p196 = por %p194, %p195
      %p197 = scmp.ne.s32.totalorder %s185, %s186
      %p198 = scmp.eq.s32.totalorder %s45, 1
      %p199 = por %p197, %p198
      %p201 = scmp.ne.s32.totalorder %s186, %s200
      %p202 = scmp.eq.s32.totalorder %s45, 0
      %p203 = por %p201, %p202
      %s205 = sadd.s32 %s204, 1
      %p208 = scmp.eq.s32.totalorder %s39, 1
      %p209 = scmp.ne.s32.totalorder %s204, %s206
      %p210 = scmp.eq.s32.totalorder %s39, 0
      %p211 = por %p209, %p210
      %p212 = scmp.ne.s32.totalorder %s204, %s206
      %p213 = scmp.eq.s32.totalorder %s44, 1
      %p214 = por %p212, %p213
      %p215 = scmp.ne.s32.totalorder %s206, %s207
      %p216 = scmp.eq.s32.totalorder %s44, 0
      %p217 = por %p215, %p216
      %p218 = scmp.ne.s32.totalorder %s206, %s207
      %p219 = scmp.eq.s32.totalorder %s45, 1
      %p220 = por %p218, %p219
      %p222 = scmp.ne.s32.totalorder %s207, %s221
      %p223 = scmp.eq.s32.totalorder %s45, 0
      %p224 = por %p222, %p223
      %s226 = sadd.s32 %s225, 1
      %p229 = scmp.eq.s32.totalorder %s39, 1
      %p230 = scmp.ne.s32.totalorder %s225, %s227
      %p231 = scmp.eq.s32.totalorder %s39, 0
      %p232 = por %p230, %p231
      %p233 = scmp.ne.s32.totalorder %s225, %s227
      %p234 = scmp.eq.s32.totalorder %s44, 1
      %p235 = por %p233, %p234
      %p236 = scmp.ne.s32.totalorder %s227, %s228
      %p237 = scmp.eq.s32.totalorder %s44, 0
      %p238 = por %p236, %p237
      %p239 = scmp.ne.s32.totalorder %s227, %s228
      %p240 = scmp.eq.s32.totalorder %s45, 1
      %p241 = por %p239, %p240
      %p243 = scmp.ne.s32.totalorder %s228, %s242
      %p244 = scmp.eq.s32.totalorder %s45, 0
      %p245 = por %p243, %p244
      %s247 = sadd.s32 %s246, 1
      %p250 = scmp.eq.s32.totalorder %s39, 1
      %p251 = scmp.ne.s32.totalorder %s246, %s248
      %p252 = scmp.eq.s32.totalorder %s39, 0
      %p253 = por %p251, %p252
      %p254 = scmp.ne.s32.totalorder %s246, %s248
      %p255 = scmp.eq.s32.totalorder %s44, 1
      %p256 = por %p254, %p255
      %p257 = scmp.ne.s32.totalorder %s248, %s249
      %p258 = scmp.eq.s32.totalorder %s44, 0
      %p259 = por %p257, %p258
      %p260 = scmp.ne.s32.totalorder %s248, %s249
      %p261 = scmp.eq.s32.totalorder %s45, 1
      %p262 = por %p260, %p261
      %p264 = scmp.ne.s32.totalorder %s249, %s263
      %p265 = scmp.eq.s32.totalorder %s45, 0
      %p266 = por %p264, %p265
      %s268 = sadd.s32 %s267, 1
      %p271 = scmp.eq.s32.totalorder %s39, 1
      %p272 = scmp.ne.s32.totalorder %s267, %s269
      %p273 = scmp.eq.s32.totalorder %s39, 0
      %p274 = por %p272, %p273
      %p275 = scmp.ne.s32.totalorder %s267, %s269
      %p276 = scmp.eq.s32.totalorder %s44, 1
      %p277 = por %p275, %p276
      %p278 = scmp.ne.s32.totalorder %s269, %s270
      %p279 = scmp.eq.s32.totalorder %s44, 0
      %p280 = por %p278, %p279
      %p281 = scmp.ne.s32.totalorder %s269, %s270
      %p282 = scmp.eq.s32.totalorder %s45, 1
      %p283 = por %p281, %p282
      %p285 = scmp.ne.s32.totalorder %s270, %s284
      %p286 = scmp.eq.s32.totalorder %s45, 0
      %p287 = por %p285, %p286
      %s289 = sadd.s32 %s288, 1
      %p292 = scmp.eq.s32.totalorder %s39, 1
      %p293 = scmp.ne.s32.totalorder %s288, %s290
      %p294 = scmp.eq.s32.totalorder %s39, 0
      %p295 = por %p293, %p294
      %p296 = scmp.ne.s32.totalorder %s288, %s290
      %p297 = scmp.eq.s32.totalorder %s44, 1
      %p298 = por %p296, %p297
      %p299 = scmp.ne.s32.totalorder %s290, %s291
      %p300 = scmp.eq.s32.totalorder %s44, 0
      %p301 = por %p299, %p300
      %p302 = scmp.ne.s32.totalorder %s290, %s291
      %p303 = scmp.eq.s32.totalorder %s45, 1
      %p304 = por %p302, %p303
      %p306 = scmp.ne.s32.totalorder %s291, %s305
      %p307 = scmp.eq.s32.totalorder %s45, 0
      %p308 = por %p306, %p307
      %s310 = sadd.s32 %s309, 1
      %p313 = scmp.eq.s32.totalorder %s39, 1
      %p314 = scmp.ne.s32.totalorder %s309, %s311
      %p315 = scmp.eq.s32.totalorder %s39, 0
      %p316 = por %p314, %p315
      %p317 = scmp.ne.s32.totalorder %s309, %s311
      %p318 = scmp.eq.s32.totalorder %s44, 1
      %p319 = por %p317, %p318
      %p320 = scmp.ne.s32.totalorder %s311, %s312
      %p321 = scmp.eq.s32.totalorder %s44, 0
      %p322 = por %p320, %p321
      %p323 = scmp.ne.s32.totalorder %s311, %s312
      %p324 = scmp.eq.s32.totalorder %s45, 1
      %p325 = por %p323, %p324
      %p327 = scmp.ne.s32.totalorder %s312, %s326
      %p328 = scmp.eq.s32.totalorder %s45, 0
      %p329 = por %p327, %p328
      %s331 = sadd.s32 %s330, 1
      %p334 = scmp.eq.s32.totalorder %s39, 1
      %p335 = scmp.ne.s32.totalorder %s330, %s332
      %p336 = scmp.eq.s32.totalorder %s39, 0
      %p337 = por %p335, %p336
      %p338 = scmp.ne.s32.totalorder %s330, %s332
      %p339 = scmp.eq.s32.totalorder %s44, 1
      %p340 = por %p338, %p339
      %p341 = scmp.ne.s32.totalorder %s332, %s333
      %p342 = scmp.eq.s32.totalorder %s44, 0
      %p343 = por %p341, %p342
      %p344 = scmp.ne.s32.totalorder %s332, %s333
      %p345 = scmp.eq.s32.totalorder %s45, 1
      %p346 = por %p344, %p345
      %p348 = scmp.ne.s32.totalorder %s333, %s347
      %p349 = scmp.eq.s32.totalorder %s45, 0
      %p350 = por %p348, %p349
      %s352 = sadd.s32 %s351, 1
      %p355 = scmp.eq.s32.totalorder %s39, 1
      %p356 = scmp.ne.s32.totalorder %s351, %s353
      %p357 = scmp.eq.s32.totalorder %s39, 0
      %p358 = por %p356, %p357
      %p359 = scmp.ne.s32.totalorder %s351, %s353
      %p360 = scmp.eq.s32.totalorder %s44, 1
      %p361 = por %p359, %p360
      %p362 = scmp.ne.s32.totalorder %s353, %s354
      %p363 = scmp.eq.s32.totalorder %s44, 0
      %p364 = por %p362, %p363
      %p365 = scmp.ne.s32.totalorder %s353, %s354
      %p366 = scmp.eq.s32.totalorder %s45, 1
      %p367 = por %p365, %p366
      %p369 = scmp.ne.s32.totalorder %s354, %s368
      %p370 = scmp.eq.s32.totalorder %s45, 0
      %p371 = por %p369, %p370
      %s373 = sadd.s32 %s372, 1
      %p376 = scmp.eq.s32.totalorder %s39, 1
      %p377 = scmp.ne.s32.totalorder %s372, %s374
      %p378 = scmp.eq.s32.totalorder %s39, 0
      %p379 = por %p377, %p378
      %p380 = scmp.ne.s32.totalorder %s372, %s374
      %p381 = scmp.eq.s32.totalorder %s44, 1
      %p382 = por %p380, %p381
      %p383 = scmp.ne.s32.totalorder %s374, %s375
      %p384 = scmp.eq.s32.totalorder %s44, 0
      %p385 = por %p383, %p384
      %p386 = scmp.ne.s32.totalorder %s374, %s375
      %p387 = scmp.eq.s32.totalorder %s45, 1
      %p388 = por %p386, %p387
      %p390 = scmp.ne.s32.totalorder %s375, %s389
      %p391 = scmp.eq.s32.totalorder %s45, 0
      %p392 = por %p390, %p391
      %s394 = sadd.s32 %s393, 1
      %p397 = scmp.eq.s32.totalorder %s39, 1
      %p398 = scmp.ne.s32.totalorder %s393, %s395
      %p399 = scmp.eq.s32.totalorder %s39, 0
      %p400 = por %p398, %p399
      %p401 = scmp.ne.s32.totalorder %s393, %s395
      %p402 = scmp.eq.s32.totalorder %s44, 1
      %p403 = por %p401, %p402
      %p404 = scmp.ne.s32.totalorder %s395, %s396
      %p405 = scmp.eq.s32.totalorder %s44, 0
      %p406 = por %p404, %p405
      %p407 = scmp.ne.s32.totalorder %s395, %s396
      %p408 = scmp.eq.s32.totalorder %s45, 1
      %p409 = por %p407, %p408
      %p411 = scmp.ne.s32.totalorder %s396, %s410
      %p412 = scmp.eq.s32.totalorder %s45, 0
      %p413 = por %p411, %p412
      %s415 = sadd.s32 %s414, 1
      %p418 = scmp.eq.s32.totalorder %s39, 1
      %p419 = scmp.ne.s32.totalorder %s414, %s416
      %p420 = scmp.eq.s32.totalorder %s39, 0
      %p421 = por %p419, %p420
      %p422 = scmp.ne.s32.totalorder %s414, %s416
      %p423 = scmp.eq.s32.totalorder %s44, 1
      %p424 = por %p422, %p423
      %p425 = scmp.ne.s32.totalorder %s416, %s417
      %p426 = scmp.eq.s32.totalorder %s44, 0
      %p427 = por %p425, %p426
      %p428 = scmp.ne.s32.totalorder %s416, %s417
      %p429 = scmp.eq.s32.totalorder %s45, 1
      %p430 = por %p428, %p429
      %p432 = scmp.ne.s32.totalorder %s417, %s431
      %p433 = scmp.eq.s32.totalorder %s45, 0
      %p434 = por %p432, %p433
      %s436 = sadd.s32 %s435, 1
      %p439 = scmp.eq.s32.totalorder %s39, 1
      %p440 = scmp.ne.s32.totalorder %s435, %s437
      %p441 = scmp.eq.s32.totalorder %s39, 0
      %p442 = por %p440, %p441
      %p443 = scmp.ne.s32.totalorder %s435, %s437
      %p444 = scmp.eq.s32.totalorder %s44, 1
      %p445 = por %p443, %p444
      %p446 = scmp.ne.s32.totalorder %s437, %s438
      %p447 = scmp.eq.s32.totalorder %s44, 0
      %p448 = por %p446, %p447
      %p449 = scmp.ne.s32.totalorder %s437, %s438
      %p450 = scmp.eq.s32.totalorder %s45, 1
      %p451 = por %p449, %p450
      %p453 = scmp.ne.s32.totalorder %s438, %s452
      %p454 = scmp.eq.s32.totalorder %s45, 0
      %p455 = por %p453, %p454
      %s457 = sadd.s32 %s456, 1
      %p460 = scmp.eq.s32.totalorder %s39, 1
      %p461 = scmp.ne.s32.totalorder %s456, %s458
      %p462 = scmp.eq.s32.totalorder %s39, 0
      %p463 = por %p461, %p462
      %p464 = scmp.ne.s32.totalorder %s456, %s458
      %p465 = scmp.eq.s32.totalorder %s44, 1
      %p466 = por %p464, %p465
      %p467 = scmp.ne.s32.totalorder %s458, %s459
      %p468 = scmp.eq.s32.totalorder %s44, 0
      %p469 = por %p467, %p468
      %p470 = scmp.ne.s32.totalorder %s458, %s459
      %p471 = scmp.eq.s32.totalorder %s45, 1
      %p472 = por %p470, %p471
      %p474 = scmp.ne.s32.totalorder %s459, %s473
      %p475 = scmp.eq.s32.totalorder %s45, 0
      %p476 = por %p474, %p475
      %s478 = sadd.s32 %s477, 1
      %p481 = scmp.eq.s32.totalorder %s39, 1
      %p482 = scmp.ne.s32.totalorder %s477, %s479
      %p483 = scmp.eq.s32.totalorder %s39, 0
      %p484 = por %p482, %p483
      %p485 = scmp.ne.s32.totalorder %s477, %s479
      %p486 = scmp.eq.s32.totalorder %s44, 1
      %p487 = por %p485, %p486
      %p488 = scmp.ne.s32.totalorder %s479, %s480
      %p489 = scmp.eq.s32.totalorder %s44, 0
      %p490 = por %p488, %p489
      %p491 = scmp.ne.s32.totalorder %s479, %s480
      %p492 = scmp.eq.s32.totalorder %s45, 1
      %p493 = por %p491, %p492
      %p495 = scmp.ne.s32.totalorder %s480, %s494
      %p496 = scmp.eq.s32.totalorder %s45, 0
      %p497 = por %p495, %p496
      %s498 = ssub.s32 %s39, %s46
      %p499 = scmp.eq.s32.totalorder %s498, 0
      %s501 = sadd.s32 %s500, 1
      %s502 = scalar_select %p499, %s500, %s501
      %p505 = pneg %p499
      %p506 = scmp.eq.s32.totalorder %s39, 1
      %p507 = por %p505, %p506
      %p508 = scmp.ne.s32.totalorder %s500, %s503
      %p509 = scmp.eq.s32.totalorder %s39, 0
      %p510 = por %p508, %p509
      %p511 = scmp.ne.s32.totalorder %s500, %s503
      %p512 = scmp.eq.s32.totalorder %s44, 1
      %p513 = por %p511, %p512
      %p514 = scmp.ne.s32.totalorder %s503, %s504
      %p515 = scmp.eq.s32.totalorder %s44, 0
      %p516 = por %p514, %p515
      %p517 = scmp.ne.s32.totalorder %s503, %s504
      %p518 = scmp.eq.s32.totalorder %s45, 1
      %p519 = por %p517, %p518
      %p521 = scmp.ne.s32.totalorder %s504, %s520
      %p522 = scmp.eq.s32.totalorder %s45, 0
      %p523 = por %p521, %p522
      %p524 = scmp.le.s32.totalorder 1, %s39
      %p525 = scmp.lt.s32.totalorder %s39, 3
      %p526 = pnand %p524, %p525
      %p527 = pneg %p526
      // Predicated region
      $region9: #{tpu_custom_call.1} parent=5 // pred_check
        _
      $region10: #{tpu_custom_call.1} parent=5 // pred_check_branch
        %529 = sbr.rel (%p526) target = $region12
      $region11: #{tpu_custom_call.1} parent=5 // pred_region
        %s530 = ssub.s32 %s39, 1
        // Predicated region
        $region13: #{tpu_custom_call.1} parent=11 // pred_check
          %p531 = pneg %p86
        $region14: #{tpu_custom_call.1} parent=11 // pred_check_branch
          %533 = sbr.rel (%p531) target = $region16
        $region15: #{tpu_custom_call.1} parent=11 // pred_region
          %s535 = ssub.s32 128, 128
          %536 = vsyncadd [#allocation6], %s535
          %s538 = sshll.u32 [#allocation5], 4
          %s539 = int_to_ptr.vmem [resolvable:$true] %s538
          %541 = dma.hbm_to_vmem [thread:$0]  %s1, 128, %s539, [#allocation6]
        $region16: #{tpu_custom_call.1} parent=11 // pred_fallthru
          _
        // Predicated region
        $region17: #{tpu_custom_call.1} parent=11 // pred_check
          %p542 = pneg %p133
        $region18: #{tpu_custom_call.1} parent=11 // pred_check_branch
          %544 = sbr.rel (%p542) target = $region20
        $region19: #{tpu_custom_call.1} parent=11 // pred_region
          _
        $region20: #{tpu_custom_call.1} parent=11 // pred_fallthru
          _
        // Predicated region
        $region21: #{tpu_custom_call.1} parent=11 // pred_check
          %p545 = pneg %p154
        $region22: #{tpu_custom_call.1} parent=11 // pred_check_branch
          %547 = sbr.rel (%p545) target = $region24
        $region23: #{tpu_custom_call.1} parent=11 // pred_region
          %s549 = ssub.s32 32, 32
          %550 = vsyncadd [#allocation6], %s549
          %s551 = sshll.u32 [#allocation7], 4
          %s552 = int_to_ptr.vmem [resolvable:$true] %s551
          %557 = dma.hbm_to_vmem [thread:$0]  %s4, 32, %s552, [#allocation6], 16, 16, 1
        $region24: #{tpu_custom_call.1} parent=11 // pred_fallthru
          _
        // Predicated region
        $region25: #{tpu_custom_call.1} parent=11 // pred_check
          %p558 = pneg %p175
        $region26: #{tpu_custom_call.1} parent=11 // pred_check_branch
          %560 = sbr.rel (%p558) target = $region28
        $region27: #{tpu_custom_call.1} parent=11 // pred_region
          _
        $region28: #{tpu_custom_call.1} parent=11 // pred_fallthru
          _
        // Predicated region
        $region29: #{tpu_custom_call.1} parent=11 // pred_check
          %p561 = pneg %p196
        $region30: #{tpu_custom_call.1} parent=11 // pred_check_branch
          %563 = sbr.rel (%p561) target = $region32
        $region31: #{tpu_custom_call.1} parent=11 // pred_region
          %s565 = ssub.s32 32, 32
          %566 = vsyncadd [#allocation9], %s565
          %s567 = sshll.u32 [#allocation8], 4
          %s568 = int_to_ptr.vmem [resolvable:$true] %s567
          %573 = dma.hbm_to_vmem [thread:$0]  %s6, 32, %s568, [#allocation9], 16, 16, 1
        $region32: #{tpu_custom_call.1} parent=11 // pred_fallthru
          _
        // Predicated region
        $region33: #{tpu_custom_call.1} parent=11 // pred_check
          %p574 = pneg %p217
        $region34: #{tpu_custom_call.1} parent=11 // pred_check_branch
          %576 = sbr.rel (%p574) target = $region36
        $region35: #{tpu_custom_call.1} parent=11 // pred_region
          %s578 = ssub.s32 512, 512
          %579 = vsyncadd [#allocation9], %s578
          %s580 = sshll.u32 [#allocation10], 4
          %s581 = int_to_ptr.vmem [resolvable:$true] %s580
          %586 = dma.hbm_to_vmem [thread:$0]  %s7, 512, %s581, [#allocation9], 64, 64, 4
        $region36: #{tpu_custom_call.1} parent=11 // pred_fallthru
          _
        // Predicated region
        $region37: #{tpu_custom_call.1} parent=11 // pred_check
          %p587 = pneg %p238
        $region38: #{tpu_custom_call.1} parent=11 // pred_check_branch
          %589 = sbr.rel (%p587) target = $region40
        $region39: #{tpu_custom_call.1} parent=11 // pred_region
          %s591 = ssub.s32 32, 32
          %592 = vsyncadd [#allocation12], %s591
          %s593 = sshll.u32 [#allocation11], 4
          %s594 = int_to_ptr.vmem [resolvable:$true] %s593
          %599 = dma.hbm_to_vmem [thread:$0]  %s8, 32, %s594, [#allocation12], 16, 16, 1
        $region40: #{tpu_custom_call.1} parent=11 // pred_fallthru
          _
        // Predicated region
        $region41: #{tpu_custom_call.1} parent=11 // pred_check
          %p600 = pneg %p259
        $region42: #{tpu_custom_call.1} parent=11 // pred_check_branch
          %602 = sbr.rel (%p600) target = $region44
        $region43: #{tpu_custom_call.1} parent=11 // pred_region
          %s604 = ssub.s32 512, 512
          %605 = vsyncadd [#allocation12], %s604
          %s606 = sshll.u32 [#allocation13], 4
          %s607 = int_to_ptr.vmem [resolvable:$true] %s606
          %612 = dma.hbm_to_vmem [thread:$0]  %s9, 512, %s607, [#allocation12], 64, 64, 4
        $region44: #{tpu_custom_call.1} parent=11 // pred_fallthru
          _
        // Predicated region
        $region45: #{tpu_custom_call.1} parent=11 // pred_check
          %p613 = pneg %p280
        $region46: #{tpu_custom_call.1} parent=11 // pred_check_branch
          %615 = sbr.rel (%p613) target = $region48
        $region47: #{tpu_custom_call.1} parent=11 // pred_region
          %s617 = ssub.s32 32, 32
          %618 = vsyncadd [#allocation15], %s617
          %s619 = sshll.u32 [#allocation14], 4
          %s620 = int_to_ptr.vmem [resolvable:$true] %s619
          %625 = dma.hbm_to_vmem [thread:$0]  %s10, 32, %s620, [#allocation15], 16, 16, 1
        $region48: #{tpu_custom_call.1} parent=11 // pred_fallthru
          _
        // Predicated region
        $region49: #{tpu_custom_call.1} parent=11 // pred_check
          %p626 = pneg %p301
        $region50: #{tpu_custom_call.1} parent=11 // pred_check_branch
          %628 = sbr.rel (%p626) target = $region52
        $region51: #{tpu_custom_call.1} parent=11 // pred_region
          %s630 = ssub.s32 512, 512
          %631 = vsyncadd [#allocation15], %s630
          %s632 = sshll.u32 [#allocation16], 4
          %s633 = int_to_ptr.vmem [resolvable:$true] %s632
          %638 = dma.hbm_to_vmem [thread:$0]  %s11, 512, %s633, [#allocation15], 64, 64, 4
        $region52: #{tpu_custom_call.1} parent=11 // pred_fallthru
          _
        // Predicated region
        $region53: #{tpu_custom_call.1} parent=11 // pred_check
          %p639 = pneg %p322
        $region54: #{tpu_custom_call.1} parent=11 // pred_check_branch
          %641 = sbr.rel (%p639) target = $region56
        $region55: #{tpu_custom_call.1} parent=11 // pred_region
          %s643 = ssub.s32 32, 32
          %644 = vsyncadd [#allocation18], %s643
          %s645 = sshll.u32 [#allocation17], 4
          %s646 = int_to_ptr.vmem [resolvable:$true] %s645
          %651 = dma.hbm_to_vmem [thread:$0]  %s12, 32, %s646, [#allocation18], 16, 16, 1
        $region56: #{tpu_custom_call.1} parent=11 // pred_fallthru
          _
        // Predicated region
        $region57: #{tpu_custom_call.1} parent=11 // pred_check
          %p652 = pneg %p343
        $region58: #{tpu_custom_call.1} parent=11 // pred_check_branch
          %654 = sbr.rel (%p652) target = $region60
        $region59: #{tpu_custom_call.1} parent=11 // pred_region
          %s656 = ssub.s32 32, 32
          %657 = vsyncadd [#allocation18], %s656
          %s658 = sshll.u32 [#allocation19], 4
          %s659 = int_to_ptr.vmem [resolvable:$true] %s658
          %664 = dma.hbm_to_vmem [thread:$0]  %s13, 32, %s659, [#allocation18], 16, 16, 1
        $region60: #{tpu_custom_call.1} parent=11 // pred_fallthru
          _
        // Predicated region
        $region61: #{tpu_custom_call.1} parent=11 // pred_check
          %p665 = pneg %p364
        $region62: #{tpu_custom_call.1} parent=11 // pred_check_branch
          %667 = sbr.rel (%p665) target = $region64
        $region63: #{tpu_custom_call.1} parent=11 // pred_region
          _
        $region64: #{tpu_custom_call.1} parent=11 // pred_fallthru
          _
        // Predicated region
        $region65: #{tpu_custom_call.1} parent=11 // pred_check
          %p668 = pneg %p385
        $region66: #{tpu_custom_call.1} parent=11 // pred_check_branch
          %670 = sbr.rel (%p668) target = $region68
        $region67: #{tpu_custom_call.1} parent=11 // pred_region
          _
        $region68: #{tpu_custom_call.1} parent=11 // pred_fallthru
          _
        // Predicated region
        $region69: #{tpu_custom_call.1} parent=11 // pred_check
          %p671 = pneg %p406
        $region70: #{tpu_custom_call.1} parent=11 // pred_check_branch
          %673 = sbr.rel (%p671) target = $region72
        $region71: #{tpu_custom_call.1} parent=11 // pred_region
          _
        $region72: #{tpu_custom_call.1} parent=11 // pred_fallthru
          _
        // Predicated region
        $region73: #{tpu_custom_call.1} parent=11 // pred_check
          %p674 = pneg %p427
        $region74: #{tpu_custom_call.1} parent=11 // pred_check_branch
          %676 = sbr.rel (%p674) target = $region76
        $region75: #{tpu_custom_call.1} parent=11 // pred_region
          %s678 = ssub.s32 512, 512
          %679 = vsyncadd [#allocation21], %s678
          %s680 = sshll.u32 [#allocation20], 4
          %s681 = int_to_ptr.vmem [resolvable:$true] %s680
          %686 = dma.hbm_to_vmem [thread:$0]  %s17, 512, %s681, [#allocation21], 64, 64, 4
        $region76: #{tpu_custom_call.1} parent=11 // pred_fallthru
          _
        // Predicated region
        $region77: #{tpu_custom_call.1} parent=11 // pred_check
          %p687 = pneg %p448
        $region78: #{tpu_custom_call.1} parent=11 // pred_check_branch
          %689 = sbr.rel (%p687) target = $region80
        $region79: #{tpu_custom_call.1} parent=11 // pred_region
          _
        $region80: #{tpu_custom_call.1} parent=11 // pred_fallthru
          _
        // Predicated region
        $region81: #{tpu_custom_call.1} parent=11 // pred_check
          %p690 = pneg %p469
        $region82: #{tpu_custom_call.1} parent=11 // pred_check_branch
          %692 = sbr.rel (%p690) target = $region84
        $region83: #{tpu_custom_call.1} parent=11 // pred_region
          _
        $region84: #{tpu_custom_call.1} parent=11 // pred_fallthru
          _
        // Predicated region
        $region85: #{tpu_custom_call.1} parent=11 // pred_check
          %p693 = pneg %p490
        $region86: #{tpu_custom_call.1} parent=11 // pred_check_branch
          %695 = sbr.rel (%p693) target = $region88
        $region87: #{tpu_custom_call.1} parent=11 // pred_region
          _
        $region88: #{tpu_custom_call.1} parent=11 // pred_fallthru
          _
      $region12: #{tpu_custom_call.1} parent=5 // pred_fallthru
        _
      %p696 = scmp.lt.s32.totalorder %s39, 2
      // Predicated region
      $region89: #{tpu_custom_call.1} parent=5 // pred_check
        %p697 = pneg %p696
      $region90: #{tpu_custom_call.1} parent=5 // pred_check_branch
        %699 = sbr.rel (%p697) target = $region92
      $region91: #{tpu_custom_call.1} parent=5 // pred_region
        // Predicated region
        $region93: #{tpu_custom_call.1} parent=91 // pred_check
          %p700 = pneg %p59
        $region94: #{tpu_custom_call.1} parent=91 // pred_check_branch
          %702 = sbr.rel (%p700) target = $region96
        $region95: #{tpu_custom_call.1} parent=91 // pred_region
          %s703 = sand.u32 %s49, 1
          %s704 = scalar_lea.sflag [#allocation3], %s703
          %s705 = sand.u32 %s49, 1
          %s706 = smul.addr %s705, 8
          %s707 = scalar_lea.vmem [#allocation2], %s706
          %s709 = ssub.s32 128, 128
          %710 = vsyncadd %s704, %s709
          %s711 = smul.addr %s39, 128
          %s712 = scalar_lea.hbm %s0, %s711
          %s714 = sshll.u32 %s707, 4
          %s715 = int_to_ptr.vmem [resolvable:$true] %s714
          %717 = dma.hbm_to_vmem [thread:$0]  %s712, 128, %s715, %s704
        $region96: #{tpu_custom_call.1} parent=91 // pred_fallthru
          _
        // Predicated region
        $region97: #{tpu_custom_call.1} parent=91 // pred_check
          %p718 = pneg %p106
        $region98: #{tpu_custom_call.1} parent=91 // pred_check_branch
          %720 = sbr.rel (%p718) target = $region100
        $region99: #{tpu_custom_call.1} parent=91 // pred_region
          %p721 = scmp.lt.s32.totalorder %s39, 1
          %s722 = scalar_select %p721, %s39, 1
          %s723 = smul.addr %s722, 8
          %s724 = scalar_lea.vmem %s2, %s723
        $region100: #{tpu_custom_call.1} parent=91 // pred_fallthru
          _
      $region92: #{tpu_custom_call.1} parent=5 // pred_fallthru
        _
      %p725 = scmp.le.s32.totalorder 1, %s39
      %p726 = scmp.lt.s32.totalorder %s39, 3
      %p727 = pnand %p725, %p726
      %p728 = pneg %p727
      // Predicated region
      $region101: #{tpu_custom_call.1} parent=5 // pred_check
        _
      $region102: #{tpu_custom_call.1} parent=5 // pred_check_branch
        %730 = sbr.rel (%p727) target = $region104
      $region103: #{tpu_custom_call.1} parent=5 // pred_region
        %s731 = ssub.s32 %s39, 1
        %s732 = sand.u32 %s52, 1
        %s733 = scalar_lea.sflag [#allocation3], %s732
        %s734 = sand.u32 %s52, 1
        %s735 = smul.addr %s734, 8
        %s736 = scalar_lea.vmem [#allocation2], %s735
        // Predicated region
        $region105: #{tpu_custom_call.1} parent=103 // pred_check
          %p737 = pneg %p65
        $region106: #{tpu_custom_call.1} parent=103 // pred_check_branch
          %739 = sbr.rel (%p737) target = $region108
        $region107: #{tpu_custom_call.1} parent=103 // pred_region
          %740 = dma.done %s733, 128
        $region108: #{tpu_custom_call.1} parent=103 // pred_fallthru
          _
        // Predicated region
        $region109: #{tpu_custom_call.1} parent=103 // pred_check
          %p741 = pneg %p86
        $region110: #{tpu_custom_call.1} parent=103 // pred_check_branch
          %743 = sbr.rel (%p741) target = $region112
        $region111: #{tpu_custom_call.1} parent=103 // pred_region
          %744 = dma.done [#allocation6], 128
        $region112: #{tpu_custom_call.1} parent=103 // pred_fallthru
          _
        // Predicated region
        $region113: #{tpu_custom_call.1} parent=103 // pred_check
          %p745 = pneg %p154
        $region114: #{tpu_custom_call.1} parent=103 // pred_check_branch
          %747 = sbr.rel (%p745) target = $region116
        $region115: #{tpu_custom_call.1} parent=103 // pred_region
          %748 = dma.done [#allocation6], 32
        $region116: #{tpu_custom_call.1} parent=103 // pred_fallthru
          _
        // Predicated region
        $region117: #{tpu_custom_call.1} parent=103 // pred_check
          %p749 = pneg %p196
        $region118: #{tpu_custom_call.1} parent=103 // pred_check_branch
          %751 = sbr.rel (%p749) target = $region120
        $region119: #{tpu_custom_call.1} parent=103 // pred_region
          %752 = dma.done [#allocation9], 32
        $region120: #{tpu_custom_call.1} parent=103 // pred_fallthru
          _
        // Predicated region
        $region121: #{tpu_custom_call.1} parent=103 // pred_check
          %p753 = pneg %p217
        $region122: #{tpu_custom_call.1} parent=103 // pred_check_branch
          %755 = sbr.rel (%p753) target = $region124
        $region123: #{tpu_custom_call.1} parent=103 // pred_region
          %756 = dma.done [#allocation9], 512
        $region124: #{tpu_custom_call.1} parent=103 // pred_fallthru
          _
        // Predicated region
        $region125: #{tpu_custom_call.1} parent=103 // pred_check
          %p757 = pneg %p238
        $region126: #{tpu_custom_call.1} parent=103 // pred_check_branch
          %759 = sbr.rel (%p757) target = $region128
        $region127: #{tpu_custom_call.1} parent=103 // pred_region
          %760 = dma.done [#allocation12], 32
        $region128: #{tpu_custom_call.1} parent=103 // pred_fallthru
          _
        // Predicated region
        $region129: #{tpu_custom_call.1} parent=103 // pred_check
          %p761 = pneg %p259
        $region130: #{tpu_custom_call.1} parent=103 // pred_check_branch
          %763 = sbr.rel (%p761) target = $region132
        $region131: #{tpu_custom_call.1} parent=103 // pred_region
          %764 = dma.done [#allocation12], 512
        $region132: #{tpu_custom_call.1} parent=103 // pred_fallthru
          _
        // Predicated region
        $region133: #{tpu_custom_call.1} parent=103 // pred_check
          %p765 = pneg %p280
        $region134: #{tpu_custom_call.1} parent=103 // pred_check_branch
          %767 = sbr.rel (%p765) target = $region136
        $region135: #{tpu_custom_call.1} parent=103 // pred_region
          %768 = dma.done [#allocation15], 32
        $region136: #{tpu_custom_call.1} parent=103 // pred_fallthru
          _
        // Predicated region
        $region137: #{tpu_custom_call.1} parent=103 // pred_check
          %p769 = pneg %p301
        $region138: #{tpu_custom_call.1} parent=103 // pred_check_branch
          %771 = sbr.rel (%p769) target = $region140
        $region139: #{tpu_custom_call.1} parent=103 // pred_region
          %772 = dma.done [#allocation15], 512
        $region140: #{tpu_custom_call.1} parent=103 // pred_fallthru
          _
        // Predicated region
        $region141: #{tpu_custom_call.1} parent=103 // pred_check
          %p773 = pneg %p322
        $region142: #{tpu_custom_call.1} parent=103 // pred_check_branch
          %775 = sbr.rel (%p773) target = $region144
        $region143: #{tpu_custom_call.1} parent=103 // pred_region
          %776 = dma.done [#allocation18], 32
        $region144: #{tpu_custom_call.1} parent=103 // pred_fallthru
          _
        // Predicated region
        $region145: #{tpu_custom_call.1} parent=103 // pred_check
          %p777 = pneg %p343
        $region146: #{tpu_custom_call.1} parent=103 // pred_check_branch
          %779 = sbr.rel (%p777) target = $region148
        $region147: #{tpu_custom_call.1} parent=103 // pred_region
          %780 = dma.done [#allocation18], 32
        $region148: #{tpu_custom_call.1} parent=103 // pred_fallthru
          _
        // Predicated region
        $region149: #{tpu_custom_call.1} parent=103 // pred_check
          %p781 = pneg %p427
        $region150: #{tpu_custom_call.1} parent=103 // pred_check_branch
          %783 = sbr.rel (%p781) target = $region152
        $region151: #{tpu_custom_call.1} parent=103 // pred_region
          %784 = dma.done [#allocation21], 512
        $region152: #{tpu_custom_call.1} parent=103 // pred_fallthru
          _
        %s785 = sand.u32 %s52, 1
        %s786 = scalar_lea.sflag [#allocation3], %s785
        %s787 = sand.u32 %s52, 1
        %s788 = smul.addr %s787, 8
        %s789 = scalar_lea.vmem [#allocation2], %s788
        %p790 = pneg %p65
        %p791 = pneg %p62
        %p792 = pneg %p86
        %p793 = pneg %p83
        %p794 = scmp.lt.s32.totalorder %s44, 1
        %s795 = scalar_select %p794, %s44, 1
        %s796 = smul.addr %s795, 8
        %s797 = scalar_lea.vmem %s2, %s796
        %p798 = pneg %p112
        %p799 = pneg %p109
        %p800 = pneg %p133
        %p801 = pneg %p130
        %p802 = pneg %p154
        %p803 = pneg %p151
        %p804 = pneg %p175
        %p805 = pneg %p172
        %p806 = pneg %p196
        %p807 = pneg %p193
        %p808 = pneg %p217
        %p809 = pneg %p214
        %p810 = pneg %p238
        %p811 = pneg %p235
        %p812 = pneg %p259
        %p813 = pneg %p256
        %p814 = pneg %p280
        %p815 = pneg %p277
        %p816 = pneg %p301
        %p817 = pneg %p298
        %p818 = pneg %p322
        %p819 = pneg %p319
        %p820 = pneg %p343
        %p821 = pneg %p340
        %p822 = pneg %p364
        %p823 = pneg %p361
        %p824 = pneg %p385
        %p825 = pneg %p382
        %p826 = pneg %p406
        %p827 = pneg %p403
        %p828 = pneg %p427
        %p829 = pneg %p424
        %p830 = pneg %p448
        %p831 = pneg %p445
        %p832 = pneg %p469
        %p833 = pneg %p466
        %p834 = pneg %p490
        %p835 = pneg %p487
        %p836 = pneg %p516
        %p837 = pneg %p513
        %s838 = sand.u32 %s503, 1
        %s839 = scalar_lea.sflag [#allocation4], %s838
        %s840 = sand.u32 %s503, 1
        %s841 = smul.addr %s840, 8
        %s842 = scalar_lea.vmem [#allocation22], %s841
        %p843 = scmp.lt.s32.totalorder %s44, 1
        %s844 = scalar_select %p843, %s44, 1
        %s845 = smul.addr %s844, 8
        %s846 = scalar_lea.vmem %s2, %s845
        %v848 = vld [vmem:[%s846] sm:$0xff]
        %850 = vset.pattern.permute.xlu0 0
        %851 = vperm.xlu0 %850, %v848
        %v852 = vpop.permute.xlu0 %851
        %v854 = vld [vmem:[%s736] sm:$0xff]
        %v855 = vmul.f32 %v854, 5.656854
        %v856 = vld [vmem:[#allocation5] sm:$0xff]
        %v857 = vadd.f32 %v855, %v856
        %v858 = vmul.f32 %v857, %v852
        %v859 = vlaneseq
        %v860 = vshrl.u32 %v859, 7
        %v861 = vlaneseq
        %v862 = vand.u32 %v861, 127
        %vm863 = vcmp.le.s32.totalorder %v862, %v860
        %v864 = vsel %vm863, 0.0, -1e+30
        %v865 = vld [vmem:[%s5] sm:$0xf]
        %v866 = vld [vmem:[%s5 + $0x4] sm:$0xf]
        %v867 = vld [vmem:[%s5 + $0x8] sm:$0xf]
        %v868 = vld [vmem:[%s5 + $0xc] sm:$0xf]
        %v869 = vld [vmem:[#allocation10] sm:$0xf]
        %v870 = vld [vmem:[#allocation10 + $0x4] sm:$0xf]
        %v871 = vld [vmem:[#allocation10 + $0x8] sm:$0xf]
        %v872 = vld [vmem:[#allocation10 + $0xc] sm:$0xf]
        %v873 = vld [vmem:[#allocation13] sm:$0xf]
        %v874 = vld [vmem:[#allocation13 + $0x4] sm:$0xf]
        %v875 = vld [vmem:[#allocation13 + $0x8] sm:$0xf]
        %v876 = vld [vmem:[#allocation13 + $0xc] sm:$0xf]
        %v877 = vld [vmem:[#allocation16] sm:$0xf]
        %v878 = vld [vmem:[#allocation16 + $0x4] sm:$0xf]
        %v879 = vld [vmem:[#allocation16 + $0x8] sm:$0xf]
        %v880 = vld [vmem:[#allocation16 + $0xc] sm:$0xf]
        %v881 = vld [vmem:[#allocation8] sm:$0x1]
        %v882 = vld [vmem:[#allocation11] sm:$0x1]
        %v883 = vld [vmem:[#allocation14] sm:$0x1]
        %v884 = vld [vmem:[#allocation17] sm:$0x1]
        %v885 = vld [vmem:[%s3] sm:$0x1]
        %v886 = vld [vmem:[#allocation7] sm:$0x1]
        %vm887 = vcmask 261120
        %v888 = vsel %vm887, %v858, 0.0
        %889 = vadd.xlane.f32.xlu0 %v888
        %v890 = vpop.xlane.xlu0 %889
        %v891 = vrcp.pop 32.0
        %v892 = vmul.f32 %v890, %v891
        %v893 = vmul.f32 %v858, %v858
        %v894 = vsel %vm887, %v893, 0.0
        %895 = vadd.xlane.f32.xlu0 %v894
        %v896 = vpop.xlane.xlu0 %895
        %v897 = vmul.f32 %v896, %v891
        %v898 = vmul.f32 %v892, %v892
        %v899 = vsub.f32 %v897, %v898
        %v900 = vmax.f32 %v899, 0.0
        %v901 = vsub.f32 %v858, %v892
        %v902 = vadd.f32 %v900, 1e-08
        %v903 = vrsqrt.pop %v902
        %v904 = vmul.f32 %v901, %v903
        %v906 = vlaneseq
        %v907 = vshrl.u32 %v906, 7
        %v908 = vsub.s32 0, %v907
        %v909 = vrot.slane %v885, %v908
        %v911 = vmul.f32 %v904, %v909
        %v913 = vlaneseq
        %v914 = vshrl.u32 %v913, 7
        %v915 = vsub.s32 0, %v914
        %v916 = vrot.slane %v886, %v915
        %v918 = vadd.f32 %v911, %v916
        %v919 = vpack.c.bf16 %v918, %v918
        %v920 = vpack.c.bf16 %v858, %v858
        %v922 = vlaneseq
        %v923 = vshrl.u32 %v922, 7
        %v924 = vsub.s32 0, %v923
        %v925 = vrot.slane %v881, %v924
        %v931 = vunpack.c.l.b16 %v865
        %v932 = vunpack.c.l.b16 %v866
        %v933 = vunpack.c.l.b16 %v867
        %v934 = vunpack.c.l.b16 %v868
        %v935 = vpack.c.b16 %v932, %v931
        %v936 = vpack.c.b16 %v934, %v933
        %v940 = vsel %vm887, %v919, 0
        %942 = vmatprep.subr.bf16.mxu0 0
        %943 = vmatpush1.bf16.msra.mxu0 %v935
        %944 = vmatprep.subr.bf16.mxu0 0
        %945 = vmatpush1.bf16.msra.mxu0 %v936
        %946 = vmatprep.subr.bf16.mxu0 0
        %947 = vmatpush1.bf16.msra.mxu0 0
        %948 = vmatprep.subr.bf16.mxu0 0
        %949 = vmatpush1.bf16.msra.mxu0 0
        %950 = vmatprep.subr.bf16.mxu0 0
        %951 = vmatpush1.bf16.msra.mxu0 0
        %952 = vmatprep.subr.bf16.mxu0 0
        %953 = vmatpush1.bf16.msra.mxu0 0
        %954 = vmatprep.subr.bf16.mxu0 0
        %955 = vmatpush1.bf16.msra.mxu0 0
        %956 = vmatprep.subr.bf16.mxu0 0
        %957 = vmatpush1.bf16.msra.mxu0 0
        %958 = vmatprep.subr.bf16.mxu0 0
        %959 = vmatpush1.bf16.msra.mxu0 0
        %960 = vmatprep.subr.bf16.mxu0 0
        %961 = vmatpush1.bf16.msra.mxu0 0
        %962 = vmatprep.subr.bf16.mxu0 0
        %963 = vmatpush1.bf16.msra.mxu0 0
        %964 = vmatprep.subr.bf16.mxu0 0
        %965 = vmatpush1.bf16.msra.mxu0 0
        %966 = vmatprep.subr.bf16.mxu0 0
        %967 = vmatpush1.bf16.msra.mxu0 0
        %968 = vmatprep.subr.bf16.mxu0 0
        %969 = vmatpush1.bf16.msra.mxu0 0
        %970 = vmatprep.subr.bf16.mxu0 0
        %971 = vmatpush1.bf16.msra.mxu0 0
        %972 = vmatprep.subr.bf16.mxu0 0
        %973 = vmatpush1.bf16.msra.mxu0 0
        %974 = vmatprep.mubr.bf16.mxu0 0
        %975 = vmatmul.mubr.bf16.gmra.mrb[0].mxu0 %v940
        %v976 = vpop.f32.mrb[0].mxu0
        %v977 = vadd.f32 %v925, %v976
        %v978 = vpop.f32.mrb[0].mxu0
        %v979 = vpop.f32.mrb[0].mxu0
        %v980 = vpop.f32.mrb[0].mxu0
        %981 = vdwg.mxu0
        %v982 = vpack.c.bf16 %v977, %v977
        %v984 = vlaneseq
        %v985 = vshrl.u32 %v984, 7
        %v986 = vsub.s32 0, %v985
        %v987 = vrot.slane %v882, %v986
        %v993 = vunpack.c.l.b16 %v869
        %v994 = vunpack.c.l.b16 %v870
        %v995 = vunpack.c.l.b16 %v871
        %v996 = vunpack.c.l.b16 %v872
        %v997 = vpack.c.b16 %v994, %v993
        %v998 = vpack.c.b16 %v996, %v995
        %v1002 = vsel %vm887, %v920, 0
        %1004 = vmatprep.subr.bf16.mxu0 0
        %1005 = vmatpush1.bf16.msra.mxu0 %v997
        %1006 = vmatprep.subr.bf16.mxu0 0
        %1007 = vmatpush1.bf16.msra.mxu0 %v998
        %1008 = vmatprep.subr.bf16.mxu0 0
        %1009 = vmatpush1.bf16.msra.mxu0 0
        %1010 = vmatprep.subr.bf16.mxu0 0
        %1011 = vmatpush1.bf16.msra.mxu0 0
        %1012 = vmatprep.subr.bf16.mxu0 0
        %1013 = vmatpush1.bf16.msra.mxu0 0
        %1014 = vmatprep.subr.bf16.mxu0 0
        %1015 = vmatpush1.bf16.msra.mxu0 0
        %1016 = vmatprep.subr.bf16.mxu0 0
        %1017 = vmatpush1.bf16.msra.mxu0 0
        %1018 = vmatprep.subr.bf16.mxu0 0
        %1019 = vmatpush1.bf16.msra.mxu0 0
        %1020 = vmatprep.subr.bf16.mxu0 0
        %1021 = vmatpush1.bf16.msra.mxu0 0
        %1022 = vmatprep.subr.bf16.mxu0 0
        %1023 = vmatpush1.bf16.msra.mxu0 0
        %1024 = vmatprep.subr.bf16.mxu0 0
        %1025 = vmatpush1.bf16.msra.mxu0 0
        %1026 = vmatprep.subr.bf16.mxu0 0
        %1027 = vmatpush1.bf16.msra.mxu0 0
        %1028 = vmatprep.subr.bf16.mxu0 0
        %1029 = vmatpush1.bf16.msra.mxu0 0
        %1030 = vmatprep.subr.bf16.mxu0 0
        %1031 = vmatpush1.bf16.msra.mxu0 0
        %1032 = vmatprep.subr.bf16.mxu0 0
        %1033 = vmatpush1.bf16.msra.mxu0 0
        %1034 = vmatprep.subr.bf16.mxu0 0
        %1035 = vmatpush1.bf16.msra.mxu0 0
        %1036 = vmatprep.mubr.bf16.mxu0 0
        %1037 = vmatmul.mubr.bf16.gmra.mrb[0].mxu0 %v1002
        %v1038 = vpop.f32.mrb[0].mxu0
        %v1039 = vadd.f32 %v987, %v1038
        %v1040 = vpop.f32.mrb[0].mxu0
        %v1041 = vpop.f32.mrb[0].mxu0
        %v1042 = vpop.f32.mrb[0].mxu0
        %1043 = vdwg.mxu0
        %v1044 = vpack.c.bf16 %v1039, %v1039
        %v1046 = vlaneseq
        %v1047 = vshrl.u32 %v1046, 7
        %v1048 = vsub.s32 0, %v1047
        %v1049 = vrot.slane %v883, %v1048
        %v1055 = vunpack.c.l.b16 %v873
        %v1056 = vunpack.c.l.b16 %v874
        %v1057 = vunpack.c.l.b16 %v875
        %v1058 = vunpack.c.l.b16 %v876
        %v1059 = vpack.c.b16 %v1056, %v1055
        %v1060 = vpack.c.b16 %v1058, %v1057
        %1063 = vmatprep.subr.bf16.mxu0 0
        %1064 = vmatpush1.bf16.msra.mxu0 %v1059
        %1065 = vmatprep.subr.bf16.mxu0 0
        %1066 = vmatpush1.bf16.msra.mxu0 %v1060
        %1067 = vmatprep.subr.bf16.mxu0 0
        %1068 = vmatpush1.bf16.msra.mxu0 0
        %1069 = vmatprep.subr.bf16.mxu0 0
        %1070 = vmatpush1.bf16.msra.mxu0 0
        %1071 = vmatprep.subr.bf16.mxu0 0
        %1072 = vmatpush1.bf16.msra.mxu0 0
        %1073 = vmatprep.subr.bf16.mxu0 0
        %1074 = vmatpush1.bf16.msra.mxu0 0
        %1075 = vmatprep.subr.bf16.mxu0 0
        %1076 = vmatpush1.bf16.msra.mxu0 0
        %1077 = vmatprep.subr.bf16.mxu0 0
        %1078 = vmatpush1.bf16.msra.mxu0 0
        %1079 = vmatprep.subr.bf16.mxu0 0
        %1080 = vmatpush1.bf16.msra.mxu0 0
        %1081 = vmatprep.subr.bf16.mxu0 0
        %1082 = vmatpush1.bf16.msra.mxu0 0
        %1083 = vmatprep.subr.bf16.mxu0 0
        %1084 = vmatpush1.bf16.msra.mxu0 0
        %1085 = vmatprep.subr.bf16.mxu0 0
        %1086 = vmatpush1.bf16.msra.mxu0 0
        %1087 = vmatprep.subr.bf16.mxu0 0
        %1088 = vmatpush1.bf16.msra.mxu0 0
        %1089 = vmatprep.subr.bf16.mxu0 0
        %1090 = vmatpush1.bf16.msra.mxu0 0
        %1091 = vmatprep.subr.bf16.mxu0 0
        %1092 = vmatpush1.bf16.msra.mxu0 0
        %1093 = vmatprep.subr.bf16.mxu0 0
        %1094 = vmatpush1.bf16.msra.mxu0 0
        %1095 = vmatprep.mubr.bf16.mxu0 0
        %1096 = vmatmul.mubr.bf16.gmra.mrb[0].mxu0 %v1002
        %v1097 = vpop.f32.mrb[0].mxu0
        %v1098 = vadd.f32 %v1049, %v1097
        %v1099 = vpop.f32.mrb[0].mxu0
        %v1100 = vpop.f32.mrb[0].mxu0
        %v1101 = vpop.f32.mrb[0].mxu0
        %1102 = vdwg.mxu0
        %v1103 = vpack.c.bf16 %v1098, %v1098
        %vm1104 = vcmask 130048
        %v1106 = vsel %vm1104, %v982, 0
        %v1109 = vsel %vm1104, %v1044, 0
        %1111 = vmatprep.subr.bf16.mxu0 0
        %1112 = vmatpush1.bf16.xpose.msra.mxu0 %v1109
        %1113 = vmatprep.subr.bf16.mxu0 0
        %1114 = vmatpush1.bf16.xpose.msra.mxu0 0
        %1115 = vmatprep.subr.bf16.mxu0 0
        %1116 = vmatpush1.bf16.xpose.msra.mxu0 0
        %1117 = vmatprep.subr.bf16.mxu0 0
        %1118 = vmatpush1.bf16.xpose.msra.mxu0 0
        %1119 = vmatprep.subr.bf16.mxu0 0
        %1120 = vmatpush1.bf16.xpose.msra.mxu0 0
        %1121 = vmatprep.subr.bf16.mxu0 0
        %1122 = vmatpush1.bf16.xpose.msra.mxu0 0
        %1123 = vmatprep.subr.bf16.mxu0 0
        %1124 = vmatpush1.bf16.xpose.msra.mxu0 0
        %1125 = vmatprep.subr.bf16.mxu0 0
        %1126 = vmatpush1.bf16.xpose.msra.mxu0 0
        %1127 = vmatprep.subr.bf16.mxu0 0
        %1128 = vmatpush1.bf16.xpose.msra.mxu0 0
        %1129 = vmatprep.subr.bf16.mxu0 0
        %1130 = vmatpush1.bf16.xpose.msra.mxu0 0
        %1131 = vmatprep.subr.bf16.mxu0 0
        %1132 = vmatpush1.bf16.xpose.msra.mxu0 0
        %1133 = vmatprep.subr.bf16.mxu0 0
        %1134 = vmatpush1.bf16.xpose.msra.mxu0 0
        %1135 = vmatprep.subr.bf16.mxu0 0
        %1136 = vmatpush1.bf16.xpose.msra.mxu0 0
        %1137 = vmatprep.subr.bf16.mxu0 0
        %1138 = vmatpush1.bf16.xpose.msra.mxu0 0
        %1139 = vmatprep.subr.bf16.mxu0 0
        %1140 = vmatpush1.bf16.xpose.msra.mxu0 0
        %1141 = vmatprep.subr.bf16.mxu0 0
        %1142 = vmatpush1.bf16.xpose.msra.mxu0 0
        %1143 = vmatprep.mubr.bf16.mxu0 0
        %1144 = vmatmul.mubr.bf16.gmra.mrb[0].mxu0 %v1106
        %v1145 = vpop.f32.mrb[0].mxu0
        %v1146 = vadd.f32 %v864, %v1145
        %v1147 = vpop.f32.mrb[0].mxu0
        %v1148 = vpop.f32.mrb[0].mxu0
        %v1149 = vpop.f32.mrb[0].mxu0
        %1150 = vdwg.mxu0
        %vm1151 = vcmask 64512
        %v1152 = vsel %vm1151, %v1146, -inf
        %1153 = vmax.xlane.f32.xlu0 %v1152
        %v1154 = vpop.xlane.xlu0 %1153
        %v1155 = vsub.f32 %v1146, %v1154
        %v1156 = vmul.f32 %v1155, 1.442695
        %v1157 = vpow.pop %v1156
        %v1158 = vsel %vm1151, %v1157, 0.0
        %1159 = vadd.xlane.f32.xlu0 %v1158
        %v1160 = vpop.xlane.xlu0 %1159
        %v1161 = vrcp.pop %v1160
        %v1162 = vmul.f32 %v1157, %v1161
        %v1163 = vpack.c.bf16 %v1162, %v1162
        %v1165 = vsel %vm1151, %v1163, 0
        %vm1167 = vcmask 1043456
        %v1169 = vsel %vm1167, %v1103, 0
        %1171 = vmatprep.subr.bf16.mxu0 0
        %1172 = vmatpush1.bf16.msra.mxu0 %v1169
        %1173 = vmatprep.subr.bf16.mxu0 0
        %1174 = vmatpush1.bf16.msra.mxu0 0
        %1175 = vmatprep.subr.bf16.mxu0 0
        %1176 = vmatpush1.bf16.msra.mxu0 0
        %1177 = vmatprep.subr.bf16.mxu0 0
        %1178 = vmatpush1.bf16.msra.mxu0 0
        %1179 = vmatprep.subr.bf16.mxu0 0
        %1180 = vmatpush1.bf16.msra.mxu0 0
        %1181 = vmatprep.subr.bf16.mxu0 0
        %1182 = vmatpush1.bf16.msra.mxu0 0
        %1183 = vmatprep.subr.bf16.mxu0 0
        %1184 = vmatpush1.bf16.msra.mxu0 0
        %1185 = vmatprep.subr.bf16.mxu0 0
        %1186 = vmatpush1.bf16.msra.mxu0 0
        %1187 = vmatprep.subr.bf16.mxu0 0
        %1188 = vmatpush1.bf16.msra.mxu0 0
        %1189 = vmatprep.subr.bf16.mxu0 0
        %1190 = vmatpush1.bf16.msra.mxu0 0
        %1191 = vmatprep.subr.bf16.mxu0 0
        %1192 = vmatpush1.bf16.msra.mxu0 0
        %1193 = vmatprep.subr.bf16.mxu0 0
        %1194 = vmatpush1.bf16.msra.mxu0 0
        %1195 = vmatprep.subr.bf16.mxu0 0
        %1196 = vmatpush1.bf16.msra.mxu0 0
        %1197 = vmatprep.subr.bf16.mxu0 0
        %1198 = vmatpush1.bf16.msra.mxu0 0
        %1199 = vmatprep.subr.bf16.mxu0 0
        %1200 = vmatpush1.bf16.msra.mxu0 0
        %1201 = vmatprep.subr.bf16.mxu0 0
        %1202 = vmatpush1.bf16.msra.mxu0 0
        %1203 = vmatprep.mubr.bf16.mxu0 0
        %1204 = vmatmul.mubr.bf16.gmra.mrb[0].mxu0 %v1165
        %v1205 = vpop.f32.mrb[0].mxu0
        %v1206 = vadd.f32 0.0, %v1205
        %v1207 = vpop.f32.mrb[0].mxu0
        %v1208 = vpop.f32.mrb[0].mxu0
        %v1209 = vpop.f32.mrb[0].mxu0
        %1210 = vdwg.mxu0
        %1212 = vrot.lane.b32.xlu0 %v982, 112
        %v1213 = vpop.permute.xlu0 %1212
        %1215 = vrot.lane.b32.xlu0 %v1044, 112
        %v1216 = vpop.permute.xlu0 %1215
        %v1218 = vsel %vm1104, %v1213, 0
        %v1221 = vsel %vm1104, %v1216, 0
        %1223 = vmatprep.subr.bf16.mxu0 0
        %1224 = vmatpush1.bf16.xpose.msra.mxu0 %v1221
        %1225 = vmatprep.subr.bf16.mxu0 0
        %1226 = vmatpush1.bf16.xpose.msra.mxu0 0
        %1227 = vmatprep.subr.bf16.mxu0 0
        %1228 = vmatpush1.bf16.xpose.msra.mxu0 0
        %1229 = vmatprep.subr.bf16.mxu0 0
        %1230 = vmatpush1.bf16.xpose.msra.mxu0 0
        %1231 = vmatprep.subr.bf16.mxu0 0
        %1232 = vmatpush1.bf16.xpose.msra.mxu0 0
        %1233 = vmatprep.subr.bf16.mxu0 0
        %1234 = vmatpush1.bf16.xpose.msra.mxu0 0
        %1235 = vmatprep.subr.bf16.mxu0 0
        %1236 = vmatpush1.bf16.xpose.msra.mxu0 0
        %1237 = vmatprep.subr.bf16.mxu0 0
        %1238 = vmatpush1.bf16.xpose.msra.mxu0 0
        %1239 = vmatprep.subr.bf16.mxu0 0
        %1240 = vmatpush1.bf16.xpose.msra.mxu0 0
        %1241 = vmatprep.subr.bf16.mxu0 0
        %1242 = vmatpush1.bf16.xpose.msra.mxu0 0
        %1243 = vmatprep.subr.bf16.mxu0 0
        %1244 = vmatpush1.bf16.xpose.msra.mxu0 0
        %1245 = vmatprep.subr.bf16.mxu0 0
        %1246 = vmatpush1.bf16.xpose.msra.mxu0 0
        %1247 = vmatprep.subr.bf16.mxu0 0
        %1248 = vmatpush1.bf16.xpose.msra.mxu0 0
        %1249 = vmatprep.subr.bf16.mxu0 0
        %1250 = vmatpush1.bf16.xpose.msra.mxu0 0
        %1251 = vmatprep.subr.bf16.mxu0 0
        %1252 = vmatpush1.bf16.xpose.msra.mxu0 0
        %1253 = vmatprep.subr.bf16.mxu0 0
        %1254 = vmatpush1.bf16.xpose.msra.mxu0 0
        %1255 = vmatprep.mubr.bf16.mxu0 0
        %1256 = vmatmul.mubr.bf16.gmra.mrb[0].mxu0 %v1218
        %v1257 = vpop.f32.mrb[0].mxu0
        %v1258 = vadd.f32 %v864, %v1257
        %v1259 = vpop.f32.mrb[0].mxu0
        %v1260 = vpop.f32.mrb[0].mxu0
        %v1261 = vpop.f32.mrb[0].mxu0
        %1262 = vdwg.mxu0
        %v1263 = vsel %vm1151, %v1258, -inf
        %1264 = vmax.xlane.f32.xlu0 %v1263
        %v1265 = vpop.xlane.xlu0 %1264
        %v1266 = vsub.f32 %v1258, %v1265
        %v1267 = vmul.f32 %v1266, 1.442695
        %v1268 = vpow.pop %v1267
        %v1269 = vsel %vm1151, %v1268, 0.0
        %1270 = vadd.xlane.f32.xlu0 %v1269
        %v1271 = vpop.xlane.xlu0 %1270
        %v1272 = vrcp.pop %v1271
        %v1273 = vmul.f32 %v1268, %v1272
        %v1274 = vpack.c.bf16 %v1273, %v1273
        %1276 = vrot.lane.b32.xlu0 %v1103, 112
        %v1277 = vpop.permute.xlu0 %1276
        %v1279 = vsel %vm1151, %v1274, 0
        %v1282 = vsel %vm1167, %v1277, 0
        %1284 = vmatprep.subr.bf16.mxu0 0
        %1285 = vmatpush1.bf16.msra.mxu0 %v1282
        %1286 = vmatprep.subr.bf16.mxu0 0
        %1287 = vmatpush1.bf16.msra.mxu0 0
        %1288 = vmatprep.subr.bf16.mxu0 0
        %1289 = vmatpush1.bf16.msra.mxu0 0
        %1290 = vmatprep.subr.bf16.mxu0 0
        %1291 = vmatpush1.bf16.msra.mxu0 0
        %1292 = vmatprep.subr.bf16.mxu0 0
        %1293 = vmatpush1.bf16.msra.mxu0 0
        %1294 = vmatprep.subr.bf16.mxu0 0
        %1295 = vmatpush1.bf16.msra.mxu0 0
        %1296 = vmatprep.subr.bf16.mxu0 0
        %1297 = vmatpush1.bf16.msra.mxu0 0
        %1298 = vmatprep.subr.bf16.mxu0 0
        %1299 = vmatpush1.bf16.msra.mxu0 0
        %1300 = vmatprep.subr.bf16.mxu0 0
        %1301 = vmatpush1.bf16.msra.mxu0 0
        %1302 = vmatprep.subr.bf16.mxu0 0
        %1303 = vmatpush1.bf16.msra.mxu0 0
        %1304 = vmatprep.subr.bf16.mxu0 0
        %1305 = vmatpush1.bf16.msra.mxu0 0
        %1306 = vmatprep.subr.bf16.mxu0 0
        %1307 = vmatpush1.bf16.msra.mxu0 0
        %1308 = vmatprep.subr.bf16.mxu0 0
        %1309 = vmatpush1.bf16.msra.mxu0 0
        %1310 = vmatprep.subr.bf16.mxu0 0
        %1311 = vmatpush1.bf16.msra.mxu0 0
        %1312 = vmatprep.subr.bf16.mxu0 0
        %1313 = vmatpush1.bf16.msra.mxu0 0
        %1314 = vmatprep.subr.bf16.mxu0 0
        %1315 = vmatpush1.bf16.msra.mxu0 0
        %1316 = vmatprep.mubr.bf16.mxu0 0
        %1317 = vmatmul.mubr.bf16.gmra.mrb[0].mxu0 %v1279
        %v1318 = vpop.f32.mrb[0].mxu0
        %v1319 = vadd.f32 0.0, %v1318
        %v1320 = vpop.f32.mrb[0].mxu0
        %v1321 = vpop.f32.mrb[0].mxu0
        %v1322 = vpop.f32.mrb[0].mxu0
        %1323 = vdwg.mxu0
        %1325 = vrot.lane.b32.xlu0 %v1319, 16
        %v1326 = vpop.permute.xlu0 %1325
        %v1328 = vsel %vm1104, %v1206, %v1326
        %v1329 = vpack.c.bf16 %v1328, %v1328
        %v1331 = vlaneseq
        %v1332 = vshrl.u32 %v1331, 7
        %v1333 = vsub.s32 0, %v1332
        %v1334 = vrot.slane %v884, %v1333
        %v1340 = vunpack.c.l.b16 %v877
        %v1341 = vunpack.c.l.b16 %v878
        %v1342 = vunpack.c.l.b16 %v879
        %v1343 = vunpack.c.l.b16 %v880
        %v1344 = vpack.c.b16 %v1341, %v1340
        %v1345 = vpack.c.b16 %v1343, %v1342
        %v1349 = vsel %vm887, %v1329, 0
        %1351 = vmatprep.subr.bf16.mxu0 0
        %1352 = vmatpush1.bf16.msra.mxu0 %v1344
        %1353 = vmatprep.subr.bf16.mxu0 0
        %1354 = vmatpush1.bf16.msra.mxu0 %v1345
        %1355 = vmatprep.subr.bf16.mxu0 0
        %1356 = vmatpush1.bf16.msra.mxu0 0
        %1357 = vmatprep.subr.bf16.mxu0 0
        %1358 = vmatpush1.bf16.msra.mxu0 0
        %1359 = vmatprep.subr.bf16.mxu0 0
        %1360 = vmatpush1.bf16.msra.mxu0 0
        %1361 = vmatprep.subr.bf16.mxu0 0
        %1362 = vmatpush1.bf16.msra.mxu0 0
        %1363 = vmatprep.subr.bf16.mxu0 0
        %1364 = vmatpush1.bf16.msra.mxu0 0
        %1365 = vmatprep.subr.bf16.mxu0 0
        %1366 = vmatpush1.bf16.msra.mxu0 0
        %1367 = vmatprep.subr.bf16.mxu0 0
        %1368 = vmatpush1.bf16.msra.mxu0 0
        %1369 = vmatprep.subr.bf16.mxu0 0
        %1370 = vmatpush1.bf16.msra.mxu0 0
        %1371 = vmatprep.subr.bf16.mxu0 0
        %1372 = vmatpush1.bf16.msra.mxu0 0
        %1373 = vmatprep.subr.bf16.mxu0 0
        %1374 = vmatpush1.bf16.msra.mxu0 0
        %1375 = vmatprep.subr.bf16.mxu0 0
        %1376 = vmatpush1.bf16.msra.mxu0 0
        %1377 = vmatprep.subr.bf16.mxu0 0
        %1378 = vmatpush1.bf16.msra.mxu0 0
        %1379 = vmatprep.subr.bf16.mxu0 0
        %1380 = vmatpush1.bf16.msra.mxu0 0
        %1381 = vmatprep.subr.bf16.mxu0 0
        %1382 = vmatpush1.bf16.msra.mxu0 0
        %1383 = vmatprep.mubr.bf16.mxu0 0
        %1384 = vmatmul.mubr.bf16.gmra.mrb[0].mxu0 %v1349
        %v1385 = vpop.f32.mrb[0].mxu0
        %v1386 = vadd.f32 %v1334, %v1385
        %v1387 = vpop.f32.mrb[0].mxu0
        %v1388 = vpop.f32.mrb[0].mxu0
        %v1389 = vpop.f32.mrb[0].mxu0
        %1390 = vdwg.mxu0
        %v1391 = vadd.f32 %v918, %v1386
        %v1392 = vld [vmem:[#allocation19] sm:$0x1]
        %v1393 = vld [vmem:[%s14] sm:$0x1]
        %v1394 = vsel %vm887, %v1391, 0.0
        %1395 = vadd.xlane.f32.xlu0 %v1394
        %v1396 = vpop.xlane.xlu0 %1395
        %v1397 = vmul.f32 %v1396, %v891
        %v1398 = vmul.f32 %v1391, %v1391
        %v1399 = vsel %vm887, %v1398, 0.0
        %1400 = vadd.xlane.f32.xlu0 %v1399
        %v1401 = vpop.xlane.xlu0 %1400
        %v1402 = vmul.f32 %v1401, %v891
        %v1403 = vmul.f32 %v1397, %v1397
        %v1404 = vsub.f32 %v1402, %v1403
        %v1405 = vmax.f32 %v1404, 0.0
        %v1406 = vsub.f32 %v1391, %v1397
        %v1407 = vadd.f32 %v1405, 1e-08
        %v1408 = vrsqrt.pop %v1407
        %v1409 = vmul.f32 %v1406, %v1408
        %v1411 = vlaneseq
        %v1412 = vshrl.u32 %v1411, 7
        %v1413 = vsub.s32 0, %v1412
        %v1414 = vrot.slane %v1392, %v1413
        %v1416 = vmul.f32 %v1409, %v1414
        %v1418 = vlaneseq
        %v1419 = vshrl.u32 %v1418, 7
        %v1420 = vsub.s32 0, %v1419
        %v1421 = vrot.slane %v1393, %v1420
        %v1423 = vadd.f32 %v1416, %v1421
        %v1424 = vpack.c.bf16 %v1423, %v1423
        %v1425 = vld [vmem:[%s15] sm:$0xf]
        %v1426 = vld [vmem:[%s15 + $0x4] sm:$0xf]
        %v1427 = vld [vmem:[%s15 + $0x8] sm:$0xf]
        %v1428 = vld [vmem:[%s15 + $0xc] sm:$0xf]
        %v1429 = vld [vmem:[%s16] sm:$0x1]
        %v1431 = vlaneseq
        %v1432 = vshrl.u32 %v1431, 7
        %v1433 = vsub.s32 0, %v1432
        %v1434 = vrot.slane %v1429, %v1433
        %v1440 = vunpack.c.l.b16 %v1425
        %v1441 = vunpack.c.l.b16 %v1426
        %v1442 = vunpack.c.l.b16 %v1427
        %v1443 = vunpack.c.l.b16 %v1428
        %v1444 = vpack.c.b16 %v1441, %v1440
        %v1445 = vpack.c.b16 %v1443, %v1442
        %v1449 = vsel %vm887, %v1424, 0
        %1451 = vmatprep.subr.bf16.mxu0 0
        %1452 = vmatpush1.bf16.msra.mxu0 %v1444
        %1453 = vmatprep.subr.bf16.mxu0 0
        %1454 = vmatpush1.bf16.msra.mxu0 %v1445
        %1455 = vmatprep.subr.bf16.mxu0 0
        %1456 = vmatpush1.bf16.msra.mxu0 0
        %1457 = vmatprep.subr.bf16.mxu0 0
        %1458 = vmatpush1.bf16.msra.mxu0 0
        %1459 = vmatprep.subr.bf16.mxu0 0
        %1460 = vmatpush1.bf16.msra.mxu0 0
        %1461 = vmatprep.subr.bf16.mxu0 0
        %1462 = vmatpush1.bf16.msra.mxu0 0
        %1463 = vmatprep.subr.bf16.mxu0 0
        %1464 = vmatpush1.bf16.msra.mxu0 0
        %1465 = vmatprep.subr.bf16.mxu0 0
        %1466 = vmatpush1.bf16.msra.mxu0 0
        %1467 = vmatprep.subr.bf16.mxu0 0
        %1468 = vmatpush1.bf16.msra.mxu0 0
        %1469 = vmatprep.subr.bf16.mxu0 0
        %1470 = vmatpush1.bf16.msra.mxu0 0
        %1471 = vmatprep.subr.bf16.mxu0 0
        %1472 = vmatpush1.bf16.msra.mxu0 0
        %1473 = vmatprep.subr.bf16.mxu0 0
        %1474 = vmatpush1.bf16.msra.mxu0 0
        %1475 = vmatprep.subr.bf16.mxu0 0
        %1476 = vmatpush1.bf16.msra.mxu0 0
        %1477 = vmatprep.subr.bf16.mxu0 0
        %1478 = vmatpush1.bf16.msra.mxu0 0
        %1479 = vmatprep.subr.bf16.mxu0 0
        %1480 = vmatpush1.bf16.msra.mxu0 0
        %1481 = vmatprep.subr.bf16.mxu0 0
        %1482 = vmatpush1.bf16.msra.mxu0 0
        %1483 = vmatprep.mubr.bf16.mxu0 0
        %1484 = vmatmul.mubr.bf16.gmra.mrb[0].mxu0 %v1449
        %v1485 = vpop.f32.mrb[0].mxu0
        %v1486 = vadd.f32 %v1434, %v1485
        %v1487 = vpop.f32.mrb[0].mxu0
        %v1488 = vpop.f32.mrb[0].mxu0
        %v1489 = vpop.f32.mrb[0].mxu0
        %1490 = vdwg.mxu0
        %v1491 = vmax.f32 %v1486, 0.0
        %v1492 = vpack.c.bf16 %v1491, %v1491
        %v1493 = vld [vmem:[#allocation20] sm:$0xf]
        %v1494 = vld [vmem:[#allocation20 + $0x4] sm:$0xf]
        %v1495 = vld [vmem:[#allocation20 + $0x8] sm:$0xf]
        %v1496 = vld [vmem:[#allocation20 + $0xc] sm:$0xf]
        %v1497 = vld [vmem:[%s18] sm:$0x1]
        %v1499 = vlaneseq
        %v1500 = vshrl.u32 %v1499, 7
        %v1501 = vsub.s32 0, %v1500
        %v1502 = vrot.slane %v1497, %v1501
        %v1508 = vunpack.c.l.b16 %v1493
        %v1509 = vunpack.c.l.b16 %v1494
        %v1510 = vunpack.c.l.b16 %v1495
        %v1511 = vunpack.c.l.b16 %v1496
        %v1512 = vpack.c.b16 %v1509, %v1508
        %v1513 = vpack.c.b16 %v1511, %v1510
        %v1517 = vsel %vm887, %v1492, 0
        %1519 = vmatprep.subr.bf16.mxu0 0
        %1520 = vmatpush1.bf16.msra.mxu0 %v1512
        %1521 = vmatprep.subr.bf16.mxu0 0
        %1522 = vmatpush1.bf16.msra.mxu0 %v1513
        %1523 = vmatprep.subr.bf16.mxu0 0
        %1524 = vmatpush1.bf16.msra.mxu0 0
        %1525 = vmatprep.subr.bf16.mxu0 0
        %1526 = vmatpush1.bf16.msra.mxu0 0
        %1527 = vmatprep.subr.bf16.mxu0 0
        %1528 = vmatpush1.bf16.msra.mxu0 0
        %1529 = vmatprep.subr.bf16.mxu0 0
        %1530 = vmatpush1.bf16.msra.mxu0 0
        %1531 = vmatprep.subr.bf16.mxu0 0
        %1532 = vmatpush1.bf16.msra.mxu0 0
        %1533 = vmatprep.subr.bf16.mxu0 0
        %1534 = vmatpush1.bf16.msra.mxu0 0
        %1535 = vmatprep.subr.bf16.mxu0 0
        %1536 = vmatpush1.bf16.msra.mxu0 0
        %1537 = vmatprep.subr.bf16.mxu0 0
        %1538 = vmatpush1.bf16.msra.mxu0 0
        %1539 = vmatprep.subr.bf16.mxu0 0
        %1540 = vmatpush1.bf16.msra.mxu0 0
        %1541 = vmatprep.subr.bf16.mxu0 0
        %1542 = vmatpush1.bf16.msra.mxu0 0
        %1543 = vmatprep.subr.bf16.mxu0 0
        %1544 = vmatpush1.bf16.msra.mxu0 0
        %1545 = vmatprep.subr.bf16.mxu0 0
        %1546 = vmatpush1.bf16.msra.mxu0 0
        %1547 = vmatprep.subr.bf16.mxu0 0
        %1548 = vmatpush1.bf16.msra.mxu0 0
        %1549 = vmatprep.subr.bf16.mxu0 0
        %1550 = vmatpush1.bf16.msra.mxu0 0
        %1551 = vmatprep.mubr.bf16.mxu0 0
        %1552 = vmatmul.mubr.bf16.gmra.mrb[0].mxu0 %v1517
        %v1553 = vpop.f32.mrb[0].mxu0
        %v1554 = vadd.f32 %v1502, %v1553
        %v1555 = vpop.f32.mrb[0].mxu0
        %v1556 = vpop.f32.mrb[0].mxu0
        %v1557 = vpop.f32.mrb[0].mxu0
        %1558 = vdwg.mxu0
        %v1559 = vadd.f32 %v1554, %v1423
        %v1560 = vmul.f32 %v1559, %v852
        %s1561 = scalar_lea.vmem %s5, 16
        %v1562 = vld [vmem:[%s1561] sm:$0xf]
        %v1563 = vld [vmem:[%s1561 + $0x4] sm:$0xf]
        %v1564 = vld [vmem:[%s1561 + $0x8] sm:$0xf]
        %v1565 = vld [vmem:[%s1561 + $0xc] sm:$0xf]
        %s1566 = scalar_lea.vmem [#allocation10], 16
        %v1567 = vld [vmem:[%s1566] sm:$0xf]
        %v1568 = vld [vmem:[%s1566 + $0x4] sm:$0xf]
        %v1569 = vld [vmem:[%s1566 + $0x8] sm:$0xf]
        %v1570 = vld [vmem:[%s1566 + $0xc] sm:$0xf]
        %s1571 = scalar_lea.vmem [#allocation13], 16
        %v1572 = vld [vmem:[%s1571] sm:$0xf]
        %v1573 = vld [vmem:[%s1571 + $0x4] sm:$0xf]
        %v1574 = vld [vmem:[%s1571 + $0x8] sm:$0xf]
        %v1575 = vld [vmem:[%s1571 + $0xc] sm:$0xf]
        %s1576 = scalar_lea.vmem [#allocation16], 16
        %v1577 = vld [vmem:[%s1576] sm:$0xf]
        %v1578 = vld [vmem:[%s1576 + $0x4] sm:$0xf]
        %v1579 = vld [vmem:[%s1576 + $0x8] sm:$0xf]
        %v1580 = vld [vmem:[%s1576 + $0xc] sm:$0xf]
        %s1581 = scalar_lea.vmem [#allocation8], 1
        %v1582 = vld [vmem:[%s1581] sm:$0x1]
        %s1583 = scalar_lea.vmem [#allocation11], 1
        %v1584 = vld [vmem:[%s1583] sm:$0x1]
        %s1585 = scalar_lea.vmem [#allocation14], 1
        %v1586 = vld [vmem:[%s1585] sm:$0x1]
        %s1587 = scalar_lea.vmem [#allocation17], 1
        %v1588 = vld [vmem:[%s1587] sm:$0x1]
        %s1589 = scalar_lea.vmem %s3, 1
        %v1590 = vld [vmem:[%s1589] sm:$0x1]
        %s1591 = scalar_lea.vmem [#allocation7], 1
        %v1592 = vld [vmem:[%s1591] sm:$0x1]
        %v1593 = vsel %vm887, %v1560, 0.0
        %1594 = vadd.xlane.f32.xlu0 %v1593
        %v1595 = vpop.xlane.xlu0 %1594
        %v1596 = vmul.f32 %v1595, %v891
        %v1597 = vmul.f32 %v1560, %v1560
        %v1598 = vsel %vm887, %v1597, 0.0
        %1599 = vadd.xlane.f32.xlu0 %v1598
        %v1600 = vpop.xlane.xlu0 %1599
        %v1601 = vmul.f32 %v1600, %v891
        %v1602 = vmul.f32 %v1596, %v1596
        %v1603 = vsub.f32 %v1601, %v1602
        %v1604 = vmax.f32 %v1603, 0.0
        %v1605 = vsub.f32 %v1560, %v1596
        %v1606 = vadd.f32 %v1604, 1e-08
        %v1607 = vrsqrt.pop %v1606
        %v1608 = vmul.f32 %v1605, %v1607
        %v1610 = vlaneseq
        %v1611 = vshrl.u32 %v1610, 7
        %v1612 = vsub.s32 0, %v1611
        %v1613 = vrot.slane %v1590, %v1612
        %v1615 = vmul.f32 %v1608, %v1613
        %v1617 = vlaneseq
        %v1618 = vshrl.u32 %v1617, 7
        %v1619 = vsub.s32 0, %v1618
        %v1620 = vrot.slane %v1592, %v1619
        %v1622 = vadd.f32 %v1615, %v1620
        %v1623 = vpack.c.bf16 %v1622, %v1622
        %v1624 = vpack.c.bf16 %v1560, %v1560
        %v1626 = vlaneseq
        %v1627 = vshrl.u32 %v1626, 7
        %v1628 = vsub.s32 0, %v1627
        %v1629 = vrot.slane %v1582, %v1628
        %v1635 = vunpack.c.l.b16 %v1562
        %v1636 = vunpack.c.l.b16 %v1563
        %v1637 = vunpack.c.l.b16 %v1564
        %v1638 = vunpack.c.l.b16 %v1565
        %v1639 = vpack.c.b16 %v1636, %v1635
        %v1640 = vpack.c.b16 %v1638, %v1637
        %v1644 = vsel %vm887, %v1623, 0
        %1646 = vmatprep.subr.bf16.mxu0 0
        %1647 = vmatpush1.bf16.msra.mxu0 %v1639
        %1648 = vmatprep.subr.bf16.mxu0 0
        %1649 = vmatpush1.bf16.msra.mxu0 %v1640
        %1650 = vmatprep.subr.bf16.mxu0 0
        %1651 = vmatpush1.bf16.msra.mxu0 0
        %1652 = vmatprep.subr.bf16.mxu0 0
        %1653 = vmatpush1.bf16.msra.mxu0 0
        %1654 = vmatprep.subr.bf16.mxu0 0
        %1655 = vmatpush1.bf16.msra.mxu0 0
        %1656 = vmatprep.subr.bf16.mxu0 0
        %1657 = vmatpush1.bf16.msra.mxu0 0
        %1658 = vmatprep.subr.bf16.mxu0 0
        %1659 = vmatpush1.bf16.msra.mxu0 0
        %1660 = vmatprep.subr.bf16.mxu0 0
        %1661 = vmatpush1.bf16.msra.mxu0 0
        %1662 = vmatprep.subr.bf16.mxu0 0
        %1663 = vmatpush1.bf16.msra.mxu0 0
        %1664 = vmatprep.subr.bf16.mxu0 0
        %1665 = vmatpush1.bf16.msra.mxu0 0
        %1666 = vmatprep.subr.bf16.mxu0 0
        %1667 = vmatpush1.bf16.msra.mxu0 0
        %1668 = vmatprep.subr.bf16.mxu0 0
        %1669 = vmatpush1.bf16.msra.mxu0 0
        %1670 = vmatprep.subr.bf16.mxu0 0
        %1671 = vmatpush1.bf16.msra.mxu0 0
        %1672 = vmatprep.subr.bf16.mxu0 0
        %1673 = vmatpush1.bf16.msra.mxu0 0
        %1674 = vmatprep.subr.bf16.mxu0 0
        %1675 = vmatpush1.bf16.msra.mxu0 0
        %1676 = vmatprep.subr.bf16.mxu0 0
        %1677 = vmatpush1.bf16.msra.mxu0 0
        %1678 = vmatprep.mubr.bf16.mxu0 0
        %1679 = vmatmul.mubr.bf16.gmra.mrb[0].mxu0 %v1644
        %v1680 = vpop.f32.mrb[0].mxu0
        %v1681 = vadd.f32 %v1629, %v1680
        %v1682 = vpop.f32.mrb[0].mxu0
        %v1683 = vpop.f32.mrb[0].mxu0
        %v1684 = vpop.f32.mrb[0].mxu0
        %1685 = vdwg.mxu0
        %v1686 = vpack.c.bf16 %v1681, %v1681
        %v1688 = vlaneseq
        %v1689 = vshrl.u32 %v1688, 7
        %v1690 = vsub.s32 0, %v1689
        %v1691 = vrot.slane %v1584, %v1690
        %v1697 = vunpack.c.l.b16 %v1567
        %v1698 = vunpack.c.l.b16 %v1568
        %v1699 = vunpack.c.l.b16 %v1569
        %v1700 = vunpack.c.l.b16 %v1570
        %v1701 = vpack.c.b16 %v1698, %v1697
        %v1702 = vpack.c.b16 %v1700, %v1699
        %v1706 = vsel %vm887, %v1624, 0
        %1708 = vmatprep.subr.bf16.mxu0 0
        %1709 = vmatpush1.bf16.msra.mxu0 %v1701
        %1710 = vmatprep.subr.bf16.mxu0 0
        %1711 = vmatpush1.bf16.msra.mxu0 %v1702
        %1712 = vmatprep.subr.bf16.mxu0 0
        %1713 = vmatpush1.bf16.msra.mxu0 0
        %1714 = vmatprep.subr.bf16.mxu0 0
        %1715 = vmatpush1.bf16.msra.mxu0 0
        %1716 = vmatprep.subr.bf16.mxu0 0
        %1717 = vmatpush1.bf16.msra.mxu0 0
        %1718 = vmatprep.subr.bf16.mxu0 0
        %1719 = vmatpush1.bf16.msra.mxu0 0
        %1720 = vmatprep.subr.bf16.mxu0 0
        %1721 = vmatpush1.bf16.msra.mxu0 0
        %1722 = vmatprep.subr.bf16.mxu0 0
        %1723 = vmatpush1.bf16.msra.mxu0 0
        %1724 = vmatprep.subr.bf16.mxu0 0
        %1725 = vmatpush1.bf16.msra.mxu0 0
        %1726 = vmatprep.subr.bf16.mxu0 0
        %1727 = vmatpush1.bf16.msra.mxu0 0
        %1728 = vmatprep.subr.bf16.mxu0 0
        %1729 = vmatpush1.bf16.msra.mxu0 0
        %1730 = vmatprep.subr.bf16.mxu0 0
        %1731 = vmatpush1.bf16.msra.mxu0 0
        %1732 = vmatprep.subr.bf16.mxu0 0
        %1733 = vmatpush1.bf16.msra.mxu0 0
        %1734 = vmatprep.subr.bf16.mxu0 0
        %1735 = vmatpush1.bf16.msra.mxu0 0
        %1736 = vmatprep.subr.bf16.mxu0 0
        %1737 = vmatpush1.bf16.msra.mxu0 0
        %1738 = vmatprep.subr.bf16.mxu0 0
        %1739 = vmatpush1.bf16.msra.mxu0 0
        %1740 = vmatprep.mubr.bf16.mxu0 0
        %1741 = vmatmul.mubr.bf16.gmra.mrb[0].mxu0 %v1706
        %v1742 = vpop.f32.mrb[0].mxu0
        %v1743 = vadd.f32 %v1691, %v1742
        %v1744 = vpop.f32.mrb[0].mxu0
        %v1745 = vpop.f32.mrb[0].mxu0
        %v1746 = vpop.f32.mrb[0].mxu0
        %1747 = vdwg.mxu0
        %v1748 = vpack.c.bf16 %v1743, %v1743
        %v1750 = vlaneseq
        %v1751 = vshrl.u32 %v1750, 7
        %v1752 = vsub.s32 0, %v1751
        %v1753 = vrot.slane %v1586, %v1752
        %v1759 = vunpack.c.l.b16 %v1572
        %v1760 = vunpack.c.l.b16 %v1573
        %v1761 = vunpack.c.l.b16 %v1574
        %v1762 = vunpack.c.l.b16 %v1575
        %v1763 = vpack.c.b16 %v1760, %v1759
        %v1764 = vpack.c.b16 %v1762, %v1761
        %1767 = vmatprep.subr.bf16.mxu0 0
        %1768 = vmatpush1.bf16.msra.mxu0 %v1763
        %1769 = vmatprep.subr.bf16.mxu0 0
        %1770 = vmatpush1.bf16.msra.mxu0 %v1764
        %1771 = vmatprep.subr.bf16.mxu0 0
        %1772 = vmatpush1.bf16.msra.mxu0 0
        %1773 = vmatprep.subr.bf16.mxu0 0
        %1774 = vmatpush1.bf16.msra.mxu0 0
        %1775 = vmatprep.subr.bf16.mxu0 0
        %1776 = vmatpush1.bf16.msra.mxu0 0
        %1777 = vmatprep.subr.bf16.mxu0 0
        %1778 = vmatpush1.bf16.msra.mxu0 0
        %1779 = vmatprep.subr.bf16.mxu0 0
        %1780 = vmatpush1.bf16.msra.mxu0 0
        %1781 = vmatprep.subr.bf16.mxu0 0
        %1782 = vmatpush1.bf16.msra.mxu0 0
        %1783 = vmatprep.subr.bf16.mxu0 0
        %1784 = vmatpush1.bf16.msra.mxu0 0
        %1785 = vmatprep.subr.bf16.mxu0 0
        %1786 = vmatpush1.bf16.msra.mxu0 0
        %1787 = vmatprep.subr.bf16.mxu0 0
        %1788 = vmatpush1.bf16.msra.mxu0 0
        %1789 = vmatprep.subr.bf16.mxu0 0
        %1790 = vmatpush1.bf16.msra.mxu0 0
        %1791 = vmatprep.subr.bf16.mxu0 0
        %1792 = vmatpush1.bf16.msra.mxu0 0
        %1793 = vmatprep.subr.bf16.mxu0 0
        %1794 = vmatpush1.bf16.msra.mxu0 0
        %1795 = vmatprep.subr.bf16.mxu0 0
        %1796 = vmatpush1.bf16.msra.mxu0 0
        %1797 = vmatprep.subr.bf16.mxu0 0
        %1798 = vmatpush1.bf16.msra.mxu0 0
        %1799 = vmatprep.mubr.bf16.mxu0 0
        %1800 = vmatmul.mubr.bf16.gmra.mrb[0].mxu0 %v1706
        %v1801 = vpop.f32.mrb[0].mxu0
        %v1802 = vadd.f32 %v1753, %v1801
        %v1803 = vpop.f32.mrb[0].mxu0
        %v1804 = vpop.f32.mrb[0].mxu0
        %v1805 = vpop.f32.mrb[0].mxu0
        %1806 = vdwg.mxu0
        %v1807 = vpack.c.bf16 %v1802, %v1802
        %v1809 = vsel %vm1104, %v1686, 0
        %v1812 = vsel %vm1104, %v1748, 0
        %1814 = vmatprep.subr.bf16.mxu0 0
        %1815 = vmatpush1.bf16.xpose.msra.mxu0 %v1812
        %1816 = vmatprep.subr.bf16.mxu0 0
        %1817 = vmatpush1.bf16.xpose.msra.mxu0 0
        %1818 = vmatprep.subr.bf16.mxu0 0
        %1819 = vmatpush1.bf16.xpose.msra.mxu0 0
        %1820 = vmatprep.subr.bf16.mxu0 0
        %1821 = vmatpush1.bf16.xpose.msra.mxu0 0
        %1822 = vmatprep.subr.bf16.mxu0 0
        %1823 = vmatpush1.bf16.xpose.msra.mxu0 0
        %1824 = vmatprep.subr.bf16.mxu0 0
        %1825 = vmatpush1.bf16.xpose.msra.mxu0 0
        %1826 = vmatprep.subr.bf16.mxu0 0
        %1827 = vmatpush1.bf16.xpose.msra.mxu0 0
        %1828 = vmatprep.subr.bf16.mxu0 0
        %1829 = vmatpush1.bf16.xpose.msra.mxu0 0
        %1830 = vmatprep.subr.bf16.mxu0 0
        %1831 = vmatpush1.bf16.xpose.msra.mxu0 0
        %1832 = vmatprep.subr.bf16.mxu0 0
        %1833 = vmatpush1.bf16.xpose.msra.mxu0 0
        %1834 = vmatprep.subr.bf16.mxu0 0
        %1835 = vmatpush1.bf16.xpose.msra.mxu0 0
        %1836 = vmatprep.subr.bf16.mxu0 0
        %1837 = vmatpush1.bf16.xpose.msra.mxu0 0
        %1838 = vmatprep.subr.bf16.mxu0 0
        %1839 = vmatpush1.bf16.xpose.msra.mxu0 0
        %1840 = vmatprep.subr.bf16.mxu0 0
        %1841 = vmatpush1.bf16.xpose.msra.mxu0 0
        %1842 = vmatprep.subr.bf16.mxu0 0
        %1843 = vmatpush1.bf16.xpose.msra.mxu0 0
        %1844 = vmatprep.subr.bf16.mxu0 0
        %1845 = vmatpush1.bf16.xpose.msra.mxu0 0
        %1846 = vmatprep.mubr.bf16.mxu0 0
        %1847 = vmatmul.mubr.bf16.gmra.mrb[0].mxu0 %v1809
        %v1848 = vpop.f32.mrb[0].mxu0
        %v1849 = vadd.f32 %v864, %v1848
        %v1850 = vpop.f32.mrb[0].mxu0
        %v1851 = vpop.f32.mrb[0].mxu0
        %v1852 = vpop.f32.mrb[0].mxu0
        %1853 = vdwg.mxu0
        %v1854 = vsel %vm1151, %v1849, -inf
        %1855 = vmax.xlane.f32.xlu0 %v1854
        %v1856 = vpop.xlane.xlu0 %1855
        %v1857 = vsub.f32 %v1849, %v1856
        %v1858 = vmul.f32 %v1857, 1.442695
        %v1859 = vpow.pop %v1858
        %v1860 = vsel %vm1151, %v1859, 0.0
        %1861 = vadd.xlane.f32.xlu0 %v1860
        %v1862 = vpop.xlane.xlu0 %1861
        %v1863 = vrcp.pop %v1862
        %v1864 = vmul.f32 %v1859, %v1863
        %v1865 = vpack.c.bf16 %v1864, %v1864
        %v1867 = vsel %vm1151, %v1865, 0
        %v1870 = vsel %vm1167, %v1807, 0
        %1872 = vmatprep.subr.bf16.mxu0 0
        %1873 = vmatpush1.bf16.msra.mxu0 %v1870
        %1874 = vmatprep.subr.bf16.mxu0 0
        %1875 = vmatpush1.bf16.msra.mxu0 0
        %1876 = vmatprep.subr.bf16.mxu0 0
        %1877 = vmatpush1.bf16.msra.mxu0 0
        %1878 = vmatprep.subr.bf16.mxu0 0
        %1879 = vmatpush1.bf16.msra.mxu0 0
        %1880 = vmatprep.subr.bf16.mxu0 0
        %1881 = vmatpush1.bf16.msra.mxu0 0
        %1882 = vmatprep.subr.bf16.mxu0 0
        %1883 = vmatpush1.bf16.msra.mxu0 0
        %1884 = vmatprep.subr.bf16.mxu0 0
        %1885 = vmatpush1.bf16.msra.mxu0 0
        %1886 = vmatprep.subr.bf16.mxu0 0
        %1887 = vmatpush1.bf16.msra.mxu0 0
        %1888 = vmatprep.subr.bf16.mxu0 0
        %1889 = vmatpush1.bf16.msra.mxu0 0
        %1890 = vmatprep.subr.bf16.mxu0 0
        %1891 = vmatpush1.bf16.msra.mxu0 0
        %1892 = vmatprep.subr.bf16.mxu0 0
        %1893 = vmatpush1.bf16.msra.mxu0 0
        %1894 = vmatprep.subr.bf16.mxu0 0
        %1895 = vmatpush1.bf16.msra.mxu0 0
        %1896 = vmatprep.subr.bf16.mxu0 0
        %1897 = vmatpush1.bf16.msra.mxu0 0
        %1898 = vmatprep.subr.bf16.mxu0 0
        %1899 = vmatpush1.bf16.msra.mxu0 0
        %1900 = vmatprep.subr.bf16.mxu0 0
        %1901 = vmatpush1.bf16.msra.mxu0 0
        %1902 = vmatprep.subr.bf16.mxu0 0
        %1903 = vmatpush1.bf16.msra.mxu0 0
        %1904 = vmatprep.mubr.bf16.mxu0 0
        %1905 = vmatmul.mubr.bf16.gmra.mrb[0].mxu0 %v1867
        %v1906 = vpop.f32.mrb[0].mxu0
        %v1907 = vadd.f32 0.0, %v1906
        %v1908 = vpop.f32.mrb[0].mxu0
        %v1909 = vpop.f32.mrb[0].mxu0
        %v1910 = vpop.f32.mrb[0].mxu0
        %1911 = vdwg.mxu0
        %1913 = vrot.lane.b32.xlu0 %v1686, 112
        %v1914 = vpop.permute.xlu0 %1913
        %1916 = vrot.lane.b32.xlu0 %v1748, 112
        %v1917 = vpop.permute.xlu0 %1916
        %v1919 = vsel %vm1104, %v1914, 0
        %v1922 = vsel %vm1104, %v1917, 0
        %1924 = vmatprep.subr.bf16.mxu0 0
        %1925 = vmatpush1.bf16.xpose.msra.mxu0 %v1922
        %1926 = vmatprep.subr.bf16.mxu0 0
        %1927 = vmatpush1.bf16.xpose.msra.mxu0 0
        %1928 = vmatprep.subr.bf16.mxu0 0
        %1929 = vmatpush1.bf16.xpose.msra.mxu0 0
        %1930 = vmatprep.subr.bf16.mxu0 0
        %1931 = vmatpush1.bf16.xpose.msra.mxu0 0
        %1932 = vmatprep.subr.bf16.mxu0 0
        %1933 = vmatpush1.bf16.xpose.msra.mxu0 0
        %1934 = vmatprep.subr.bf16.mxu0 0
        %1935 = vmatpush1.bf16.xpose.msra.mxu0 0
        %1936 = vmatprep.subr.bf16.mxu0 0
        %1937 = vmatpush1.bf16.xpose.msra.mxu0 0
        %1938 = vmatprep.subr.bf16.mxu0 0
        %1939 = vmatpush1.bf16.xpose.msra.mxu0 0
        %1940 = vmatprep.subr.bf16.mxu0 0
        %1941 = vmatpush1.bf16.xpose.msra.mxu0 0
        %1942 = vmatprep.subr.bf16.mxu0 0
        %1943 = vmatpush1.bf16.xpose.msra.mxu0 0
        %1944 = vmatprep.subr.bf16.mxu0 0
        %1945 = vmatpush1.bf16.xpose.msra.mxu0 0
        %1946 = vmatprep.subr.bf16.mxu0 0
        %1947 = vmatpush1.bf16.xpose.msra.mxu0 0
        %1948 = vmatprep.subr.bf16.mxu0 0
        %1949 = vmatpush1.bf16.xpose.msra.mxu0 0
        %1950 = vmatprep.subr.bf16.mxu0 0
        %1951 = vmatpush1.bf16.xpose.msra.mxu0 0
        %1952 = vmatprep.subr.bf16.mxu0 0
        %1953 = vmatpush1.bf16.xpose.msra.mxu0 0
        %1954 = vmatprep.subr.bf16.mxu0 0
        %1955 = vmatpush1.bf16.xpose.msra.mxu0 0
        %1956 = vmatprep.mubr.bf16.mxu0 0
        %1957 = vmatmul.mubr.bf16.gmra.mrb[0].mxu0 %v1919
        %v1958 = vpop.f32.mrb[0].mxu0
        %v1959 = vadd.f32 %v864, %v1958
        %v1960 = vpop.f32.mrb[0].mxu0
        %v1961 = vpop.f32.mrb[0].mxu0
        %v1962 = vpop.f32.mrb[0].mxu0
        %1963 = vdwg.mxu0
        %v1964 = vsel %vm1151, %v1959, -inf
        %1965 = vmax.xlane.f32.xlu0 %v1964
        %v1966 = vpop.xlane.xlu0 %1965
        %v1967 = vsub.f32 %v1959, %v1966
        %v1968 = vmul.f32 %v1967, 1.442695
        %v1969 = vpow.pop %v1968
        %v1970 = vsel %vm1151, %v1969, 0.0
        %1971 = vadd.xlane.f32.xlu0 %v1970
        %v1972 = vpop.xlane.xlu0 %1971
        %v1973 = vrcp.pop %v1972
        %v1974 = vmul.f32 %v1969, %v1973
        %v1975 = vpack.c.bf16 %v1974, %v1974
        %1977 = vrot.lane.b32.xlu0 %v1807, 112
        %v1978 = vpop.permute.xlu0 %1977
        %v1980 = vsel %vm1151, %v1975, 0
        %v1983 = vsel %vm1167, %v1978, 0
        %1985 = vmatprep.subr.bf16.mxu0 0
        %1986 = vmatpush1.bf16.msra.mxu0 %v1983
        %1987 = vmatprep.subr.bf16.mxu0 0
        %1988 = vmatpush1.bf16.msra.mxu0 0
        %1989 = vmatprep.subr.bf16.mxu0 0
        %1990 = vmatpush1.bf16.msra.mxu0 0
        %1991 = vmatprep.subr.bf16.mxu0 0
        %1992 = vmatpush1.bf16.msra.mxu0 0
        %1993 = vmatprep.subr.bf16.mxu0 0
        %1994 = vmatpush1.bf16.msra.mxu0 0
        %1995 = vmatprep.subr.bf16.mxu0 0
        %1996 = vmatpush1.bf16.msra.mxu0 0
        %1997 = vmatprep.subr.bf16.mxu0 0
        %1998 = vmatpush1.bf16.msra.mxu0 0
        %1999 = vmatprep.subr.bf16.mxu0 0
        %2000 = vmatpush1.bf16.msra.mxu0 0
        %2001 = vmatprep.subr.bf16.mxu0 0
        %2002 = vmatpush1.bf16.msra.mxu0 0
        %2003 = vmatprep.subr.bf16.mxu0 0
        %2004 = vmatpush1.bf16.msra.mxu0 0
        %2005 = vmatprep.subr.bf16.mxu0 0
        %2006 = vmatpush1.bf16.msra.mxu0 0
        %2007 = vmatprep.subr.bf16.mxu0 0
        %2008 = vmatpush1.bf16.msra.mxu0 0
        %2009 = vmatprep.subr.bf16.mxu0 0
        %2010 = vmatpush1.bf16.msra.mxu0 0
        %2011 = vmatprep.subr.bf16.mxu0 0
        %2012 = vmatpush1.bf16.msra.mxu0 0
        %2013 = vmatprep.subr.bf16.mxu0 0
        %2014 = vmatpush1.bf16.msra.mxu0 0
        %2015 = vmatprep.subr.bf16.mxu0 0
        %2016 = vmatpush1.bf16.msra.mxu0 0
        %2017 = vmatprep.mubr.bf16.mxu0 0
        %2018 = vmatmul.mubr.bf16.gmra.mrb[0].mxu0 %v1980
        %v2019 = vpop.f32.mrb[0].mxu0
        %v2020 = vadd.f32 0.0, %v2019
        %v2021 = vpop.f32.mrb[0].mxu0
        %v2022 = vpop.f32.mrb[0].mxu0
        %v2023 = vpop.f32.mrb[0].mxu0
        %2024 = vdwg.mxu0
        %2026 = vrot.lane.b32.xlu0 %v2020, 16
        %v2027 = vpop.permute.xlu0 %2026
        %v2029 = vsel %vm1104, %v1907, %v2027
        %v2030 = vpack.c.bf16 %v2029, %v2029
        %v2032 = vlaneseq
        %v2033 = vshrl.u32 %v2032, 7
        %v2034 = vsub.s32 0, %v2033
        %v2035 = vrot.slane %v1588, %v2034
        %v2041 = vunpack.c.l.b16 %v1577
        %v2042 = vunpack.c.l.b16 %v1578
        %v2043 = vunpack.c.l.b16 %v1579
        %v2044 = vunpack.c.l.b16 %v1580
        %v2045 = vpack.c.b16 %v2042, %v2041
        %v2046 = vpack.c.b16 %v2044, %v2043
        %v2050 = vsel %vm887, %v2030, 0
        %2052 = vmatprep.subr.bf16.mxu0 0
        %2053 = vmatpush1.bf16.msra.mxu0 %v2045
        %2054 = vmatprep.subr.bf16.mxu0 0
        %2055 = vmatpush1.bf16.msra.mxu0 %v2046
        %2056 = vmatprep.subr.bf16.mxu0 0
        %2057 = vmatpush1.bf16.msra.mxu0 0
        %2058 = vmatprep.subr.bf16.mxu0 0
        %2059 = vmatpush1.bf16.msra.mxu0 0
        %2060 = vmatprep.subr.bf16.mxu0 0
        %2061 = vmatpush1.bf16.msra.mxu0 0
        %2062 = vmatprep.subr.bf16.mxu0 0
        %2063 = vmatpush1.bf16.msra.mxu0 0
        %2064 = vmatprep.subr.bf16.mxu0 0
        %2065 = vmatpush1.bf16.msra.mxu0 0
        %2066 = vmatprep.subr.bf16.mxu0 0
        %2067 = vmatpush1.bf16.msra.mxu0 0
        %2068 = vmatprep.subr.bf16.mxu0 0
        %2069 = vmatpush1.bf16.msra.mxu0 0
        %2070 = vmatprep.subr.bf16.mxu0 0
        %2071 = vmatpush1.bf16.msra.mxu0 0
        %2072 = vmatprep.subr.bf16.mxu0 0
        %2073 = vmatpush1.bf16.msra.mxu0 0
        %2074 = vmatprep.subr.bf16.mxu0 0
        %2075 = vmatpush1.bf16.msra.mxu0 0
        %2076 = vmatprep.subr.bf16.mxu0 0
        %2077 = vmatpush1.bf16.msra.mxu0 0
        %2078 = vmatprep.subr.bf16.mxu0 0
        %2079 = vmatpush1.bf16.msra.mxu0 0
        %2080 = vmatprep.subr.bf16.mxu0 0
        %2081 = vmatpush1.bf16.msra.mxu0 0
        %2082 = vmatprep.subr.bf16.mxu0 0
        %2083 = vmatpush1.bf16.msra.mxu0 0
        %2084 = vmatprep.mubr.bf16.mxu0 0
        %2085 = vmatmul.mubr.bf16.gmra.mrb[0].mxu0 %v2050
        %v2086 = vpop.f32.mrb[0].mxu0
        %v2087 = vadd.f32 %v2035, %v2086
        %v2088 = vpop.f32.mrb[0].mxu0
        %v2089 = vpop.f32.mrb[0].mxu0
        %v2090 = vpop.f32.mrb[0].mxu0
        %2091 = vdwg.mxu0
        %v2092 = vadd.f32 %v1622, %v2087
        %s2093 = scalar_lea.vmem [#allocation19], 1
        %v2094 = vld [vmem:[%s2093] sm:$0x1]
        %s2095 = scalar_lea.vmem %s14, 1
        %v2096 = vld [vmem:[%s2095] sm:$0x1]
        %v2097 = vsel %vm887, %v2092, 0.0
        %2098 = vadd.xlane.f32.xlu0 %v2097
        %v2099 = vpop.xlane.xlu0 %2098
        %v2100 = vmul.f32 %v2099, %v891
        %v2101 = vmul.f32 %v2092, %v2092
        %v2102 = vsel %vm887, %v2101, 0.0
        %2103 = vadd.xlane.f32.xlu0 %v2102
        %v2104 = vpop.xlane.xlu0 %2103
        %v2105 = vmul.f32 %v2104, %v891
        %v2106 = vmul.f32 %v2100, %v2100
        %v2107 = vsub.f32 %v2105, %v2106
        %v2108 = vmax.f32 %v2107, 0.0
        %v2109 = vsub.f32 %v2092, %v2100
        %v2110 = vadd.f32 %v2108, 1e-08
        %v2111 = vrsqrt.pop %v2110
        %v2112 = vmul.f32 %v2109, %v2111
        %v2114 = vlaneseq
        %v2115 = vshrl.u32 %v2114, 7
        %v2116 = vsub.s32 0, %v2115
        %v2117 = vrot.slane %v2094, %v2116
        %v2119 = vmul.f32 %v2112, %v2117
        %v2121 = vlaneseq
        %v2122 = vshrl.u32 %v2121, 7
        %v2123 = vsub.s32 0, %v2122
        %v2124 = vrot.slane %v2096, %v2123
        %v2126 = vadd.f32 %v2119, %v2124
        %v2127 = vpack.c.bf16 %v2126, %v2126
        %s2128 = scalar_lea.vmem %s15, 16
        %v2129 = vld [vmem:[%s2128] sm:$0xf]
        %v2130 = vld [vmem:[%s2128 + $0x4] sm:$0xf]
        %v2131 = vld [vmem:[%s2128 + $0x8] sm:$0xf]
        %v2132 = vld [vmem:[%s2128 + $0xc] sm:$0xf]
        %s2133 = scalar_lea.vmem %s16, 1
        %v2134 = vld [vmem:[%s2133] sm:$0x1]
        %v2136 = vlaneseq
        %v2137 = vshrl.u32 %v2136, 7
        %v2138 = vsub.s32 0, %v2137
        %v2139 = vrot.slane %v2134, %v2138
        %v2145 = vunpack.c.l.b16 %v2129
        %v2146 = vunpack.c.l.b16 %v2130
        %v2147 = vunpack.c.l.b16 %v2131
        %v2148 = vunpack.c.l.b16 %v2132
        %v2149 = vpack.c.b16 %v2146, %v2145
        %v2150 = vpack.c.b16 %v2148, %v2147
        %v2154 = vsel %vm887, %v2127, 0
        %2156 = vmatprep.subr.bf16.mxu0 0
        %2157 = vmatpush1.bf16.msra.mxu0 %v2149
        %2158 = vmatprep.subr.bf16.mxu0 0
        %2159 = vmatpush1.bf16.msra.mxu0 %v2150
        %2160 = vmatprep.subr.bf16.mxu0 0
        %2161 = vmatpush1.bf16.msra.mxu0 0
        %2162 = vmatprep.subr.bf16.mxu0 0
        %2163 = vmatpush1.bf16.msra.mxu0 0
        %2164 = vmatprep.subr.bf16.mxu0 0
        %2165 = vmatpush1.bf16.msra.mxu0 0
        %2166 = vmatprep.subr.bf16.mxu0 0
        %2167 = vmatpush1.bf16.msra.mxu0 0
        %2168 = vmatprep.subr.bf16.mxu0 0
        %2169 = vmatpush1.bf16.msra.mxu0 0
        %2170 = vmatprep.subr.bf16.mxu0 0
        %2171 = vmatpush1.bf16.msra.mxu0 0
        %2172 = vmatprep.subr.bf16.mxu0 0
        %2173 = vmatpush1.bf16.msra.mxu0 0
        %2174 = vmatprep.subr.bf16.mxu0 0
        %2175 = vmatpush1.bf16.msra.mxu0 0
        %2176 = vmatprep.subr.bf16.mxu0 0
        %2177 = vmatpush1.bf16.msra.mxu0 0
        %2178 = vmatprep.subr.bf16.mxu0 0
        %2179 = vmatpush1.bf16.msra.mxu0 0
        %2180 = vmatprep.subr.bf16.mxu0 0
        %2181 = vmatpush1.bf16.msra.mxu0 0
        %2182 = vmatprep.subr.bf16.mxu0 0
        %2183 = vmatpush1.bf16.msra.mxu0 0
        %2184 = vmatprep.subr.bf16.mxu0 0
        %2185 = vmatpush1.bf16.msra.mxu0 0
        %2186 = vmatprep.subr.bf16.mxu0 0
        %2187 = vmatpush1.bf16.msra.mxu0 0
        %2188 = vmatprep.mubr.bf16.mxu0 0
        %2189 = vmatmul.mubr.bf16.gmra.mrb[0].mxu0 %v2154
        %v2190 = vpop.f32.mrb[0].mxu0
        %v2191 = vadd.f32 %v2139, %v2190
        %v2192 = vpop.f32.mrb[0].mxu0
        %v2193 = vpop.f32.mrb[0].mxu0
        %v2194 = vpop.f32.mrb[0].mxu0
        %2195 = vdwg.mxu0
        %v2196 = vmax.f32 %v2191, 0.0
        %v2197 = vpack.c.bf16 %v2196, %v2196
        %s2198 = scalar_lea.vmem [#allocation20], 16
        %v2199 = vld [vmem:[%s2198] sm:$0xf]
        %v2200 = vld [vmem:[%s2198 + $0x4] sm:$0xf]
        %v2201 = vld [vmem:[%s2198 + $0x8] sm:$0xf]
        %v2202 = vld [vmem:[%s2198 + $0xc] sm:$0xf]
        %s2203 = scalar_lea.vmem %s18, 1
        %v2204 = vld [vmem:[%s2203] sm:$0x1]
        %v2206 = vlaneseq
        %v2207 = vshrl.u32 %v2206, 7
        %v2208 = vsub.s32 0, %v2207
        %v2209 = vrot.slane %v2204, %v2208
        %v2215 = vunpack.c.l.b16 %v2199
        %v2216 = vunpack.c.l.b16 %v2200
        %v2217 = vunpack.c.l.b16 %v2201
        %v2218 = vunpack.c.l.b16 %v2202
        %v2219 = vpack.c.b16 %v2216, %v2215
        %v2220 = vpack.c.b16 %v2218, %v2217
        %v2224 = vsel %vm887, %v2197, 0
        %2226 = vmatprep.subr.bf16.mxu0 0
        %2227 = vmatpush1.bf16.msra.mxu0 %v2219
        %2228 = vmatprep.subr.bf16.mxu0 0
        %2229 = vmatpush1.bf16.msra.mxu0 %v2220
        %2230 = vmatprep.subr.bf16.mxu0 0
        %2231 = vmatpush1.bf16.msra.mxu0 0
        %2232 = vmatprep.subr.bf16.mxu0 0
        %2233 = vmatpush1.bf16.msra.mxu0 0
        %2234 = vmatprep.subr.bf16.mxu0 0
        %2235 = vmatpush1.bf16.msra.mxu0 0
        %2236 = vmatprep.subr.bf16.mxu0 0
        %2237 = vmatpush1.bf16.msra.mxu0 0
        %2238 = vmatprep.subr.bf16.mxu0 0
        %2239 = vmatpush1.bf16.msra.mxu0 0
        %2240 = vmatprep.subr.bf16.mxu0 0
        %2241 = vmatpush1.bf16.msra.mxu0 0
        %2242 = vmatprep.subr.bf16.mxu0 0
        %2243 = vmatpush1.bf16.msra.mxu0 0
        %2244 = vmatprep.subr.bf16.mxu0 0
        %2245 = vmatpush1.bf16.msra.mxu0 0
        %2246 = vmatprep.subr.bf16.mxu0 0
        %2247 = vmatpush1.bf16.msra.mxu0 0
        %2248 = vmatprep.subr.bf16.mxu0 0
        %2249 = vmatpush1.bf16.msra.mxu0 0
        %2250 = vmatprep.subr.bf16.mxu0 0
        %2251 = vmatpush1.bf16.msra.mxu0 0
        %2252 = vmatprep.subr.bf16.mxu0 0
        %2253 = vmatpush1.bf16.msra.mxu0 0
        %2254 = vmatprep.subr.bf16.mxu0 0
        %2255 = vmatpush1.bf16.msra.mxu0 0
        %2256 = vmatprep.subr.bf16.mxu0 0
        %2257 = vmatpush1.bf16.msra.mxu0 0
        %2258 = vmatprep.mubr.bf16.mxu0 0
        %2259 = vmatmul.mubr.bf16.gmra.mrb[0].mxu0 %v2224
        %v2260 = vpop.f32.mrb[0].mxu0
        %v2261 = vadd.f32 %v2209, %v2260
        %v2262 = vpop.f32.mrb[0].mxu0
        %v2263 = vpop.f32.mrb[0].mxu0
        %v2264 = vpop.f32.mrb[0].mxu0
        %2265 = vdwg.mxu0
        %v2266 = vadd.f32 %v2261, %v2126
        %v2267 = vmul.f32 %v2266, %v852
        %v2268 = vld [vmem:[%s19] sm:$0x1]
        %v2269 = vld [vmem:[%s20] sm:$0x1]
        %v2270 = vsel %vm887, %v2267, 0.0
        %2271 = vadd.xlane.f32.xlu0 %v2270
        %v2272 = vpop.xlane.xlu0 %2271
        %v2273 = vmul.f32 %v2272, %v891
        %v2274 = vmul.f32 %v2267, %v2267
        %v2275 = vsel %vm887, %v2274, 0.0
        %2276 = vadd.xlane.f32.xlu0 %v2275
        %v2277 = vpop.xlane.xlu0 %2276
        %v2278 = vmul.f32 %v2277, %v891
        %v2279 = vmul.f32 %v2273, %v2273
        %v2280 = vsub.f32 %v2278, %v2279
        %v2281 = vmax.f32 %v2280, 0.0
        %v2282 = vsub.f32 %v2267, %v2273
        %v2283 = vadd.f32 %v2281, 1e-08
        %v2284 = vrsqrt.pop %v2283
        %v2285 = vmul.f32 %v2282, %v2284
        %v2287 = vlaneseq
        %v2288 = vshrl.u32 %v2287, 7
        %v2289 = vsub.s32 0, %v2288
        %v2290 = vrot.slane %v2268, %v2289
        %v2292 = vmul.f32 %v2285, %v2290
        %v2294 = vlaneseq
        %v2295 = vshrl.u32 %v2294, 7
        %v2296 = vsub.s32 0, %v2295
        %v2297 = vrot.slane %v2269, %v2296
        %v2299 = vadd.f32 %v2292, %v2297
        %2300 = vst.msk [vmem:[%s842] sm:$0xff] %vm887, %v2299
        %s2301 = sand.u32 %s503, 1
        %s2302 = scalar_lea.sflag [#allocation4], %s2301
        %s2303 = sand.u32 %s503, 1
        %s2304 = smul.addr %s2303, 8
        %s2305 = scalar_lea.vmem [#allocation22], %s2304
        // Predicated region
        $region153: #{tpu_custom_call.1} parent=103 // pred_check
          %p2306 = pneg %p513
        $region154: #{tpu_custom_call.1} parent=103 // pred_check_branch
          %2308 = sbr.rel (%p2306) target = $region156
        $region155: #{tpu_custom_call.1} parent=103 // pred_region
          %s2310 = ssub.s32 128, 128
          %2311 = vsyncadd %s2302, %s2310
          %s2312 = smul.addr %s44, 128
          %s2313 = scalar_lea.hbm %s21, %s2312
          %s2315 = sshll.u32 %s2305, 4
          %s2316 = int_to_ptr.vmem [resolvable:$true] %s2315
          %2318 = dma.vmem_to_hbm [thread:$0]  %s2316, 128, %s2313, %s2302
        $region156: #{tpu_custom_call.1} parent=103 // pred_fallthru
          _
      $region104: #{tpu_custom_call.1} parent=5 // pred_fallthru
        _
      %p2319 = scmp.le.s32.totalorder 2, %s39
      // Predicated region
      $region157: #{tpu_custom_call.1} parent=5 // pred_check
        %p2320 = pneg %p2319
      $region158: #{tpu_custom_call.1} parent=5 // pred_check_branch
        %2322 = sbr.rel (%p2320) target = $region160
      $region159: #{tpu_custom_call.1} parent=5 // pred_region
        %s2323 = ssub.s32 %s39, 2
        // Predicated region
        $region161: #{tpu_custom_call.1} parent=159 // pred_check
          %p2324 = pneg %p519
        $region162: #{tpu_custom_call.1} parent=159 // pred_check_branch
          %2326 = sbr.rel (%p2324) target = $region164
        $region163: #{tpu_custom_call.1} parent=159 // pred_region
          %s2327 = sand.u32 %s504, 1
          %s2328 = scalar_lea.sflag [#allocation4], %s2327
          %s2329 = sand.u32 %s504, 1
          %s2330 = smul.addr %s2329, 8
          %s2331 = scalar_lea.vmem [#allocation22], %s2330
          %2332 = dma.done %s2328, 128
        $region164: #{tpu_custom_call.1} parent=159 // pred_fallthru
          _
      $region160: #{tpu_custom_call.1} parent=5 // pred_fallthru
        _
    $region6: #{tpu_custom_call.1} parent=1 // loop_footer
      %s43 = sadd.s32 1, %s39
    $region7: #{tpu_custom_call.1} parent=1 // loop_footer_branch
      %38 = sbr.rel target = $region3
    $region8: #{tpu_custom_call.1} parent=1 // loop_exit
      _
    %2333 = vsyncpa [#allocation3], 1
    %s2334 = scalar_lea.sflag [#allocation3], 1
    %2335 = vsyncpa %s2334, 1
    %2336 = vsyncpa [#allocation6], 1
    %2337 = vsyncpa [#allocation9], 1
    %2338 = vsyncpa [#allocation12], 1
    %2339 = vsyncpa [#allocation15], 1
    %2340 = vsyncpa [#allocation18], 1
    %2341 = vsyncpa [#allocation21], 1
    %2342 = vsyncpa [#allocation4], 1
    %s2343 = scalar_lea.sflag [#allocation4], 1
    %2344 = vsyncpa %s2343, 1

</llo_original>
